<compile_context>
chip_gen: v5e
topology: v5e:2x2
jax: 0.10.0
libtpu: 0.0.40
codegen_flags: <defaults>
</compile_context>

<pallas_src>
import functools
import math

import jax
import jax.numpy as jnp
from jax import lax
from jax.experimental import pallas as pl
from jax.experimental.pallas import tpu as pltpu

LN_EPS = 1e-5


def _fused_encoder_kernel(
    x_ref,
    wqkv_ref, bqkv_ref,      # (L, E, 3E) bf16, (L, 1, 3E) f32
    wo_ref, bo_ref,          # (L, E, E)  bf16, (L, 1, E)  f32
    g1_ref, be1_ref,         # (L, 1, E)  f32
    w1_ref, b1_ref,          # (L, E, F)  bf16, (L, 1, F)  f32
    w2_ref, b2_ref,          # (L, F, E)  bf16, (L, 1, E)  f32
    g2_ref, be2_ref,         # (L, 1, E)  f32
    o_ref,
    *, num_layers: int, num_heads: int,
):
    # One grid step == one batch element; all encoder layers run here.
    x = x_ref[0].astype(jnp.float32)            # (S, E)
    S, E = x.shape
    dh = E // num_heads

    for l in range(num_layers):                 # static unroll: layers fused
        # ---- fused QKV projection (1/sqrt(dh) pre-folded into Q columns) ----
        wqkv = wqkv_ref[l]                      # (E, 3E) bf16
        qkv = jnp.dot(x.astype(wqkv.dtype), wqkv,
                      preferred_element_type=jnp.float32) + bqkv_ref[l]  # (S,3E)

        # ---- multi-head self-attention ----
        head_outs = []
        for h in range(num_heads):              # H == 2: cheap static slices
            q = qkv[:, h * dh:(h + 1) * dh]                       # (S, dh)
            k = qkv[:, E + h * dh:E + (h + 1) * dh]
            v = qkv[:, 2 * E + h * dh:2 * E + (h + 1) * dh]
            s = jnp.dot(q, k.T, preferred_element_type=jnp.float32)  # (S, S)
            s = s - jnp.max(s, axis=-1, keepdims=True)
            p = jnp.exp(s)
            p = p * pl.reciprocal(jnp.sum(p, axis=-1, keepdims=True),
                                  approx=True)
            head_outs.append(jnp.dot(p, v, preferred_element_type=jnp.float32))
        attn = jnp.concatenate(head_outs, axis=-1)                # (S, E)
        wo = wo_ref[l]
        attn = jnp.dot(attn.astype(wo.dtype), wo,
                       preferred_element_type=jnp.float32) + bo_ref[l]

        # ---- residual + LayerNorm 1 (post-norm) ----
        y = x + attn
        mu = jnp.mean(y, axis=-1, keepdims=True)
        yc = y - mu
        var = jnp.mean(yc * yc, axis=-1, keepdims=True)
        y = yc * lax.rsqrt(var + LN_EPS) * g1_ref[l] + be1_ref[l]

        # ---- feed-forward (ReLU) ----
        w1 = w1_ref[l]
        h1 = jnp.dot(y.astype(w1.dtype), w1,
                     preferred_element_type=jnp.float32) + b1_ref[l]
        h1 = jnp.maximum(h1, 0.0)
        w2 = w2_ref[l]
        ff = jnp.dot(h1.astype(w2.dtype), w2,
                     preferred_element_type=jnp.float32) + b2_ref[l]

        # ---- residual + LayerNorm 2 ----
        z = y + ff
        mu2 = jnp.mean(z, axis=-1, keepdims=True)
        zc = z - mu2
        var2 = jnp.mean(zc * zc, axis=-1, keepdims=True)
        x = zc * lax.rsqrt(var2 + LN_EPS) * g2_ref[l] + be2_ref[l]

    o_ref[0] = x.astype(o_ref.dtype)


def transformer_encoder(x, packed_params, *, num_heads):
    """Full nn.TransformerEncoder forward in one fused pallas_call.

    x: (B, S, E) float32 (batch_first). packed_params: output of pack_params().
    """
    B, S, E = x.shape
    L = packed_params[0].shape[0]
    F = packed_params[6].shape[-1]          # w1 is (L, E, F)
    dh = E // num_heads

    kernel = functools.partial(_fused_encoder_kernel,
                               num_layers=L, num_heads=num_heads)

    def full_spec(a):
        # Grid-invariant block: weights stay resident in VMEM across steps.
        return pl.BlockSpec(a.shape, lambda b, nd=a.ndim: (0,) * nd)

    in_specs = [pl.BlockSpec((1, S, E), lambda b: (b, 0, 0))]
    in_specs += [full_spec(p) for p in packed_params]

    # Advisory cost estimate so XLA schedules the fused call sensibly.
    flops_per_layer = (2 * S * E * 3 * E                     # QKV projection
                       + num_heads * (2 * S * S * dh) * 2    # scores + p@v
                       + 2 * S * E * E                       # out projection
                       + 2 * S * E * F + 2 * S * F * E)      # feed-forward
    transc_per_layer = num_heads * S * S + num_heads * S + 2 * S
    param_bytes = sum(int(p.size) * p.dtype.itemsize for p in packed_params)
    cost = pl.CostEstimate(
        flops=int(B * L * flops_per_layer),
        transcendentals=int(B * L * transc_per_layer),
        bytes_accessed=int(2 * x.size * x.dtype.itemsize + param_bytes),
    )

    return pl.pallas_call(
        kernel,
        out_shape=jax.ShapeDtypeStruct((B, S, E), x.dtype),
        grid=(B,),
        in_specs=in_specs,
        out_specs=pl.BlockSpec((1, S, E), lambda b: (b, 0, 0)),
        compiler_params=pltpu.CompilerParams(
            dimension_semantics=("parallel",)),   # feeds both TCs on v7x
        cost_estimate=cost,
    )(x, *packed_params)


def init_layer_params(key, embed_dim, ff_dim):
    """Deterministic synthetic weights for one encoder layer in "math" layout
    (y = x @ W + b). When importing real PyTorch weights, transpose nn.Linear's
    (out, in) matrices first."""
    ks = jax.random.split(key, 8)
    sd = 0.02
    wq = sd * jax.random.normal(ks[0], (embed_dim, embed_dim), jnp.float32)
    wk = sd * jax.random.normal(ks[1], (embed_dim, embed_dim), jnp.float32)
    wv = sd * jax.random.normal(ks[2], (embed_dim, embed_dim), jnp.float32)
    bq = sd * jax.random.normal(ks[3], (1, embed_dim), jnp.float32)
    bk = jnp.zeros((1, embed_dim), jnp.float32)
    bv = jnp.zeros((1, embed_dim), jnp.float32)
    wo = sd * jax.random.normal(ks[4], (embed_dim, embed_dim), jnp.float32)
    bo = jnp.zeros((1, embed_dim), jnp.float32)
    g1 = jnp.ones((1, embed_dim), jnp.float32)
    be1 = jnp.zeros((1, embed_dim), jnp.float32)
    w1 = sd * jax.random.normal(ks[5], (embed_dim, ff_dim), jnp.float32)
    b1 = sd * jax.random.normal(ks[6], (1, ff_dim), jnp.float32)
    w2 = sd * jax.random.normal(ks[7], (ff_dim, embed_dim), jnp.float32)
    b2 = jnp.zeros((1, embed_dim), jnp.float32)
    g2 = jnp.ones((1, embed_dim), jnp.float32)
    be2 = jnp.zeros((1, embed_dim), jnp.float32)
    return (wq, wk, wv, bq, bk, bv, wo, bo,
            g1, be1, w1, b1, w2, b2, g2, be2)


def pack_params(layer_params, num_heads, matmul_dtype=jnp.bfloat16):
    """Stack per-layer params on a leading layer axis, fuse QKV into one
    (E, 3E) weight, fold 1/sqrt(d_h) into the Q weight/bias, and cast matmul
    weights to `matmul_dtype` (bf16 feeds the MXU at full rate on v6e/v7x).
    Biases and LayerNorm params stay f32."""
    E = layer_params[0][0].shape[0]
    dh = E // num_heads
    scale = 1.0 / math.sqrt(dh)

    cols = [[] for _ in range(12)]
    for (wq, wk, wv, bq, bk, bv, wo_l, bo_l,
         g1_l, be1_l, w1_l, b1_l, w2_l, b2_l, g2_l, be2_l) in layer_params:
        cols[0].append(jnp.concatenate([wq * scale, wk, wv],
                                       axis=1).astype(matmul_dtype))
        cols[1].append(jnp.concatenate([bq * scale, bk, bv], axis=1))
        cols[2].append(wo_l.astype(matmul_dtype))
        cols[3].append(bo_l)
        cols[4].append(g1_l)
        cols[5].append(be1_l)
        cols[6].append(w1_l.astype(matmul_dtype))
        cols[7].append(b1_l)
        cols[8].append(w2_l.astype(matmul_dtype))
        cols[9].append(b2_l)
        cols[10].append(g2_l)
        cols[11].append(be2_l)
    return tuple(jnp.stack(c, axis=0) for c in cols)


def reference_encoder(x, layer_params, *, num_heads):
    """Pure-JAX f32 reference matching PyTorch nn.TransformerEncoder (eval)."""
    B, S, E = x.shape
    dh = E // num_heads
    scale = 1.0 / math.sqrt(dh)
    for (wq, wk, wv, bq, bk, bv, wo, bo,
         g1, be1, w1, b1, w2, b2, g2, be2) in layer_params:
        q = x @ wq + bq
        k = x @ wk + bk
        v = x @ wv + bv
        qh = q.reshape(B, S, num_heads, dh).transpose(0, 2, 1, 3)
        kh = k.reshape(B, S, num_heads, dh).transpose(0, 2, 1, 3)
        vh = v.reshape(B, S, num_heads, dh).transpose(0, 2, 1, 3)
        s = jnp.einsum('bhqd,bhkd->bhqk', qh, kh) * scale
        p = jax.nn.softmax(s, axis=-1)
        oh = jnp.einsum('bhqk,bhkd->bhqd', p, vh)
        attn = oh.transpose(0, 2, 1, 3).reshape(B, S, E) @ wo + bo
        y = x + attn
        mu = y.mean(-1, keepdims=True)
        var = ((y - mu) ** 2).mean(-1, keepdims=True)
        y = (y - mu) / jnp.sqrt(var + LN_EPS) * g1 + be1
        h = jnp.maximum(y @ w1 + b1, 0.0)
        ff = h @ w2 + b2
        z = y + ff
        mu2 = z.mean(-1, keepdims=True)
        var2 = ((z - mu2) ** 2).mean(-1, keepdims=True)
        x = (z - mu2) / jnp.sqrt(var2 + LN_EPS) * g2 + be2
    return x


if __name__ == "__main__":
    # Module config consistent with __init__ defaults:
    EMBED_DIM = 32
    NUM_HEADS = 2
    NUM_LAYERS = 4
    FF_DIM = 64

    # Input: (batch, seq, embed) since batch_first=True.
    B, S = 2, 8

    root = jax.random.PRNGKey(0)
    kx, kp = jax.random.split(root)
    x = jax.random.normal(kx, (B, S, EMBED_DIM), jnp.float32)

    layer_keys = jax.random.split(kp, NUM_LAYERS)
    raw_params = [init_layer_params(k, EMBED_DIM, FF_DIM) for k in layer_keys]
    packed = pack_params(raw_params, NUM_HEADS)

    out = transformer_encoder(x, packed, num_heads=NUM_HEADS)
    out = jax.block_until_ready(out)
    assert out.shape == (B, S, EMBED_DIM)

    # Loose check vs. f32 reference (kernel uses bf16 matmuls + approx recip).
    ref = reference_encoder(x, raw_params, num_heads=NUM_HEADS)
    max_err = float(jnp.max(jnp.abs(out - ref)))
    assert max_err < 5e-2, f"max abs err too large: {max_err}"

    print("KERNEL_OK")
</pallas_src>

<mosaic_0001>
module attributes {stable_mosaic.version = 11 : i64} {
  func.func @_fused_encoder_kernel(%arg0: i32, %arg1: memref<1x8x32xf32, #tpu.memory_space<vmem>>, %arg2: memref<4x32x96xbf16, #tpu.memory_space<vmem>>, %arg3: memref<4x1x96xf32, #tpu.memory_space<vmem>>, %arg4: memref<4x32x32xbf16, #tpu.memory_space<vmem>>, %arg5: memref<4x1x32xf32, #tpu.memory_space<vmem>>, %arg6: memref<4x1x32xf32, #tpu.memory_space<vmem>>, %arg7: memref<4x1x32xf32, #tpu.memory_space<vmem>>, %arg8: memref<4x32x64xbf16, #tpu.memory_space<vmem>>, %arg9: memref<4x1x64xf32, #tpu.memory_space<vmem>>, %arg10: memref<4x64x32xbf16, #tpu.memory_space<vmem>>, %arg11: memref<4x1x32xf32, #tpu.memory_space<vmem>>, %arg12: memref<4x1x32xf32, #tpu.memory_space<vmem>>, %arg13: memref<4x1x32xf32, #tpu.memory_space<vmem>>, %arg14: memref<1x8x32xf32, #tpu.memory_space<vmem>>) attributes {dimension_semantics = [#tpu.dimension_semantics<parallel>], iteration_bounds = array<i64: 2>, scalar_prefetch = 0 : i64, scratch_operands = 0 : i64, tpu.core_type = #tpu.core_type<tc>, window_params = [{transform_indices = @transform_0, window_bounds = array<i64: 1, 8, 32>}, {pipeline_mode = #tpu.pipeline_mode<synchronous>, transform_indices = @transform_1, window_bounds = array<i64: 4, 32, 96>}, {pipeline_mode = #tpu.pipeline_mode<synchronous>, transform_indices = @transform_2, window_bounds = array<i64: 4, 1, 96>}, {pipeline_mode = #tpu.pipeline_mode<synchronous>, transform_indices = @transform_3, window_bounds = array<i64: 4, 32, 32>}, {pipeline_mode = #tpu.pipeline_mode<synchronous>, transform_indices = @transform_4, window_bounds = array<i64: 4, 1, 32>}, {pipeline_mode = #tpu.pipeline_mode<synchronous>, transform_indices = @transform_5, window_bounds = array<i64: 4, 1, 32>}, {pipeline_mode = #tpu.pipeline_mode<synchronous>, transform_indices = @transform_6, window_bounds = array<i64: 4, 1, 32>}, {pipeline_mode = #tpu.pipeline_mode<synchronous>, transform_indices = @transform_7, window_bounds = array<i64: 4, 32, 64>}, {pipeline_mode = #tpu.pipeline_mode<synchronous>, transform_indices = @transform_8, window_bounds = array<i64: 4, 1, 64>}, {pipeline_mode = #tpu.pipeline_mode<synchronous>, transform_indices = @transform_9, window_bounds = array<i64: 4, 64, 32>}, {pipeline_mode = #tpu.pipeline_mode<synchronous>, transform_indices = @transform_10, window_bounds = array<i64: 4, 1, 32>}, {pipeline_mode = #tpu.pipeline_mode<synchronous>, transform_indices = @transform_11, window_bounds = array<i64: 4, 1, 32>}, {pipeline_mode = #tpu.pipeline_mode<synchronous>, transform_indices = @transform_12, window_bounds = array<i64: 4, 1, 32>}, {transform_indices = @transform_13, window_bounds = array<i64: 1, 8, 32>}]} {
    %c0 = arith.constant 0 : index
    %c0_0 = arith.constant 0 : index
    %c0_1 = arith.constant 0 : index
    %0 = vector.load %arg1[%c0, %c0_0, %c0_1] : memref<1x8x32xf32, #tpu.memory_space<vmem>>, vector<1x8x32xf32>
    %1 = vector.shape_cast %0 : vector<1x8x32xf32> to vector<8x32xf32>
    %c0_2 = arith.constant 0 : index
    %c0_3 = arith.constant 0 : index
    %c0_4 = arith.constant 0 : index
    %2 = vector.load %arg2[%c0_2, %c0_3, %c0_4] : memref<4x32x96xbf16, #tpu.memory_space<vmem>>, vector<1x32x96xbf16>
    %3 = vector.shape_cast %2 : vector<1x32x96xbf16> to vector<32x96xbf16>
    %4 = arith.truncf %1 : vector<8x32xf32> to vector<8x32xbf16>
    %cst = arith.constant dense<0.000000e+00> : vector<8x96xf32>
    %5 = tpu.matmul %4, %3, %cst {dimension_numbers = #tpu.dot_dimension_numbers<[1], [0], [0], [1], [0, 0, 1, 1], [], []>} : vector<8x32xbf16>, vector<32x96xbf16>, vector<8x96xf32> -> vector<8x96xf32>
    %c0_5 = arith.constant 0 : index
    %c0_6 = arith.constant 0 : index
    %c0_7 = arith.constant 0 : index
    %6 = vector.load %arg3[%c0_5, %c0_6, %c0_7] : memref<4x1x96xf32, #tpu.memory_space<vmem>>, vector<1x1x96xf32>
    %7 = vector.shape_cast %6 : vector<1x1x96xf32> to vector<1x96xf32>
    %8 = vector.broadcast %7 : vector<1x96xf32> to vector<8x96xf32>
    %9 = arith.addf %5, %8 : vector<8x96xf32>
    %10 = vector.extract_strided_slice %9 {offsets = [0, 0], sizes = [8, 16], strides = [1, 1]} : vector<8x96xf32> to vector<8x16xf32>
    %11 = vector.extract_strided_slice %9 {offsets = [0, 32], sizes = [8, 16], strides = [1, 1]} : vector<8x96xf32> to vector<8x16xf32>
    %12 = vector.extract_strided_slice %9 {offsets = [0, 64], sizes = [8, 16], strides = [1, 1]} : vector<8x96xf32> to vector<8x16xf32>
    %13 = tpu.transpose %11, [1, 0] : vector<8x16xf32> -> vector<16x8xf32>
    %cst_8 = arith.constant dense<0.000000e+00> : vector<8x8xf32>
    %14 = tpu.matmul %10, %13, %cst_8 {dimension_numbers = #tpu.dot_dimension_numbers<[1], [0], [0], [1], [0, 0, 1, 1], [], []>} : vector<8x16xf32>, vector<16x8xf32>, vector<8x8xf32> -> vector<8x8xf32>
    %cst_9 = arith.constant dense<0xFF800000> : vector<8xf32>
    %15 = vector.multi_reduction <maximumf>, %14, %cst_9 [1] : vector<8x8xf32> to vector<8xf32>
    %16 = vector.shape_cast %15 : vector<8xf32> to vector<8x1xf32>
    %17 = vector.broadcast %16 : vector<8x1xf32> to vector<8x8xf32>
    %18 = arith.subf %14, %17 : vector<8x8xf32>
    %19 = math.exp %18 : vector<8x8xf32>
    %cst_10 = arith.constant dense<0.000000e+00> : vector<8xf32>
    %20 = vector.multi_reduction <add>, %19, %cst_10 [1] : vector<8x8xf32> to vector<8xf32>
    %21 = vector.shape_cast %20 : vector<8xf32> to vector<8x1xf32>
    %22 = tpu.reciprocal %21 {approx = true} : vector<8x1xf32> -> vector<8x1xf32>
    %23 = vector.broadcast %22 : vector<8x1xf32> to vector<8x8xf32>
    %24 = arith.mulf %19, %23 : vector<8x8xf32>
    %cst_11 = arith.constant dense<0.000000e+00> : vector<8x16xf32>
    %25 = tpu.matmul %24, %12, %cst_11 {dimension_numbers = #tpu.dot_dimension_numbers<[1], [0], [0], [1], [0, 0, 1, 1], [], []>} : vector<8x8xf32>, vector<8x16xf32>, vector<8x16xf32> -> vector<8x16xf32>
    %26 = vector.extract_strided_slice %9 {offsets = [0, 16], sizes = [8, 16], strides = [1, 1]} : vector<8x96xf32> to vector<8x16xf32>
    %27 = vector.extract_strided_slice %9 {offsets = [0, 48], sizes = [8, 16], strides = [1, 1]} : vector<8x96xf32> to vector<8x16xf32>
    %28 = vector.extract_strided_slice %9 {offsets = [0, 80], sizes = [8, 16], strides = [1, 1]} : vector<8x96xf32> to vector<8x16xf32>
    %29 = tpu.transpose %27, [1, 0] : vector<8x16xf32> -> vector<16x8xf32>
    %cst_12 = arith.constant dense<0.000000e+00> : vector<8x8xf32>
    %30 = tpu.matmul %26, %29, %cst_12 {dimension_numbers = #tpu.dot_dimension_numbers<[1], [0], [0], [1], [0, 0, 1, 1], [], []>} : vector<8x16xf32>, vector<16x8xf32>, vector<8x8xf32> -> vector<8x8xf32>
    %cst_13 = arith.constant dense<0xFF800000> : vector<8xf32>
    %31 = vector.multi_reduction <maximumf>, %30, %cst_13 [1] : vector<8x8xf32> to vector<8xf32>
    %32 = vector.shape_cast %31 : vector<8xf32> to vector<8x1xf32>
    %33 = vector.broadcast %32 : vector<8x1xf32> to vector<8x8xf32>
    %34 = arith.subf %30, %33 : vector<8x8xf32>
    %35 = math.exp %34 : vector<8x8xf32>
    %cst_14 = arith.constant dense<0.000000e+00> : vector<8xf32>
    %36 = vector.multi_reduction <add>, %35, %cst_14 [1] : vector<8x8xf32> to vector<8xf32>
    %37 = vector.shape_cast %36 : vector<8xf32> to vector<8x1xf32>
    %38 = tpu.reciprocal %37 {approx = true} : vector<8x1xf32> -> vector<8x1xf32>
    %39 = vector.broadcast %38 : vector<8x1xf32> to vector<8x8xf32>
    %40 = arith.mulf %35, %39 : vector<8x8xf32>
    %cst_15 = arith.constant dense<0.000000e+00> : vector<8x16xf32>
    %41 = tpu.matmul %40, %28, %cst_15 {dimension_numbers = #tpu.dot_dimension_numbers<[1], [0], [0], [1], [0, 0, 1, 1], [], []>} : vector<8x8xf32>, vector<8x16xf32>, vector<8x16xf32> -> vector<8x16xf32>
    %42 = tpu.concatenate %25, %41 in 1 : vector<8x16xf32>, vector<8x16xf32> -> vector<8x32xf32>
    %c0_16 = arith.constant 0 : index
    %c0_17 = arith.constant 0 : index
    %c0_18 = arith.constant 0 : index
    %43 = vector.load %arg4[%c0_16, %c0_17, %c0_18] : memref<4x32x32xbf16, #tpu.memory_space<vmem>>, vector<1x32x32xbf16>
    %44 = vector.shape_cast %43 : vector<1x32x32xbf16> to vector<32x32xbf16>
    %45 = arith.truncf %42 : vector<8x32xf32> to vector<8x32xbf16>
    %cst_19 = arith.constant dense<0.000000e+00> : vector<8x32xf32>
    %46 = tpu.matmul %45, %44, %cst_19 {dimension_numbers = #tpu.dot_dimension_numbers<[1], [0], [0], [1], [0, 0, 1, 1], [], []>} : vector<8x32xbf16>, vector<32x32xbf16>, vector<8x32xf32> -> vector<8x32xf32>
    %c0_20 = arith.constant 0 : index
    %c0_21 = arith.constant 0 : index
    %c0_22 = arith.constant 0 : index
    %47 = vector.load %arg5[%c0_20, %c0_21, %c0_22] : memref<4x1x32xf32, #tpu.memory_space<vmem>>, vector<1x1x32xf32>
    %48 = vector.shape_cast %47 : vector<1x1x32xf32> to vector<1x32xf32>
    %49 = vector.broadcast %48 : vector<1x32xf32> to vector<8x32xf32>
    %50 = arith.addf %46, %49 : vector<8x32xf32>
    %51 = arith.addf %1, %50 : vector<8x32xf32>
    %cst_23 = arith.constant dense<0.000000e+00> : vector<8xf32>
    %52 = vector.multi_reduction <add>, %51, %cst_23 [1] : vector<8x32xf32> to vector<8xf32>
    %53 = vector.shape_cast %52 : vector<8xf32> to vector<8x1xf32>
    %cst_24 = arith.constant 3.200000e+01 : f32
    %54 = vector.broadcast %cst_24 : f32 to vector<8x1xf32>
    %55 = arith.divf %53, %54 : vector<8x1xf32>
    %56 = vector.broadcast %55 : vector<8x1xf32> to vector<8x32xf32>
    %57 = arith.subf %51, %56 : vector<8x32xf32>
    %58 = arith.mulf %57, %57 : vector<8x32xf32>
    %cst_25 = arith.constant dense<0.000000e+00> : vector<8xf32>
    %59 = vector.multi_reduction <add>, %58, %cst_25 [1] : vector<8x32xf32> to vector<8xf32>
    %60 = vector.shape_cast %59 : vector<8xf32> to vector<8x1xf32>
    %cst_26 = arith.constant 3.200000e+01 : f32
    %61 = vector.broadcast %cst_26 : f32 to vector<8x1xf32>
    %62 = arith.divf %60, %61 : vector<8x1xf32>
    %cst_27 = arith.constant 9.99999974E-6 : f32
    %63 = vector.broadcast %cst_27 : f32 to vector<8x1xf32>
    %64 = arith.addf %62, %63 : vector<8x1xf32>
    %65 = math.rsqrt %64 : vector<8x1xf32>
    %66 = vector.broadcast %65 : vector<8x1xf32> to vector<8x32xf32>
    %67 = arith.mulf %57, %66 : vector<8x32xf32>
    %c0_28 = arith.constant 0 : index
    %c0_29 = arith.constant 0 : index
    %c0_30 = arith.constant 0 : index
    %68 = vector.load %arg6[%c0_28, %c0_29, %c0_30] : memref<4x1x32xf32, #tpu.memory_space<vmem>>, vector<1x1x32xf32>
    %69 = vector.shape_cast %68 : vector<1x1x32xf32> to vector<1x32xf32>
    %70 = vector.broadcast %69 : vector<1x32xf32> to vector<8x32xf32>
    %71 = arith.mulf %67, %70 : vector<8x32xf32>
    %c0_31 = arith.constant 0 : index
    %c0_32 = arith.constant 0 : index
    %c0_33 = arith.constant 0 : index
    %72 = vector.load %arg7[%c0_31, %c0_32, %c0_33] : memref<4x1x32xf32, #tpu.memory_space<vmem>>, vector<1x1x32xf32>
    %73 = vector.shape_cast %72 : vector<1x1x32xf32> to vector<1x32xf32>
    %74 = vector.broadcast %73 : vector<1x32xf32> to vector<8x32xf32>
    %75 = arith.addf %71, %74 : vector<8x32xf32>
    %c0_34 = arith.constant 0 : index
    %c0_35 = arith.constant 0 : index
    %c0_36 = arith.constant 0 : index
    %76 = vector.load %arg8[%c0_34, %c0_35, %c0_36] : memref<4x32x64xbf16, #tpu.memory_space<vmem>>, vector<1x32x64xbf16>
    %77 = vector.shape_cast %76 : vector<1x32x64xbf16> to vector<32x64xbf16>
    %78 = arith.truncf %75 : vector<8x32xf32> to vector<8x32xbf16>
    %cst_37 = arith.constant dense<0.000000e+00> : vector<8x64xf32>
    %79 = tpu.matmul %78, %77, %cst_37 {dimension_numbers = #tpu.dot_dimension_numbers<[1], [0], [0], [1], [0, 0, 1, 1], [], []>} : vector<8x32xbf16>, vector<32x64xbf16>, vector<8x64xf32> -> vector<8x64xf32>
    %c0_38 = arith.constant 0 : index
    %c0_39 = arith.constant 0 : index
    %c0_40 = arith.constant 0 : index
    %80 = vector.load %arg9[%c0_38, %c0_39, %c0_40] : memref<4x1x64xf32, #tpu.memory_space<vmem>>, vector<1x1x64xf32>
    %81 = vector.shape_cast %80 : vector<1x1x64xf32> to vector<1x64xf32>
    %82 = vector.broadcast %81 : vector<1x64xf32> to vector<8x64xf32>
    %83 = arith.addf %79, %82 : vector<8x64xf32>
    %cst_41 = arith.constant 0.000000e+00 : f32
    %84 = vector.broadcast %cst_41 : f32 to vector<8x64xf32>
    %85 = arith.maximumf %83, %84 : vector<8x64xf32>
    %c0_42 = arith.constant 0 : index
    %c0_43 = arith.constant 0 : index
    %c0_44 = arith.constant 0 : index
    %86 = vector.load %arg10[%c0_42, %c0_43, %c0_44] : memref<4x64x32xbf16, #tpu.memory_space<vmem>>, vector<1x64x32xbf16>
    %87 = vector.shape_cast %86 : vector<1x64x32xbf16> to vector<64x32xbf16>
    %88 = arith.truncf %85 : vector<8x64xf32> to vector<8x64xbf16>
    %cst_45 = arith.constant dense<0.000000e+00> : vector<8x32xf32>
    %89 = tpu.matmul %88, %87, %cst_45 {dimension_numbers = #tpu.dot_dimension_numbers<[1], [0], [0], [1], [0, 0, 1, 1], [], []>} : vector<8x64xbf16>, vector<64x32xbf16>, vector<8x32xf32> -> vector<8x32xf32>
    %c0_46 = arith.constant 0 : index
    %c0_47 = arith.constant 0 : index
    %c0_48 = arith.constant 0 : index
    %90 = vector.load %arg11[%c0_46, %c0_47, %c0_48] : memref<4x1x32xf32, #tpu.memory_space<vmem>>, vector<1x1x32xf32>
    %91 = vector.shape_cast %90 : vector<1x1x32xf32> to vector<1x32xf32>
    %92 = vector.broadcast %91 : vector<1x32xf32> to vector<8x32xf32>
    %93 = arith.addf %89, %92 : vector<8x32xf32>
    %94 = arith.addf %75, %93 : vector<8x32xf32>
    %cst_49 = arith.constant dense<0.000000e+00> : vector<8xf32>
    %95 = vector.multi_reduction <add>, %94, %cst_49 [1] : vector<8x32xf32> to vector<8xf32>
    %96 = vector.shape_cast %95 : vector<8xf32> to vector<8x1xf32>
    %cst_50 = arith.constant 3.200000e+01 : f32
    %97 = vector.broadcast %cst_50 : f32 to vector<8x1xf32>
    %98 = arith.divf %96, %97 : vector<8x1xf32>
    %99 = vector.broadcast %98 : vector<8x1xf32> to vector<8x32xf32>
    %100 = arith.subf %94, %99 : vector<8x32xf32>
    %101 = arith.mulf %100, %100 : vector<8x32xf32>
    %cst_51 = arith.constant dense<0.000000e+00> : vector<8xf32>
    %102 = vector.multi_reduction <add>, %101, %cst_51 [1] : vector<8x32xf32> to vector<8xf32>
    %103 = vector.shape_cast %102 : vector<8xf32> to vector<8x1xf32>
    %cst_52 = arith.constant 3.200000e+01 : f32
    %104 = vector.broadcast %cst_52 : f32 to vector<8x1xf32>
    %105 = arith.divf %103, %104 : vector<8x1xf32>
    %cst_53 = arith.constant 9.99999974E-6 : f32
    %106 = vector.broadcast %cst_53 : f32 to vector<8x1xf32>
    %107 = arith.addf %105, %106 : vector<8x1xf32>
    %108 = math.rsqrt %107 : vector<8x1xf32>
    %109 = vector.broadcast %108 : vector<8x1xf32> to vector<8x32xf32>
    %110 = arith.mulf %100, %109 : vector<8x32xf32>
    %c0_54 = arith.constant 0 : index
    %c0_55 = arith.constant 0 : index
    %c0_56 = arith.constant 0 : index
    %111 = vector.load %arg12[%c0_54, %c0_55, %c0_56] : memref<4x1x32xf32, #tpu.memory_space<vmem>>, vector<1x1x32xf32>
    %112 = vector.shape_cast %111 : vector<1x1x32xf32> to vector<1x32xf32>
    %113 = vector.broadcast %112 : vector<1x32xf32> to vector<8x32xf32>
    %114 = arith.mulf %110, %113 : vector<8x32xf32>
    %c0_57 = arith.constant 0 : index
    %c0_58 = arith.constant 0 : index
    %c0_59 = arith.constant 0 : index
    %115 = vector.load %arg13[%c0_57, %c0_58, %c0_59] : memref<4x1x32xf32, #tpu.memory_space<vmem>>, vector<1x1x32xf32>
    %116 = vector.shape_cast %115 : vector<1x1x32xf32> to vector<1x32xf32>
    %117 = vector.broadcast %116 : vector<1x32xf32> to vector<8x32xf32>
    %118 = arith.addf %114, %117 : vector<8x32xf32>
    %c1 = arith.constant 1 : index
    %c0_60 = arith.constant 0 : index
    %c0_61 = arith.constant 0 : index
    %119 = vector.load %arg2[%c1, %c0_60, %c0_61] : memref<4x32x96xbf16, #tpu.memory_space<vmem>>, vector<1x32x96xbf16>
    %120 = vector.shape_cast %119 : vector<1x32x96xbf16> to vector<32x96xbf16>
    %121 = arith.truncf %118 : vector<8x32xf32> to vector<8x32xbf16>
    %cst_62 = arith.constant dense<0.000000e+00> : vector<8x96xf32>
    %122 = tpu.matmul %121, %120, %cst_62 {dimension_numbers = #tpu.dot_dimension_numbers<[1], [0], [0], [1], [0, 0, 1, 1], [], []>} : vector<8x32xbf16>, vector<32x96xbf16>, vector<8x96xf32> -> vector<8x96xf32>
    %c1_63 = arith.constant 1 : index
    %c0_64 = arith.constant 0 : index
    %c0_65 = arith.constant 0 : index
    %123 = vector.load %arg3[%c1_63, %c0_64, %c0_65] : memref<4x1x96xf32, #tpu.memory_space<vmem>>, vector<1x1x96xf32>
    %124 = vector.shape_cast %123 : vector<1x1x96xf32> to vector<1x96xf32>
    %125 = vector.broadcast %124 : vector<1x96xf32> to vector<8x96xf32>
    %126 = arith.addf %122, %125 : vector<8x96xf32>
    %127 = vector.extract_strided_slice %126 {offsets = [0, 0], sizes = [8, 16], strides = [1, 1]} : vector<8x96xf32> to vector<8x16xf32>
    %128 = vector.extract_strided_slice %126 {offsets = [0, 32], sizes = [8, 16], strides = [1, 1]} : vector<8x96xf32> to vector<8x16xf32>
    %129 = vector.extract_strided_slice %126 {offsets = [0, 64], sizes = [8, 16], strides = [1, 1]} : vector<8x96xf32> to vector<8x16xf32>
    %130 = tpu.transpose %128, [1, 0] : vector<8x16xf32> -> vector<16x8xf32>
    %cst_66 = arith.constant dense<0.000000e+00> : vector<8x8xf32>
    %131 = tpu.matmul %127, %130, %cst_66 {dimension_numbers = #tpu.dot_dimension_numbers<[1], [0], [0], [1], [0, 0, 1, 1], [], []>} : vector<8x16xf32>, vector<16x8xf32>, vector<8x8xf32> -> vector<8x8xf32>
    %cst_67 = arith.constant dense<0xFF800000> : vector<8xf32>
    %132 = vector.multi_reduction <maximumf>, %131, %cst_67 [1] : vector<8x8xf32> to vector<8xf32>
    %133 = vector.shape_cast %132 : vector<8xf32> to vector<8x1xf32>
    %134 = vector.broadcast %133 : vector<8x1xf32> to vector<8x8xf32>
    %135 = arith.subf %131, %134 : vector<8x8xf32>
    %136 = math.exp %135 : vector<8x8xf32>
    %cst_68 = arith.constant dense<0.000000e+00> : vector<8xf32>
    %137 = vector.multi_reduction <add>, %136, %cst_68 [1] : vector<8x8xf32> to vector<8xf32>
    %138 = vector.shape_cast %137 : vector<8xf32> to vector<8x1xf32>
    %139 = tpu.reciprocal %138 {approx = true} : vector<8x1xf32> -> vector<8x1xf32>
    %140 = vector.broadcast %139 : vector<8x1xf32> to vector<8x8xf32>
    %141 = arith.mulf %136, %140 : vector<8x8xf32>
    %cst_69 = arith.constant dense<0.000000e+00> : vector<8x16xf32>
    %142 = tpu.matmul %141, %129, %cst_69 {dimension_numbers = #tpu.dot_dimension_numbers<[1], [0], [0], [1], [0, 0, 1, 1], [], []>} : vector<8x8xf32>, vector<8x16xf32>, vector<8x16xf32> -> vector<8x16xf32>
    %143 = vector.extract_strided_slice %126 {offsets = [0, 16], sizes = [8, 16], strides = [1, 1]} : vector<8x96xf32> to vector<8x16xf32>
    %144 = vector.extract_strided_slice %126 {offsets = [0, 48], sizes = [8, 16], strides = [1, 1]} : vector<8x96xf32> to vector<8x16xf32>
    %145 = vector.extract_strided_slice %126 {offsets = [0, 80], sizes = [8, 16], strides = [1, 1]} : vector<8x96xf32> to vector<8x16xf32>
    %146 = tpu.transpose %144, [1, 0] : vector<8x16xf32> -> vector<16x8xf32>
    %cst_70 = arith.constant dense<0.000000e+00> : vector<8x8xf32>
    %147 = tpu.matmul %143, %146, %cst_70 {dimension_numbers = #tpu.dot_dimension_numbers<[1], [0], [0], [1], [0, 0, 1, 1], [], []>} : vector<8x16xf32>, vector<16x8xf32>, vector<8x8xf32> -> vector<8x8xf32>
    %cst_71 = arith.constant dense<0xFF800000> : vector<8xf32>
    %148 = vector.multi_reduction <maximumf>, %147, %cst_71 [1] : vector<8x8xf32> to vector<8xf32>
    %149 = vector.shape_cast %148 : vector<8xf32> to vector<8x1xf32>
    %150 = vector.broadcast %149 : vector<8x1xf32> to vector<8x8xf32>
    %151 = arith.subf %147, %150 : vector<8x8xf32>
    %152 = math.exp %151 : vector<8x8xf32>
    %cst_72 = arith.constant dense<0.000000e+00> : vector<8xf32>
    %153 = vector.multi_reduction <add>, %152, %cst_72 [1] : vector<8x8xf32> to vector<8xf32>
    %154 = vector.shape_cast %153 : vector<8xf32> to vector<8x1xf32>
    %155 = tpu.reciprocal %154 {approx = true} : vector<8x1xf32> -> vector<8x1xf32>
    %156 = vector.broadcast %155 : vector<8x1xf32> to vector<8x8xf32>
    %157 = arith.mulf %152, %156 : vector<8x8xf32>
    %cst_73 = arith.constant dense<0.000000e+00> : vector<8x16xf32>
    %158 = tpu.matmul %157, %145, %cst_73 {dimension_numbers = #tpu.dot_dimension_numbers<[1], [0], [0], [1], [0, 0, 1, 1], [], []>} : vector<8x8xf32>, vector<8x16xf32>, vector<8x16xf32> -> vector<8x16xf32>
    %159 = tpu.concatenate %142, %158 in 1 : vector<8x16xf32>, vector<8x16xf32> -> vector<8x32xf32>
    %c1_74 = arith.constant 1 : index
    %c0_75 = arith.constant 0 : index
    %c0_76 = arith.constant 0 : index
    %160 = vector.load %arg4[%c1_74, %c0_75, %c0_76] : memref<4x32x32xbf16, #tpu.memory_space<vmem>>, vector<1x32x32xbf16>
    %161 = vector.shape_cast %160 : vector<1x32x32xbf16> to vector<32x32xbf16>
    %162 = arith.truncf %159 : vector<8x32xf32> to vector<8x32xbf16>
    %cst_77 = arith.constant dense<0.000000e+00> : vector<8x32xf32>
    %163 = tpu.matmul %162, %161, %cst_77 {dimension_numbers = #tpu.dot_dimension_numbers<[1], [0], [0], [1], [0, 0, 1, 1], [], []>} : vector<8x32xbf16>, vector<32x32xbf16>, vector<8x32xf32> -> vector<8x32xf32>
    %c1_78 = arith.constant 1 : index
    %c0_79 = arith.constant 0 : index
    %c0_80 = arith.constant 0 : index
    %164 = vector.load %arg5[%c1_78, %c0_79, %c0_80] : memref<4x1x32xf32, #tpu.memory_space<vmem>>, vector<1x1x32xf32>
    %165 = vector.shape_cast %164 : vector<1x1x32xf32> to vector<1x32xf32>
    %166 = vector.broadcast %165 : vector<1x32xf32> to vector<8x32xf32>
    %167 = arith.addf %163, %166 : vector<8x32xf32>
    %168 = arith.addf %118, %167 : vector<8x32xf32>
    %cst_81 = arith.constant dense<0.000000e+00> : vector<8xf32>
    %169 = vector.multi_reduction <add>, %168, %cst_81 [1] : vector<8x32xf32> to vector<8xf32>
    %170 = vector.shape_cast %169 : vector<8xf32> to vector<8x1xf32>
    %cst_82 = arith.constant 3.200000e+01 : f32
    %171 = vector.broadcast %cst_82 : f32 to vector<8x1xf32>
    %172 = arith.divf %170, %171 : vector<8x1xf32>
    %173 = vector.broadcast %172 : vector<8x1xf32> to vector<8x32xf32>
    %174 = arith.subf %168, %173 : vector<8x32xf32>
    %175 = arith.mulf %174, %174 : vector<8x32xf32>
    %cst_83 = arith.constant dense<0.000000e+00> : vector<8xf32>
    %176 = vector.multi_reduction <add>, %175, %cst_83 [1] : vector<8x32xf32> to vector<8xf32>
    %177 = vector.shape_cast %176 : vector<8xf32> to vector<8x1xf32>
    %cst_84 = arith.constant 3.200000e+01 : f32
    %178 = vector.broadcast %cst_84 : f32 to vector<8x1xf32>
    %179 = arith.divf %177, %178 : vector<8x1xf32>
    %cst_85 = arith.constant 9.99999974E-6 : f32
    %180 = vector.broadcast %cst_85 : f32 to vector<8x1xf32>
    %181 = arith.addf %179, %180 : vector<8x1xf32>
    %182 = math.rsqrt %181 : vector<8x1xf32>
    %183 = vector.broadcast %182 : vector<8x1xf32> to vector<8x32xf32>
    %184 = arith.mulf %174, %183 : vector<8x32xf32>
    %c1_86 = arith.constant 1 : index
    %c0_87 = arith.constant 0 : index
    %c0_88 = arith.constant 0 : index
    %185 = vector.load %arg6[%c1_86, %c0_87, %c0_88] : memref<4x1x32xf32, #tpu.memory_space<vmem>>, vector<1x1x32xf32>
    %186 = vector.shape_cast %185 : vector<1x1x32xf32> to vector<1x32xf32>
    %187 = vector.broadcast %186 : vector<1x32xf32> to vector<8x32xf32>
    %188 = arith.mulf %184, %187 : vector<8x32xf32>
    %c1_89 = arith.constant 1 : index
    %c0_90 = arith.constant 0 : index
    %c0_91 = arith.constant 0 : index
    %189 = vector.load %arg7[%c1_89, %c0_90, %c0_91] : memref<4x1x32xf32, #tpu.memory_space<vmem>>, vector<1x1x32xf32>
    %190 = vector.shape_cast %189 : vector<1x1x32xf32> to vector<1x32xf32>
    %191 = vector.broadcast %190 : vector<1x32xf32> to vector<8x32xf32>
    %192 = arith.addf %188, %191 : vector<8x32xf32>
    %c1_92 = arith.constant 1 : index
    %c0_93 = arith.constant 0 : index
    %c0_94 = arith.constant 0 : index
    %193 = vector.load %arg8[%c1_92, %c0_93, %c0_94] : memref<4x32x64xbf16, #tpu.memory_space<vmem>>, vector<1x32x64xbf16>
    %194 = vector.shape_cast %193 : vector<1x32x64xbf16> to vector<32x64xbf16>
    %195 = arith.truncf %192 : vector<8x32xf32> to vector<8x32xbf16>
    %cst_95 = arith.constant dense<0.000000e+00> : vector<8x64xf32>
    %196 = tpu.matmul %195, %194, %cst_95 {dimension_numbers = #tpu.dot_dimension_numbers<[1], [0], [0], [1], [0, 0, 1, 1], [], []>} : vector<8x32xbf16>, vector<32x64xbf16>, vector<8x64xf32> -> vector<8x64xf32>
    %c1_96 = arith.constant 1 : index
    %c0_97 = arith.constant 0 : index
    %c0_98 = arith.constant 0 : index
    %197 = vector.load %arg9[%c1_96, %c0_97, %c0_98] : memref<4x1x64xf32, #tpu.memory_space<vmem>>, vector<1x1x64xf32>
    %198 = vector.shape_cast %197 : vector<1x1x64xf32> to vector<1x64xf32>
    %199 = vector.broadcast %198 : vector<1x64xf32> to vector<8x64xf32>
    %200 = arith.addf %196, %199 : vector<8x64xf32>
    %cst_99 = arith.constant 0.000000e+00 : f32
    %201 = vector.broadcast %cst_99 : f32 to vector<8x64xf32>
    %202 = arith.maximumf %200, %201 : vector<8x64xf32>
    %c1_100 = arith.constant 1 : index
    %c0_101 = arith.constant 0 : index
    %c0_102 = arith.constant 0 : index
    %203 = vector.load %arg10[%c1_100, %c0_101, %c0_102] : memref<4x64x32xbf16, #tpu.memory_space<vmem>>, vector<1x64x32xbf16>
    %204 = vector.shape_cast %203 : vector<1x64x32xbf16> to vector<64x32xbf16>
    %205 = arith.truncf %202 : vector<8x64xf32> to vector<8x64xbf16>
    %cst_103 = arith.constant dense<0.000000e+00> : vector<8x32xf32>
    %206 = tpu.matmul %205, %204, %cst_103 {dimension_numbers = #tpu.dot_dimension_numbers<[1], [0], [0], [1], [0, 0, 1, 1], [], []>} : vector<8x64xbf16>, vector<64x32xbf16>, vector<8x32xf32> -> vector<8x32xf32>
    %c1_104 = arith.constant 1 : index
    %c0_105 = arith.constant 0 : index
    %c0_106 = arith.constant 0 : index
    %207 = vector.load %arg11[%c1_104, %c0_105, %c0_106] : memref<4x1x32xf32, #tpu.memory_space<vmem>>, vector<1x1x32xf32>
    %208 = vector.shape_cast %207 : vector<1x1x32xf32> to vector<1x32xf32>
    %209 = vector.broadcast %208 : vector<1x32xf32> to vector<8x32xf32>
    %210 = arith.addf %206, %209 : vector<8x32xf32>
    %211 = arith.addf %192, %210 : vector<8x32xf32>
    %cst_107 = arith.constant dense<0.000000e+00> : vector<8xf32>
    %212 = vector.multi_reduction <add>, %211, %cst_107 [1] : vector<8x32xf32> to vector<8xf32>
    %213 = vector.shape_cast %212 : vector<8xf32> to vector<8x1xf32>
    %cst_108 = arith.constant 3.200000e+01 : f32
    %214 = vector.broadcast %cst_108 : f32 to vector<8x1xf32>
    %215 = arith.divf %213, %214 : vector<8x1xf32>
    %216 = vector.broadcast %215 : vector<8x1xf32> to vector<8x32xf32>
    %217 = arith.subf %211, %216 : vector<8x32xf32>
    %218 = arith.mulf %217, %217 : vector<8x32xf32>
    %cst_109 = arith.constant dense<0.000000e+00> : vector<8xf32>
    %219 = vector.multi_reduction <add>, %218, %cst_109 [1] : vector<8x32xf32> to vector<8xf32>
    %220 = vector.shape_cast %219 : vector<8xf32> to vector<8x1xf32>
    %cst_110 = arith.constant 3.200000e+01 : f32
    %221 = vector.broadcast %cst_110 : f32 to vector<8x1xf32>
    %222 = arith.divf %220, %221 : vector<8x1xf32>
    %cst_111 = arith.constant 9.99999974E-6 : f32
    %223 = vector.broadcast %cst_111 : f32 to vector<8x1xf32>
    %224 = arith.addf %222, %223 : vector<8x1xf32>
    %225 = math.rsqrt %224 : vector<8x1xf32>
    %226 = vector.broadcast %225 : vector<8x1xf32> to vector<8x32xf32>
    %227 = arith.mulf %217, %226 : vector<8x32xf32>
    %c1_112 = arith.constant 1 : index
    %c0_113 = arith.constant 0 : index
    %c0_114 = arith.constant 0 : index
    %228 = vector.load %arg12[%c1_112, %c0_113, %c0_114] : memref<4x1x32xf32, #tpu.memory_space<vmem>>, vector<1x1x32xf32>
    %229 = vector.shape_cast %228 : vector<1x1x32xf32> to vector<1x32xf32>
    %230 = vector.broadcast %229 : vector<1x32xf32> to vector<8x32xf32>
    %231 = arith.mulf %227, %230 : vector<8x32xf32>
    %c1_115 = arith.constant 1 : index
    %c0_116 = arith.constant 0 : index
    %c0_117 = arith.constant 0 : index
    %232 = vector.load %arg13[%c1_115, %c0_116, %c0_117] : memref<4x1x32xf32, #tpu.memory_space<vmem>>, vector<1x1x32xf32>
    %233 = vector.shape_cast %232 : vector<1x1x32xf32> to vector<1x32xf32>
    %234 = vector.broadcast %233 : vector<1x32xf32> to vector<8x32xf32>
    %235 = arith.addf %231, %234 : vector<8x32xf32>
    %c2 = arith.constant 2 : index
    %c0_118 = arith.constant 0 : index
    %c0_119 = arith.constant 0 : index
    %236 = vector.load %arg2[%c2, %c0_118, %c0_119] : memref<4x32x96xbf16, #tpu.memory_space<vmem>>, vector<1x32x96xbf16>
    %237 = vector.shape_cast %236 : vector<1x32x96xbf16> to vector<32x96xbf16>
    %238 = arith.truncf %235 : vector<8x32xf32> to vector<8x32xbf16>
    %cst_120 = arith.constant dense<0.000000e+00> : vector<8x96xf32>
    %239 = tpu.matmul %238, %237, %cst_120 {dimension_numbers = #tpu.dot_dimension_numbers<[1], [0], [0], [1], [0, 0, 1, 1], [], []>} : vector<8x32xbf16>, vector<32x96xbf16>, vector<8x96xf32> -> vector<8x96xf32>
    %c2_121 = arith.constant 2 : index
    %c0_122 = arith.constant 0 : index
    %c0_123 = arith.constant 0 : index
    %240 = vector.load %arg3[%c2_121, %c0_122, %c0_123] : memref<4x1x96xf32, #tpu.memory_space<vmem>>, vector<1x1x96xf32>
    %241 = vector.shape_cast %240 : vector<1x1x96xf32> to vector<1x96xf32>
    %242 = vector.broadcast %241 : vector<1x96xf32> to vector<8x96xf32>
    %243 = arith.addf %239, %242 : vector<8x96xf32>
    %244 = vector.extract_strided_slice %243 {offsets = [0, 0], sizes = [8, 16], strides = [1, 1]} : vector<8x96xf32> to vector<8x16xf32>
    %245 = vector.extract_strided_slice %243 {offsets = [0, 32], sizes = [8, 16], strides = [1, 1]} : vector<8x96xf32> to vector<8x16xf32>
    %246 = vector.extract_strided_slice %243 {offsets = [0, 64], sizes = [8, 16], strides = [1, 1]} : vector<8x96xf32> to vector<8x16xf32>
    %247 = tpu.transpose %245, [1, 0] : vector<8x16xf32> -> vector<16x8xf32>
    %cst_124 = arith.constant dense<0.000000e+00> : vector<8x8xf32>
    %248 = tpu.matmul %244, %247, %cst_124 {dimension_numbers = #tpu.dot_dimension_numbers<[1], [0], [0], [1], [0, 0, 1, 1], [], []>} : vector<8x16xf32>, vector<16x8xf32>, vector<8x8xf32> -> vector<8x8xf32>
    %cst_125 = arith.constant dense<0xFF800000> : vector<8xf32>
    %249 = vector.multi_reduction <maximumf>, %248, %cst_125 [1] : vector<8x8xf32> to vector<8xf32>
    %250 = vector.shape_cast %249 : vector<8xf32> to vector<8x1xf32>
    %251 = vector.broadcast %250 : vector<8x1xf32> to vector<8x8xf32>
    %252 = arith.subf %248, %251 : vector<8x8xf32>
    %253 = math.exp %252 : vector<8x8xf32>
    %cst_126 = arith.constant dense<0.000000e+00> : vector<8xf32>
    %254 = vector.multi_reduction <add>, %253, %cst_126 [1] : vector<8x8xf32> to vector<8xf32>
    %255 = vector.shape_cast %254 : vector<8xf32> to vector<8x1xf32>
    %256 = tpu.reciprocal %255 {approx = true} : vector<8x1xf32> -> vector<8x1xf32>
    %257 = vector.broadcast %256 : vector<8x1xf32> to vector<8x8xf32>
    %258 = arith.mulf %253, %257 : vector<8x8xf32>
    %cst_127 = arith.constant dense<0.000000e+00> : vector<8x16xf32>
    %259 = tpu.matmul %258, %246, %cst_127 {dimension_numbers = #tpu.dot_dimension_numbers<[1], [0], [0], [1], [0, 0, 1, 1], [], []>} : vector<8x8xf32>, vector<8x16xf32>, vector<8x16xf32> -> vector<8x16xf32>
    %260 = vector.extract_strided_slice %243 {offsets = [0, 16], sizes = [8, 16], strides = [1, 1]} : vector<8x96xf32> to vector<8x16xf32>
    %261 = vector.extract_strided_slice %243 {offsets = [0, 48], sizes = [8, 16], strides = [1, 1]} : vector<8x96xf32> to vector<8x16xf32>
    %262 = vector.extract_strided_slice %243 {offsets = [0, 80], sizes = [8, 16], strides = [1, 1]} : vector<8x96xf32> to vector<8x16xf32>
    %263 = tpu.transpose %261, [1, 0] : vector<8x16xf32> -> vector<16x8xf32>
    %cst_128 = arith.constant dense<0.000000e+00> : vector<8x8xf32>
    %264 = tpu.matmul %260, %263, %cst_128 {dimension_numbers = #tpu.dot_dimension_numbers<[1], [0], [0], [1], [0, 0, 1, 1], [], []>} : vector<8x16xf32>, vector<16x8xf32>, vector<8x8xf32> -> vector<8x8xf32>
    %cst_129 = arith.constant dense<0xFF800000> : vector<8xf32>
    %265 = vector.multi_reduction <maximumf>, %264, %cst_129 [1] : vector<8x8xf32> to vector<8xf32>
    %266 = vector.shape_cast %265 : vector<8xf32> to vector<8x1xf32>
    %267 = vector.broadcast %266 : vector<8x1xf32> to vector<8x8xf32>
    %268 = arith.subf %264, %267 : vector<8x8xf32>
    %269 = math.exp %268 : vector<8x8xf32>
    %cst_130 = arith.constant dense<0.000000e+00> : vector<8xf32>
    %270 = vector.multi_reduction <add>, %269, %cst_130 [1] : vector<8x8xf32> to vector<8xf32>
    %271 = vector.shape_cast %270 : vector<8xf32> to vector<8x1xf32>
    %272 = tpu.reciprocal %271 {approx = true} : vector<8x1xf32> -> vector<8x1xf32>
    %273 = vector.broadcast %272 : vector<8x1xf32> to vector<8x8xf32>
    %274 = arith.mulf %269, %273 : vector<8x8xf32>
    %cst_131 = arith.constant dense<0.000000e+00> : vector<8x16xf32>
    %275 = tpu.matmul %274, %262, %cst_131 {dimension_numbers = #tpu.dot_dimension_numbers<[1], [0], [0], [1], [0, 0, 1, 1], [], []>} : vector<8x8xf32>, vector<8x16xf32>, vector<8x16xf32> -> vector<8x16xf32>
    %276 = tpu.concatenate %259, %275 in 1 : vector<8x16xf32>, vector<8x16xf32> -> vector<8x32xf32>
    %c2_132 = arith.constant 2 : index
    %c0_133 = arith.constant 0 : index
    %c0_134 = arith.constant 0 : index
    %277 = vector.load %arg4[%c2_132, %c0_133, %c0_134] : memref<4x32x32xbf16, #tpu.memory_space<vmem>>, vector<1x32x32xbf16>
    %278 = vector.shape_cast %277 : vector<1x32x32xbf16> to vector<32x32xbf16>
    %279 = arith.truncf %276 : vector<8x32xf32> to vector<8x32xbf16>
    %cst_135 = arith.constant dense<0.000000e+00> : vector<8x32xf32>
    %280 = tpu.matmul %279, %278, %cst_135 {dimension_numbers = #tpu.dot_dimension_numbers<[1], [0], [0], [1], [0, 0, 1, 1], [], []>} : vector<8x32xbf16>, vector<32x32xbf16>, vector<8x32xf32> -> vector<8x32xf32>
    %c2_136 = arith.constant 2 : index
    %c0_137 = arith.constant 0 : index
    %c0_138 = arith.constant 0 : index
    %281 = vector.load %arg5[%c2_136, %c0_137, %c0_138] : memref<4x1x32xf32, #tpu.memory_space<vmem>>, vector<1x1x32xf32>
    %282 = vector.shape_cast %281 : vector<1x1x32xf32> to vector<1x32xf32>
    %283 = vector.broadcast %282 : vector<1x32xf32> to vector<8x32xf32>
    %284 = arith.addf %280, %283 : vector<8x32xf32>
    %285 = arith.addf %235, %284 : vector<8x32xf32>
    %cst_139 = arith.constant dense<0.000000e+00> : vector<8xf32>
    %286 = vector.multi_reduction <add>, %285, %cst_139 [1] : vector<8x32xf32> to vector<8xf32>
    %287 = vector.shape_cast %286 : vector<8xf32> to vector<8x1xf32>
    %cst_140 = arith.constant 3.200000e+01 : f32
    %288 = vector.broadcast %cst_140 : f32 to vector<8x1xf32>
    %289 = arith.divf %287, %288 : vector<8x1xf32>
    %290 = vector.broadcast %289 : vector<8x1xf32> to vector<8x32xf32>
    %291 = arith.subf %285, %290 : vector<8x32xf32>
    %292 = arith.mulf %291, %291 : vector<8x32xf32>
    %cst_141 = arith.constant dense<0.000000e+00> : vector<8xf32>
    %293 = vector.multi_reduction <add>, %292, %cst_141 [1] : vector<8x32xf32> to vector<8xf32>
    %294 = vector.shape_cast %293 : vector<8xf32> to vector<8x1xf32>
    %cst_142 = arith.constant 3.200000e+01 : f32
    %295 = vector.broadcast %cst_142 : f32 to vector<8x1xf32>
    %296 = arith.divf %294, %295 : vector<8x1xf32>
    %cst_143 = arith.constant 9.99999974E-6 : f32
    %297 = vector.broadcast %cst_143 : f32 to vector<8x1xf32>
    %298 = arith.addf %296, %297 : vector<8x1xf32>
    %299 = math.rsqrt %298 : vector<8x1xf32>
    %300 = vector.broadcast %299 : vector<8x1xf32> to vector<8x32xf32>
    %301 = arith.mulf %291, %300 : vector<8x32xf32>
    %c2_144 = arith.constant 2 : index
    %c0_145 = arith.constant 0 : index
    %c0_146 = arith.constant 0 : index
    %302 = vector.load %arg6[%c2_144, %c0_145, %c0_146] : memref<4x1x32xf32, #tpu.memory_space<vmem>>, vector<1x1x32xf32>
    %303 = vector.shape_cast %302 : vector<1x1x32xf32> to vector<1x32xf32>
    %304 = vector.broadcast %303 : vector<1x32xf32> to vector<8x32xf32>
    %305 = arith.mulf %301, %304 : vector<8x32xf32>
    %c2_147 = arith.constant 2 : index
    %c0_148 = arith.constant 0 : index
    %c0_149 = arith.constant 0 : index
    %306 = vector.load %arg7[%c2_147, %c0_148, %c0_149] : memref<4x1x32xf32, #tpu.memory_space<vmem>>, vector<1x1x32xf32>
    %307 = vector.shape_cast %306 : vector<1x1x32xf32> to vector<1x32xf32>
    %308 = vector.broadcast %307 : vector<1x32xf32> to vector<8x32xf32>
    %309 = arith.addf %305, %308 : vector<8x32xf32>
    %c2_150 = arith.constant 2 : index
    %c0_151 = arith.constant 0 : index
    %c0_152 = arith.constant 0 : index
    %310 = vector.load %arg8[%c2_150, %c0_151, %c0_152] : memref<4x32x64xbf16, #tpu.memory_space<vmem>>, vector<1x32x64xbf16>
    %311 = vector.shape_cast %310 : vector<1x32x64xbf16> to vector<32x64xbf16>
    %312 = arith.truncf %309 : vector<8x32xf32> to vector<8x32xbf16>
    %cst_153 = arith.constant dense<0.000000e+00> : vector<8x64xf32>
    %313 = tpu.matmul %312, %311, %cst_153 {dimension_numbers = #tpu.dot_dimension_numbers<[1], [0], [0], [1], [0, 0, 1, 1], [], []>} : vector<8x32xbf16>, vector<32x64xbf16>, vector<8x64xf32> -> vector<8x64xf32>
    %c2_154 = arith.constant 2 : index
    %c0_155 = arith.constant 0 : index
    %c0_156 = arith.constant 0 : index
    %314 = vector.load %arg9[%c2_154, %c0_155, %c0_156] : memref<4x1x64xf32, #tpu.memory_space<vmem>>, vector<1x1x64xf32>
    %315 = vector.shape_cast %314 : vector<1x1x64xf32> to vector<1x64xf32>
    %316 = vector.broadcast %315 : vector<1x64xf32> to vector<8x64xf32>
    %317 = arith.addf %313, %316 : vector<8x64xf32>
    %cst_157 = arith.constant 0.000000e+00 : f32
    %318 = vector.broadcast %cst_157 : f32 to vector<8x64xf32>
    %319 = arith.maximumf %317, %318 : vector<8x64xf32>
    %c2_158 = arith.constant 2 : index
    %c0_159 = arith.constant 0 : index
    %c0_160 = arith.constant 0 : index
    %320 = vector.load %arg10[%c2_158, %c0_159, %c0_160] : memref<4x64x32xbf16, #tpu.memory_space<vmem>>, vector<1x64x32xbf16>
    %321 = vector.shape_cast %320 : vector<1x64x32xbf16> to vector<64x32xbf16>
    %322 = arith.truncf %319 : vector<8x64xf32> to vector<8x64xbf16>
    %cst_161 = arith.constant dense<0.000000e+00> : vector<8x32xf32>
    %323 = tpu.matmul %322, %321, %cst_161 {dimension_numbers = #tpu.dot_dimension_numbers<[1], [0], [0], [1], [0, 0, 1, 1], [], []>} : vector<8x64xbf16>, vector<64x32xbf16>, vector<8x32xf32> -> vector<8x32xf32>
    %c2_162 = arith.constant 2 : index
    %c0_163 = arith.constant 0 : index
    %c0_164 = arith.constant 0 : index
    %324 = vector.load %arg11[%c2_162, %c0_163, %c0_164] : memref<4x1x32xf32, #tpu.memory_space<vmem>>, vector<1x1x32xf32>
    %325 = vector.shape_cast %324 : vector<1x1x32xf32> to vector<1x32xf32>
    %326 = vector.broadcast %325 : vector<1x32xf32> to vector<8x32xf32>
    %327 = arith.addf %323, %326 : vector<8x32xf32>
    %328 = arith.addf %309, %327 : vector<8x32xf32>
    %cst_165 = arith.constant dense<0.000000e+00> : vector<8xf32>
    %329 = vector.multi_reduction <add>, %328, %cst_165 [1] : vector<8x32xf32> to vector<8xf32>
    %330 = vector.shape_cast %329 : vector<8xf32> to vector<8x1xf32>
    %cst_166 = arith.constant 3.200000e+01 : f32
    %331 = vector.broadcast %cst_166 : f32 to vector<8x1xf32>
    %332 = arith.divf %330, %331 : vector<8x1xf32>
    %333 = vector.broadcast %332 : vector<8x1xf32> to vector<8x32xf32>
    %334 = arith.subf %328, %333 : vector<8x32xf32>
    %335 = arith.mulf %334, %334 : vector<8x32xf32>
    %cst_167 = arith.constant dense<0.000000e+00> : vector<8xf32>
    %336 = vector.multi_reduction <add>, %335, %cst_167 [1] : vector<8x32xf32> to vector<8xf32>
    %337 = vector.shape_cast %336 : vector<8xf32> to vector<8x1xf32>
    %cst_168 = arith.constant 3.200000e+01 : f32
    %338 = vector.broadcast %cst_168 : f32 to vector<8x1xf32>
    %339 = arith.divf %337, %338 : vector<8x1xf32>
    %cst_169 = arith.constant 9.99999974E-6 : f32
    %340 = vector.broadcast %cst_169 : f32 to vector<8x1xf32>
    %341 = arith.addf %339, %340 : vector<8x1xf32>
    %342 = math.rsqrt %341 : vector<8x1xf32>
    %343 = vector.broadcast %342 : vector<8x1xf32> to vector<8x32xf32>
    %344 = arith.mulf %334, %343 : vector<8x32xf32>
    %c2_170 = arith.constant 2 : index
    %c0_171 = arith.constant 0 : index
    %c0_172 = arith.constant 0 : index
    %345 = vector.load %arg12[%c2_170, %c0_171, %c0_172] : memref<4x1x32xf32, #tpu.memory_space<vmem>>, vector<1x1x32xf32>
    %346 = vector.shape_cast %345 : vector<1x1x32xf32> to vector<1x32xf32>
    %347 = vector.broadcast %346 : vector<1x32xf32> to vector<8x32xf32>
    %348 = arith.mulf %344, %347 : vector<8x32xf32>
    %c2_173 = arith.constant 2 : index
    %c0_174 = arith.constant 0 : index
    %c0_175 = arith.constant 0 : index
    %349 = vector.load %arg13[%c2_173, %c0_174, %c0_175] : memref<4x1x32xf32, #tpu.memory_space<vmem>>, vector<1x1x32xf32>
    %350 = vector.shape_cast %349 : vector<1x1x32xf32> to vector<1x32xf32>
    %351 = vector.broadcast %350 : vector<1x32xf32> to vector<8x32xf32>
    %352 = arith.addf %348, %351 : vector<8x32xf32>
    %c3 = arith.constant 3 : index
    %c0_176 = arith.constant 0 : index
    %c0_177 = arith.constant 0 : index
    %353 = vector.load %arg2[%c3, %c0_176, %c0_177] : memref<4x32x96xbf16, #tpu.memory_space<vmem>>, vector<1x32x96xbf16>
    %354 = vector.shape_cast %353 : vector<1x32x96xbf16> to vector<32x96xbf16>
    %355 = arith.truncf %352 : vector<8x32xf32> to vector<8x32xbf16>
    %cst_178 = arith.constant dense<0.000000e+00> : vector<8x96xf32>
    %356 = tpu.matmul %355, %354, %cst_178 {dimension_numbers = #tpu.dot_dimension_numbers<[1], [0], [0], [1], [0, 0, 1, 1], [], []>} : vector<8x32xbf16>, vector<32x96xbf16>, vector<8x96xf32> -> vector<8x96xf32>
    %c3_179 = arith.constant 3 : index
    %c0_180 = arith.constant 0 : index
    %c0_181 = arith.constant 0 : index
    %357 = vector.load %arg3[%c3_179, %c0_180, %c0_181] : memref<4x1x96xf32, #tpu.memory_space<vmem>>, vector<1x1x96xf32>
    %358 = vector.shape_cast %357 : vector<1x1x96xf32> to vector<1x96xf32>
    %359 = vector.broadcast %358 : vector<1x96xf32> to vector<8x96xf32>
    %360 = arith.addf %356, %359 : vector<8x96xf32>
    %361 = vector.extract_strided_slice %360 {offsets = [0, 0], sizes = [8, 16], strides = [1, 1]} : vector<8x96xf32> to vector<8x16xf32>
    %362 = vector.extract_strided_slice %360 {offsets = [0, 32], sizes = [8, 16], strides = [1, 1]} : vector<8x96xf32> to vector<8x16xf32>
    %363 = vector.extract_strided_slice %360 {offsets = [0, 64], sizes = [8, 16], strides = [1, 1]} : vector<8x96xf32> to vector<8x16xf32>
    %364 = tpu.transpose %362, [1, 0] : vector<8x16xf32> -> vector<16x8xf32>
    %cst_182 = arith.constant dense<0.000000e+00> : vector<8x8xf32>
    %365 = tpu.matmul %361, %364, %cst_182 {dimension_numbers = #tpu.dot_dimension_numbers<[1], [0], [0], [1], [0, 0, 1, 1], [], []>} : vector<8x16xf32>, vector<16x8xf32>, vector<8x8xf32> -> vector<8x8xf32>
    %cst_183 = arith.constant dense<0xFF800000> : vector<8xf32>
    %366 = vector.multi_reduction <maximumf>, %365, %cst_183 [1] : vector<8x8xf32> to vector<8xf32>
    %367 = vector.shape_cast %366 : vector<8xf32> to vector<8x1xf32>
    %368 = vector.broadcast %367 : vector<8x1xf32> to vector<8x8xf32>
    %369 = arith.subf %365, %368 : vector<8x8xf32>
    %370 = math.exp %369 : vector<8x8xf32>
    %cst_184 = arith.constant dense<0.000000e+00> : vector<8xf32>
    %371 = vector.multi_reduction <add>, %370, %cst_184 [1] : vector<8x8xf32> to vector<8xf32>
    %372 = vector.shape_cast %371 : vector<8xf32> to vector<8x1xf32>
    %373 = tpu.reciprocal %372 {approx = true} : vector<8x1xf32> -> vector<8x1xf32>
    %374 = vector.broadcast %373 : vector<8x1xf32> to vector<8x8xf32>
    %375 = arith.mulf %370, %374 : vector<8x8xf32>
    %cst_185 = arith.constant dense<0.000000e+00> : vector<8x16xf32>
    %376 = tpu.matmul %375, %363, %cst_185 {dimension_numbers = #tpu.dot_dimension_numbers<[1], [0], [0], [1], [0, 0, 1, 1], [], []>} : vector<8x8xf32>, vector<8x16xf32>, vector<8x16xf32> -> vector<8x16xf32>
    %377 = vector.extract_strided_slice %360 {offsets = [0, 16], sizes = [8, 16], strides = [1, 1]} : vector<8x96xf32> to vector<8x16xf32>
    %378 = vector.extract_strided_slice %360 {offsets = [0, 48], sizes = [8, 16], strides = [1, 1]} : vector<8x96xf32> to vector<8x16xf32>
    %379 = vector.extract_strided_slice %360 {offsets = [0, 80], sizes = [8, 16], strides = [1, 1]} : vector<8x96xf32> to vector<8x16xf32>
    %380 = tpu.transpose %378, [1, 0] : vector<8x16xf32> -> vector<16x8xf32>
    %cst_186 = arith.constant dense<0.000000e+00> : vector<8x8xf32>
    %381 = tpu.matmul %377, %380, %cst_186 {dimension_numbers = #tpu.dot_dimension_numbers<[1], [0], [0], [1], [0, 0, 1, 1], [], []>} : vector<8x16xf32>, vector<16x8xf32>, vector<8x8xf32> -> vector<8x8xf32>
    %cst_187 = arith.constant dense<0xFF800000> : vector<8xf32>
    %382 = vector.multi_reduction <maximumf>, %381, %cst_187 [1] : vector<8x8xf32> to vector<8xf32>
    %383 = vector.shape_cast %382 : vector<8xf32> to vector<8x1xf32>
    %384 = vector.broadcast %383 : vector<8x1xf32> to vector<8x8xf32>
    %385 = arith.subf %381, %384 : vector<8x8xf32>
    %386 = math.exp %385 : vector<8x8xf32>
    %cst_188 = arith.constant dense<0.000000e+00> : vector<8xf32>
    %387 = vector.multi_reduction <add>, %386, %cst_188 [1] : vector<8x8xf32> to vector<8xf32>
    %388 = vector.shape_cast %387 : vector<8xf32> to vector<8x1xf32>
    %389 = tpu.reciprocal %388 {approx = true} : vector<8x1xf32> -> vector<8x1xf32>
    %390 = vector.broadcast %389 : vector<8x1xf32> to vector<8x8xf32>
    %391 = arith.mulf %386, %390 : vector<8x8xf32>
    %cst_189 = arith.constant dense<0.000000e+00> : vector<8x16xf32>
    %392 = tpu.matmul %391, %379, %cst_189 {dimension_numbers = #tpu.dot_dimension_numbers<[1], [0], [0], [1], [0, 0, 1, 1], [], []>} : vector<8x8xf32>, vector<8x16xf32>, vector<8x16xf32> -> vector<8x16xf32>
    %393 = tpu.concatenate %376, %392 in 1 : vector<8x16xf32>, vector<8x16xf32> -> vector<8x32xf32>
    %c3_190 = arith.constant 3 : index
    %c0_191 = arith.constant 0 : index
    %c0_192 = arith.constant 0 : index
    %394 = vector.load %arg4[%c3_190, %c0_191, %c0_192] : memref<4x32x32xbf16, #tpu.memory_space<vmem>>, vector<1x32x32xbf16>
    %395 = vector.shape_cast %394 : vector<1x32x32xbf16> to vector<32x32xbf16>
    %396 = arith.truncf %393 : vector<8x32xf32> to vector<8x32xbf16>
    %cst_193 = arith.constant dense<0.000000e+00> : vector<8x32xf32>
    %397 = tpu.matmul %396, %395, %cst_193 {dimension_numbers = #tpu.dot_dimension_numbers<[1], [0], [0], [1], [0, 0, 1, 1], [], []>} : vector<8x32xbf16>, vector<32x32xbf16>, vector<8x32xf32> -> vector<8x32xf32>
    %c3_194 = arith.constant 3 : index
    %c0_195 = arith.constant 0 : index
    %c0_196 = arith.constant 0 : index
    %398 = vector.load %arg5[%c3_194, %c0_195, %c0_196] : memref<4x1x32xf32, #tpu.memory_space<vmem>>, vector<1x1x32xf32>
    %399 = vector.shape_cast %398 : vector<1x1x32xf32> to vector<1x32xf32>
    %400 = vector.broadcast %399 : vector<1x32xf32> to vector<8x32xf32>
    %401 = arith.addf %397, %400 : vector<8x32xf32>
    %402 = arith.addf %352, %401 : vector<8x32xf32>
    %cst_197 = arith.constant dense<0.000000e+00> : vector<8xf32>
    %403 = vector.multi_reduction <add>, %402, %cst_197 [1] : vector<8x32xf32> to vector<8xf32>
    %404 = vector.shape_cast %403 : vector<8xf32> to vector<8x1xf32>
    %cst_198 = arith.constant 3.200000e+01 : f32
    %405 = vector.broadcast %cst_198 : f32 to vector<8x1xf32>
    %406 = arith.divf %404, %405 : vector<8x1xf32>
    %407 = vector.broadcast %406 : vector<8x1xf32> to vector<8x32xf32>
    %408 = arith.subf %402, %407 : vector<8x32xf32>
    %409 = arith.mulf %408, %408 : vector<8x32xf32>
    %cst_199 = arith.constant dense<0.000000e+00> : vector<8xf32>
    %410 = vector.multi_reduction <add>, %409, %cst_199 [1] : vector<8x32xf32> to vector<8xf32>
    %411 = vector.shape_cast %410 : vector<8xf32> to vector<8x1xf32>
    %cst_200 = arith.constant 3.200000e+01 : f32
    %412 = vector.broadcast %cst_200 : f32 to vector<8x1xf32>
    %413 = arith.divf %411, %412 : vector<8x1xf32>
    %cst_201 = arith.constant 9.99999974E-6 : f32
    %414 = vector.broadcast %cst_201 : f32 to vector<8x1xf32>
    %415 = arith.addf %413, %414 : vector<8x1xf32>
    %416 = math.rsqrt %415 : vector<8x1xf32>
    %417 = vector.broadcast %416 : vector<8x1xf32> to vector<8x32xf32>
    %418 = arith.mulf %408, %417 : vector<8x32xf32>
    %c3_202 = arith.constant 3 : index
    %c0_203 = arith.constant 0 : index
    %c0_204 = arith.constant 0 : index
    %419 = vector.load %arg6[%c3_202, %c0_203, %c0_204] : memref<4x1x32xf32, #tpu.memory_space<vmem>>, vector<1x1x32xf32>
    %420 = vector.shape_cast %419 : vector<1x1x32xf32> to vector<1x32xf32>
    %421 = vector.broadcast %420 : vector<1x32xf32> to vector<8x32xf32>
    %422 = arith.mulf %418, %421 : vector<8x32xf32>
    %c3_205 = arith.constant 3 : index
    %c0_206 = arith.constant 0 : index
    %c0_207 = arith.constant 0 : index
    %423 = vector.load %arg7[%c3_205, %c0_206, %c0_207] : memref<4x1x32xf32, #tpu.memory_space<vmem>>, vector<1x1x32xf32>
    %424 = vector.shape_cast %423 : vector<1x1x32xf32> to vector<1x32xf32>
    %425 = vector.broadcast %424 : vector<1x32xf32> to vector<8x32xf32>
    %426 = arith.addf %422, %425 : vector<8x32xf32>
    %c3_208 = arith.constant 3 : index
    %c0_209 = arith.constant 0 : index
    %c0_210 = arith.constant 0 : index
    %427 = vector.load %arg8[%c3_208, %c0_209, %c0_210] : memref<4x32x64xbf16, #tpu.memory_space<vmem>>, vector<1x32x64xbf16>
    %428 = vector.shape_cast %427 : vector<1x32x64xbf16> to vector<32x64xbf16>
    %429 = arith.truncf %426 : vector<8x32xf32> to vector<8x32xbf16>
    %cst_211 = arith.constant dense<0.000000e+00> : vector<8x64xf32>
    %430 = tpu.matmul %429, %428, %cst_211 {dimension_numbers = #tpu.dot_dimension_numbers<[1], [0], [0], [1], [0, 0, 1, 1], [], []>} : vector<8x32xbf16>, vector<32x64xbf16>, vector<8x64xf32> -> vector<8x64xf32>
    %c3_212 = arith.constant 3 : index
    %c0_213 = arith.constant 0 : index
    %c0_214 = arith.constant 0 : index
    %431 = vector.load %arg9[%c3_212, %c0_213, %c0_214] : memref<4x1x64xf32, #tpu.memory_space<vmem>>, vector<1x1x64xf32>
    %432 = vector.shape_cast %431 : vector<1x1x64xf32> to vector<1x64xf32>
    %433 = vector.broadcast %432 : vector<1x64xf32> to vector<8x64xf32>
    %434 = arith.addf %430, %433 : vector<8x64xf32>
    %cst_215 = arith.constant 0.000000e+00 : f32
    %435 = vector.broadcast %cst_215 : f32 to vector<8x64xf32>
    %436 = arith.maximumf %434, %435 : vector<8x64xf32>
    %c3_216 = arith.constant 3 : index
    %c0_217 = arith.constant 0 : index
    %c0_218 = arith.constant 0 : index
    %437 = vector.load %arg10[%c3_216, %c0_217, %c0_218] : memref<4x64x32xbf16, #tpu.memory_space<vmem>>, vector<1x64x32xbf16>
    %438 = vector.shape_cast %437 : vector<1x64x32xbf16> to vector<64x32xbf16>
    %439 = arith.truncf %436 : vector<8x64xf32> to vector<8x64xbf16>
    %cst_219 = arith.constant dense<0.000000e+00> : vector<8x32xf32>
    %440 = tpu.matmul %439, %438, %cst_219 {dimension_numbers = #tpu.dot_dimension_numbers<[1], [0], [0], [1], [0, 0, 1, 1], [], []>} : vector<8x64xbf16>, vector<64x32xbf16>, vector<8x32xf32> -> vector<8x32xf32>
    %c3_220 = arith.constant 3 : index
    %c0_221 = arith.constant 0 : index
    %c0_222 = arith.constant 0 : index
    %441 = vector.load %arg11[%c3_220, %c0_221, %c0_222] : memref<4x1x32xf32, #tpu.memory_space<vmem>>, vector<1x1x32xf32>
    %442 = vector.shape_cast %441 : vector<1x1x32xf32> to vector<1x32xf32>
    %443 = vector.broadcast %442 : vector<1x32xf32> to vector<8x32xf32>
    %444 = arith.addf %440, %443 : vector<8x32xf32>
    %445 = arith.addf %426, %444 : vector<8x32xf32>
    %cst_223 = arith.constant dense<0.000000e+00> : vector<8xf32>
    %446 = vector.multi_reduction <add>, %445, %cst_223 [1] : vector<8x32xf32> to vector<8xf32>
    %447 = vector.shape_cast %446 : vector<8xf32> to vector<8x1xf32>
    %cst_224 = arith.constant 3.200000e+01 : f32
    %448 = vector.broadcast %cst_224 : f32 to vector<8x1xf32>
    %449 = arith.divf %447, %448 : vector<8x1xf32>
    %450 = vector.broadcast %449 : vector<8x1xf32> to vector<8x32xf32>
    %451 = arith.subf %445, %450 : vector<8x32xf32>
    %452 = arith.mulf %451, %451 : vector<8x32xf32>
    %cst_225 = arith.constant dense<0.000000e+00> : vector<8xf32>
    %453 = vector.multi_reduction <add>, %452, %cst_225 [1] : vector<8x32xf32> to vector<8xf32>
    %454 = vector.shape_cast %453 : vector<8xf32> to vector<8x1xf32>
    %cst_226 = arith.constant 3.200000e+01 : f32
    %455 = vector.broadcast %cst_226 : f32 to vector<8x1xf32>
    %456 = arith.divf %454, %455 : vector<8x1xf32>
    %cst_227 = arith.constant 9.99999974E-6 : f32
    %457 = vector.broadcast %cst_227 : f32 to vector<8x1xf32>
    %458 = arith.addf %456, %457 : vector<8x1xf32>
    %459 = math.rsqrt %458 : vector<8x1xf32>
    %460 = vector.broadcast %459 : vector<8x1xf32> to vector<8x32xf32>
    %461 = arith.mulf %451, %460 : vector<8x32xf32>
    %c3_228 = arith.constant 3 : index
    %c0_229 = arith.constant 0 : index
    %c0_230 = arith.constant 0 : index
    %462 = vector.load %arg12[%c3_228, %c0_229, %c0_230] : memref<4x1x32xf32, #tpu.memory_space<vmem>>, vector<1x1x32xf32>
    %463 = vector.shape_cast %462 : vector<1x1x32xf32> to vector<1x32xf32>
    %464 = vector.broadcast %463 : vector<1x32xf32> to vector<8x32xf32>
    %465 = arith.mulf %461, %464 : vector<8x32xf32>
    %c3_231 = arith.constant 3 : index
    %c0_232 = arith.constant 0 : index
    %c0_233 = arith.constant 0 : index
    %466 = vector.load %arg13[%c3_231, %c0_232, %c0_233] : memref<4x1x32xf32, #tpu.memory_space<vmem>>, vector<1x1x32xf32>
    %467 = vector.shape_cast %466 : vector<1x1x32xf32> to vector<1x32xf32>
    %468 = vector.broadcast %467 : vector<1x32xf32> to vector<8x32xf32>
    %469 = arith.addf %465, %468 : vector<8x32xf32>
    %c0_234 = arith.constant 0 : index
    %c0_235 = arith.constant 0 : index
    %c0_236 = arith.constant 0 : index
    %470 = vector.load %arg14[%c0_234, %c0_235, %c0_236] : memref<1x8x32xf32, #tpu.memory_space<vmem>>, vector<1x8x32xf32>
    %471 = vector.shape_cast %470 : vector<1x8x32xf32> to vector<8x32xf32>
    %472 = vector.shape_cast %469 : vector<8x32xf32> to vector<1x8x32xf32>
    tpu.vector_store %arg14[%c0_234, %c0_235, %c0_236], %472 {strides = array<i32>} : memref<1x8x32xf32, #tpu.memory_space<vmem>>, vector<1x8x32xf32>,
    return
  }
  func.func @transform_0(%arg0: i32) -> (i32, i32, i32) {
    %c0_i32 = arith.constant 0 : i32
    %c0_i32_0 = arith.constant 0 : i32
    %c0_i32_1 = arith.constant 0 : i32
    return %arg0, %c0_i32, %c0_i32_0 : i32, i32, i32
  }
  func.func @transform_1(%arg0: i32) -> (i32, i32, i32) {
    %c0_i32 = arith.constant 0 : i32
    %c0_i32_0 = arith.constant 0 : i32
    %c0_i32_1 = arith.constant 0 : i32
    %c0_i32_2 = arith.constant 0 : i32
    return %c0_i32, %c0_i32_0, %c0_i32_1 : i32, i32, i32
  }
  func.func @transform_2(%arg0: i32) -> (i32, i32, i32) {
    %c0_i32 = arith.constant 0 : i32
    %c0_i32_0 = arith.constant 0 : i32
    %c0_i32_1 = arith.constant 0 : i32
    %c0_i32_2 = arith.constant 0 : i32
    return %c0_i32, %c0_i32_0, %c0_i32_1 : i32, i32, i32
  }
  func.func @transform_3(%arg0: i32) -> (i32, i32, i32) {
    %c0_i32 = arith.constant 0 : i32
    %c0_i32_0 = arith.constant 0 : i32
    %c0_i32_1 = arith.constant 0 : i32
    %c0_i32_2 = arith.constant 0 : i32
    return %c0_i32, %c0_i32_0, %c0_i32_1 : i32, i32, i32
  }
  func.func @transform_4(%arg0: i32) -> (i32, i32, i32) {
    %c0_i32 = arith.constant 0 : i32
    %c0_i32_0 = arith.constant 0 : i32
    %c0_i32_1 = arith.constant 0 : i32
    %c0_i32_2 = arith.constant 0 : i32
    return %c0_i32, %c0_i32_0, %c0_i32_1 : i32, i32, i32
  }
  func.func @transform_5(%arg0: i32) -> (i32, i32, i32) {
    %c0_i32 = arith.constant 0 : i32
    %c0_i32_0 = arith.constant 0 : i32
    %c0_i32_1 = arith.constant 0 : i32
    %c0_i32_2 = arith.constant 0 : i32
    return %c0_i32, %c0_i32_0, %c0_i32_1 : i32, i32, i32
  }
  func.func @transform_6(%arg0: i32) -> (i32, i32, i32) {
    %c0_i32 = arith.constant 0 : i32
    %c0_i32_0 = arith.constant 0 : i32
    %c0_i32_1 = arith.constant 0 : i32
    %c0_i32_2 = arith.constant 0 : i32
    return %c0_i32, %c0_i32_0, %c0_i32_1 : i32, i32, i32
  }
  func.func @transform_7(%arg0: i32) -> (i32, i32, i32) {
    %c0_i32 = arith.constant 0 : i32
    %c0_i32_0 = arith.constant 0 : i32
    %c0_i32_1 = arith.constant 0 : i32
    %c0_i32_2 = arith.constant 0 : i32
    return %c0_i32, %c0_i32_0, %c0_i32_1 : i32, i32, i32
  }
  func.func @transform_8(%arg0: i32) -> (i32, i32, i32) {
    %c0_i32 = arith.constant 0 : i32
    %c0_i32_0 = arith.constant 0 : i32
    %c0_i32_1 = arith.constant 0 : i32
    %c0_i32_2 = arith.constant 0 : i32
    return %c0_i32, %c0_i32_0, %c0_i32_1 : i32, i32, i32
  }
  func.func @transform_9(%arg0: i32) -> (i32, i32, i32) {
    %c0_i32 = arith.constant 0 : i32
    %c0_i32_0 = arith.constant 0 : i32
    %c0_i32_1 = arith.constant 0 : i32
    %c0_i32_2 = arith.constant 0 : i32
    return %c0_i32, %c0_i32_0, %c0_i32_1 : i32, i32, i32
  }
  func.func @transform_10(%arg0: i32) -> (i32, i32, i32) {
    %c0_i32 = arith.constant 0 : i32
    %c0_i32_0 = arith.constant 0 : i32
    %c0_i32_1 = arith.constant 0 : i32
    %c0_i32_2 = arith.constant 0 : i32
    return %c0_i32, %c0_i32_0, %c0_i32_1 : i32, i32, i32
  }
  func.func @transform_11(%arg0: i32) -> (i32, i32, i32) {
    %c0_i32 = arith.constant 0 : i32
    %c0_i32_0 = arith.constant 0 : i32
    %c0_i32_1 = arith.constant 0 : i32
    %c0_i32_2 = arith.constant 0 : i32
    return %c0_i32, %c0_i32_0, %c0_i32_1 : i32, i32, i32
  }
  func.func @transform_12(%arg0: i32) -> (i32, i32, i32) {
    %c0_i32 = arith.constant 0 : i32
    %c0_i32_0 = arith.constant 0 : i32
    %c0_i32_1 = arith.constant 0 : i32
    %c0_i32_2 = arith.constant 0 : i32
    return %c0_i32, %c0_i32_0, %c0_i32_1 : i32, i32, i32
  }
  func.func @transform_13(%arg0: i32) -> (i32, i32, i32) {
    %c0_i32 = arith.constant 0 : i32
    %c0_i32_0 = arith.constant 0 : i32
    %c0_i32_1 = arith.constant 0 : i32
    return %arg0, %c0_i32, %c0_i32_0 : i32, i32, i32
  }
}

</mosaic_0001>

<llo_original>
// kernel: tpu_custom_call.1
$region0: #{tpu_custom_call.1}
  #allocation0 [shape = 'u32[]', space=smem, size = 0x4, offset = 0x4, fixed_abs, tag = 'smem constant byte address 0x4 - core index']
  #allocation1 [shape = 'u32[72,128]{1,0:T(1,128)}', space=vmem, size = 0x9000, scoped, tag = 'internal scratch']
  %s0 = inlined_call_operand.hbm [shape: f32[2,8,32], index: 0, kind: input, shape index: {}]
  %s1 = inlined_call_operand.vmem [shape: bf16[4,32,96], index: 1, kind: input, shape index: {}]
  %s2 = inlined_call_operand.hbm [shape: f32[4,1,96], index: 2, kind: input, shape index: {}]
  %s3 = inlined_call_operand.vmem [shape: bf16[4,32,32], index: 3, kind: input, shape index: {}]
  %s4 = inlined_call_operand.hbm [shape: f32[4,1,32], index: 4, kind: input, shape index: {}]
  %s5 = inlined_call_operand.hbm [shape: f32[4,1,32], index: 5, kind: input, shape index: {}]
  %s6 = inlined_call_operand.vmem [shape: f32[4,1,32], index: 6, kind: input, shape index: {}]
  %s7 = inlined_call_operand.vmem [shape: bf16[4,32,64], index: 7, kind: input, shape index: {}]
  %s8 = inlined_call_operand.hbm [shape: f32[4,1,64], index: 8, kind: input, shape index: {}]
  %s9 = inlined_call_operand.vmem [shape: bf16[4,64,32], index: 9, kind: input, shape index: {}]
  %s10 = inlined_call_operand.vmem [shape: f32[4,1,32], index: 10, kind: input, shape index: {}]
  %s11 = inlined_call_operand.hbm [shape: f32[4,1,32], index: 11, kind: input, shape index: {}]
  %s12 = inlined_call_operand.hbm [shape: f32[4,1,32], index: 12, kind: input, shape index: {}]
  %s13 = inlined_call_operand.hbm [shape: f32[2,8,32], index: 13, kind: output, shape index: {}]
  %s14 = sld [smem:[#allocation0]]
  $region113: #{tpu_custom_call.1} parent=0
    _
  %s16 = ssub.s32 1, %s14
  %s17 = scalar_select 0, %s16, %s14
  $region1: #{tpu_custom_call.1} parent=0
    #allocation2 [shape = 'u8[8192]{0}', space=vmem, size = 0x2000, scoped, tag = 'input window, operand 0']
    #allocation3 [shape = 's32[2]{0}', space=sflag, size = 0x8, scoped, tag = 'scoped memory for tpu_custom_call.1']
    #allocation4 [shape = 's32[2]{0}', space=sflag, size = 0x8, scoped, tag = 'scoped memory for tpu_custom_call.1']
    #allocation5 [shape = 'u8[2048]{0}', space=vmem, size = 0x800, scoped, tag = 'input window, operand 2, single buffered']
    #allocation6 [shape = 's32[1]{0}', space=sflag, size = 0x4, scoped, tag = 'scoped memory for tpu_custom_call.1']
    #allocation7 [shape = 'u8[2048]{0}', space=vmem, size = 0x800, scoped, tag = 'input window, operand 4, single buffered']
    #allocation8 [shape = 'u8[2048]{0}', space=vmem, size = 0x800, scoped, tag = 'input window, operand 5, single buffered']
    #allocation9 [shape = 's32[1]{0}', space=sflag, size = 0x4, scoped, tag = 'scoped memory for tpu_custom_call.1']
    #allocation10 [shape = 'u8[2048]{0}', space=vmem, size = 0x800, scoped, tag = 'input window, operand 8, single buffered']
    #allocation11 [shape = 'u8[2048]{0}', space=vmem, size = 0x800, scoped, tag = 'input window, operand 11, single buffered']
    #allocation12 [shape = 's32[1]{0}', space=sflag, size = 0x4, scoped, tag = 'scoped memory for tpu_custom_call.1']
    #allocation13 [shape = 'u8[2048]{0}', space=vmem, size = 0x800, scoped, tag = 'input window, operand 12, single buffered']
    #allocation14 [shape = 'u8[8192]{0}', space=vmem, size = 0x2000, scoped, tag = 'output window, operand 0']
    %18 = vsyncpa [#allocation3], 0
    %s19 = scalar_lea.sflag [#allocation3], 1
    %20 = vsyncpa %s19, 0
    %21 = vsyncpa [#allocation6], 0
    %22 = vsyncpa [#allocation9], 0
    %23 = vsyncpa [#allocation12], 0
    %24 = vsyncpa [#allocation4], 0
    %s25 = scalar_lea.sflag [#allocation4], 1
    %26 = vsyncpa %s25, 0
    loop: start=0, step=1, limit=4
    $region2: #{tpu_custom_call.1} parent=1 // loop_pre_header
      _
    $region3: #{tpu_custom_call.1} parent=1 // loop_header
      %s28 = sphi 0, %s32
      %p29 = scmp.ge.s32.totalorder %s28, 4
      %s38 = sphi 0, %s40
      %s41 = sphi 0, %s38
      %s42 = sphi 0, %s41
      %s58 = sphi 0, %s42
      %s62 = sphi 0, %s62
      %s64 = sphi 0, %s62
      %s65 = sphi 0, %s64
      %s79 = sphi 0, %s65
      %s83 = sphi 0, %s83
      %s85 = sphi 0, %s83
      %s86 = sphi 0, %s85
      %s100 = sphi 0, %s86
      %s104 = sphi 0, %s104
      %s106 = sphi 0, %s104
      %s107 = sphi 0, %s106
      %s121 = sphi 0, %s107
      %s125 = sphi 0, %s125
      %s127 = sphi 0, %s125
      %s128 = sphi 0, %s127
      %s142 = sphi 0, %s128
      %s146 = sphi 0, %s146
      %s148 = sphi 0, %s146
      %s149 = sphi 0, %s148
      %s163 = sphi 0, %s149
      %s167 = sphi 0, %s167
      %s169 = sphi 0, %s167
      %s170 = sphi 0, %s169
      %s184 = sphi 0, %s170
      %s188 = sphi 0, %s188
      %s190 = sphi 0, %s188
      %s191 = sphi 0, %s190
      %s205 = sphi 0, %s191
      %s209 = sphi 0, %s209
      %s211 = sphi 0, %s209
      %s212 = sphi 0, %s211
      %s226 = sphi 0, %s212
      %s230 = sphi 0, %s230
      %s232 = sphi 0, %s230
      %s233 = sphi 0, %s232
      %s247 = sphi 0, %s233
      %s251 = sphi 0, %s251
      %s253 = sphi 0, %s251
      %s254 = sphi 0, %s253
      %s268 = sphi 0, %s254
      %s272 = sphi 0, %s272
      %s274 = sphi 0, %s272
      %s275 = sphi 0, %s274
      %s289 = sphi 0, %s275
      %s293 = sphi 0, %s293
      %s295 = sphi 0, %s293
      %s296 = sphi 0, %s295
      %s310 = sphi 0, %s296
      %s316 = sphi 0, %s318
      %s319 = sphi 0, %s316
      %s320 = sphi 0, %s319
      %s336 = sphi 0, %s320
    $region4: #{tpu_custom_call.1} parent=1 // loop_header_branch
      %31 = sbr.rel (%p29) target = $region8
    $region5: #{tpu_custom_call.1} parent=1 // loop_body
      %s33 = ssub.s32 %s28, 1
      %s34 = ssub.s32 %s28, 2
      %s35 = sadd.s32 %s28, 1
      %s36 = ssub.s32 %s28, %s35
      %p37 = scmp.eq.s32.totalorder %s36, 0
      %s39 = sadd.s32 %s38, 1
      %s40 = scalar_select %p37, %s38, %s39
      %p43 = pneg %p37
      %p44 = scmp.eq.s32.totalorder %s28, 1
      %p45 = por %p43, %p44
      %p46 = scmp.ne.s32.totalorder %s38, %s41
      %p47 = scmp.eq.s32.totalorder %s28, 0
      %p48 = por %p46, %p47
      %p49 = scmp.ne.s32.totalorder %s38, %s41
      %p50 = scmp.eq.s32.totalorder %s33, 1
      %p51 = por %p49, %p50
      %p52 = scmp.ne.s32.totalorder %s41, %s42
      %p53 = scmp.eq.s32.totalorder %s33, 0
      %p54 = por %p52, %p53
      %p55 = scmp.ne.s32.totalorder %s41, %s42
      %p56 = scmp.eq.s32.totalorder %s34, 1
      %p57 = por %p55, %p56
      %p59 = scmp.ne.s32.totalorder %s42, %s58
      %p60 = scmp.eq.s32.totalorder %s34, 0
      %p61 = por %p59, %p60
      %s63 = sadd.s32 %s62, 1
      %p66 = scmp.eq.s32.totalorder %s28, 1
      %p67 = scmp.ne.s32.totalorder %s62, %s64
      %p68 = scmp.eq.s32.totalorder %s28, 0
      %p69 = por %p67, %p68
      %p70 = scmp.ne.s32.totalorder %s62, %s64
      %p71 = scmp.eq.s32.totalorder %s33, 1
      %p72 = por %p70, %p71
      %p73 = scmp.ne.s32.totalorder %s64, %s65
      %p74 = scmp.eq.s32.totalorder %s33, 0
      %p75 = por %p73, %p74
      %p76 = scmp.ne.s32.totalorder %s64, %s65
      %p77 = scmp.eq.s32.totalorder %s34, 1
      %p78 = por %p76, %p77
      %p80 = scmp.ne.s32.totalorder %s65, %s79
      %p81 = scmp.eq.s32.totalorder %s34, 0
      %p82 = por %p80, %p81
      %s84 = sadd.s32 %s83, 1
      %p87 = scmp.eq.s32.totalorder %s28, 1
      %p88 = scmp.ne.s32.totalorder %s83, %s85
      %p89 = scmp.eq.s32.totalorder %s28, 0
      %p90 = por %p88, %p89
      %p91 = scmp.ne.s32.totalorder %s83, %s85
      %p92 = scmp.eq.s32.totalorder %s33, 1
      %p93 = por %p91, %p92
      %p94 = scmp.ne.s32.totalorder %s85, %s86
      %p95 = scmp.eq.s32.totalorder %s33, 0
      %p96 = por %p94, %p95
      %p97 = scmp.ne.s32.totalorder %s85, %s86
      %p98 = scmp.eq.s32.totalorder %s34, 1
      %p99 = por %p97, %p98
      %p101 = scmp.ne.s32.totalorder %s86, %s100
      %p102 = scmp.eq.s32.totalorder %s34, 0
      %p103 = por %p101, %p102
      %s105 = sadd.s32 %s104, 1
      %p108 = scmp.eq.s32.totalorder %s28, 1
      %p109 = scmp.ne.s32.totalorder %s104, %s106
      %p110 = scmp.eq.s32.totalorder %s28, 0
      %p111 = por %p109, %p110
      %p112 = scmp.ne.s32.totalorder %s104, %s106
      %p113 = scmp.eq.s32.totalorder %s33, 1
      %p114 = por %p112, %p113
      %p115 = scmp.ne.s32.totalorder %s106, %s107
      %p116 = scmp.eq.s32.totalorder %s33, 0
      %p117 = por %p115, %p116
      %p118 = scmp.ne.s32.totalorder %s106, %s107
      %p119 = scmp.eq.s32.totalorder %s34, 1
      %p120 = por %p118, %p119
      %p122 = scmp.ne.s32.totalorder %s107, %s121
      %p123 = scmp.eq.s32.totalorder %s34, 0
      %p124 = por %p122, %p123
      %s126 = sadd.s32 %s125, 1
      %p129 = scmp.eq.s32.totalorder %s28, 1
      %p130 = scmp.ne.s32.totalorder %s125, %s127
      %p131 = scmp.eq.s32.totalorder %s28, 0
      %p132 = por %p130, %p131
      %p133 = scmp.ne.s32.totalorder %s125, %s127
      %p134 = scmp.eq.s32.totalorder %s33, 1
      %p135 = por %p133, %p134
      %p136 = scmp.ne.s32.totalorder %s127, %s128
      %p137 = scmp.eq.s32.totalorder %s33, 0
      %p138 = por %p136, %p137
      %p139 = scmp.ne.s32.totalorder %s127, %s128
      %p140 = scmp.eq.s32.totalorder %s34, 1
      %p141 = por %p139, %p140
      %p143 = scmp.ne.s32.totalorder %s128, %s142
      %p144 = scmp.eq.s32.totalorder %s34, 0
      %p145 = por %p143, %p144
      %s147 = sadd.s32 %s146, 1
      %p150 = scmp.eq.s32.totalorder %s28, 1
      %p151 = scmp.ne.s32.totalorder %s146, %s148
      %p152 = scmp.eq.s32.totalorder %s28, 0
      %p153 = por %p151, %p152
      %p154 = scmp.ne.s32.totalorder %s146, %s148
      %p155 = scmp.eq.s32.totalorder %s33, 1
      %p156 = por %p154, %p155
      %p157 = scmp.ne.s32.totalorder %s148, %s149
      %p158 = scmp.eq.s32.totalorder %s33, 0
      %p159 = por %p157, %p158
      %p160 = scmp.ne.s32.totalorder %s148, %s149
      %p161 = scmp.eq.s32.totalorder %s34, 1
      %p162 = por %p160, %p161
      %p164 = scmp.ne.s32.totalorder %s149, %s163
      %p165 = scmp.eq.s32.totalorder %s34, 0
      %p166 = por %p164, %p165
      %s168 = sadd.s32 %s167, 1
      %p171 = scmp.eq.s32.totalorder %s28, 1
      %p172 = scmp.ne.s32.totalorder %s167, %s169
      %p173 = scmp.eq.s32.totalorder %s28, 0
      %p174 = por %p172, %p173
      %p175 = scmp.ne.s32.totalorder %s167, %s169
      %p176 = scmp.eq.s32.totalorder %s33, 1
      %p177 = por %p175, %p176
      %p178 = scmp.ne.s32.totalorder %s169, %s170
      %p179 = scmp.eq.s32.totalorder %s33, 0
      %p180 = por %p178, %p179
      %p181 = scmp.ne.s32.totalorder %s169, %s170
      %p182 = scmp.eq.s32.totalorder %s34, 1
      %p183 = por %p181, %p182
      %p185 = scmp.ne.s32.totalorder %s170, %s184
      %p186 = scmp.eq.s32.totalorder %s34, 0
      %p187 = por %p185, %p186
      %s189 = sadd.s32 %s188, 1
      %p192 = scmp.eq.s32.totalorder %s28, 1
      %p193 = scmp.ne.s32.totalorder %s188, %s190
      %p194 = scmp.eq.s32.totalorder %s28, 0
      %p195 = por %p193, %p194
      %p196 = scmp.ne.s32.totalorder %s188, %s190
      %p197 = scmp.eq.s32.totalorder %s33, 1
      %p198 = por %p196, %p197
      %p199 = scmp.ne.s32.totalorder %s190, %s191
      %p200 = scmp.eq.s32.totalorder %s33, 0
      %p201 = por %p199, %p200
      %p202 = scmp.ne.s32.totalorder %s190, %s191
      %p203 = scmp.eq.s32.totalorder %s34, 1
      %p204 = por %p202, %p203
      %p206 = scmp.ne.s32.totalorder %s191, %s205
      %p207 = scmp.eq.s32.totalorder %s34, 0
      %p208 = por %p206, %p207
      %s210 = sadd.s32 %s209, 1
      %p213 = scmp.eq.s32.totalorder %s28, 1
      %p214 = scmp.ne.s32.totalorder %s209, %s211
      %p215 = scmp.eq.s32.totalorder %s28, 0
      %p216 = por %p214, %p215
      %p217 = scmp.ne.s32.totalorder %s209, %s211
      %p218 = scmp.eq.s32.totalorder %s33, 1
      %p219 = por %p217, %p218
      %p220 = scmp.ne.s32.totalorder %s211, %s212
      %p221 = scmp.eq.s32.totalorder %s33, 0
      %p222 = por %p220, %p221
      %p223 = scmp.ne.s32.totalorder %s211, %s212
      %p224 = scmp.eq.s32.totalorder %s34, 1
      %p225 = por %p223, %p224
      %p227 = scmp.ne.s32.totalorder %s212, %s226
      %p228 = scmp.eq.s32.totalorder %s34, 0
      %p229 = por %p227, %p228
      %s231 = sadd.s32 %s230, 1
      %p234 = scmp.eq.s32.totalorder %s28, 1
      %p235 = scmp.ne.s32.totalorder %s230, %s232
      %p236 = scmp.eq.s32.totalorder %s28, 0
      %p237 = por %p235, %p236
      %p238 = scmp.ne.s32.totalorder %s230, %s232
      %p239 = scmp.eq.s32.totalorder %s33, 1
      %p240 = por %p238, %p239
      %p241 = scmp.ne.s32.totalorder %s232, %s233
      %p242 = scmp.eq.s32.totalorder %s33, 0
      %p243 = por %p241, %p242
      %p244 = scmp.ne.s32.totalorder %s232, %s233
      %p245 = scmp.eq.s32.totalorder %s34, 1
      %p246 = por %p244, %p245
      %p248 = scmp.ne.s32.totalorder %s233, %s247
      %p249 = scmp.eq.s32.totalorder %s34, 0
      %p250 = por %p248, %p249
      %s252 = sadd.s32 %s251, 1
      %p255 = scmp.eq.s32.totalorder %s28, 1
      %p256 = scmp.ne.s32.totalorder %s251, %s253
      %p257 = scmp.eq.s32.totalorder %s28, 0
      %p258 = por %p256, %p257
      %p259 = scmp.ne.s32.totalorder %s251, %s253
      %p260 = scmp.eq.s32.totalorder %s33, 1
      %p261 = por %p259, %p260
      %p262 = scmp.ne.s32.totalorder %s253, %s254
      %p263 = scmp.eq.s32.totalorder %s33, 0
      %p264 = por %p262, %p263
      %p265 = scmp.ne.s32.totalorder %s253, %s254
      %p266 = scmp.eq.s32.totalorder %s34, 1
      %p267 = por %p265, %p266
      %p269 = scmp.ne.s32.totalorder %s254, %s268
      %p270 = scmp.eq.s32.totalorder %s34, 0
      %p271 = por %p269, %p270
      %s273 = sadd.s32 %s272, 1
      %p276 = scmp.eq.s32.totalorder %s28, 1
      %p277 = scmp.ne.s32.totalorder %s272, %s274
      %p278 = scmp.eq.s32.totalorder %s28, 0
      %p279 = por %p277, %p278
      %p280 = scmp.ne.s32.totalorder %s272, %s274
      %p281 = scmp.eq.s32.totalorder %s33, 1
      %p282 = por %p280, %p281
      %p283 = scmp.ne.s32.totalorder %s274, %s275
      %p284 = scmp.eq.s32.totalorder %s33, 0
      %p285 = por %p283, %p284
      %p286 = scmp.ne.s32.totalorder %s274, %s275
      %p287 = scmp.eq.s32.totalorder %s34, 1
      %p288 = por %p286, %p287
      %p290 = scmp.ne.s32.totalorder %s275, %s289
      %p291 = scmp.eq.s32.totalorder %s34, 0
      %p292 = por %p290, %p291
      %s294 = sadd.s32 %s293, 1
      %p297 = scmp.eq.s32.totalorder %s28, 1
      %p298 = scmp.ne.s32.totalorder %s293, %s295
      %p299 = scmp.eq.s32.totalorder %s28, 0
      %p300 = por %p298, %p299
      %p301 = scmp.ne.s32.totalorder %s293, %s295
      %p302 = scmp.eq.s32.totalorder %s33, 1
      %p303 = por %p301, %p302
      %p304 = scmp.ne.s32.totalorder %s295, %s296
      %p305 = scmp.eq.s32.totalorder %s33, 0
      %p306 = por %p304, %p305
      %p307 = scmp.ne.s32.totalorder %s295, %s296
      %p308 = scmp.eq.s32.totalorder %s34, 1
      %p309 = por %p307, %p308
      %p311 = scmp.ne.s32.totalorder %s296, %s310
      %p312 = scmp.eq.s32.totalorder %s34, 0
      %p313 = por %p311, %p312
      %s314 = ssub.s32 %s28, %s35
      %p315 = scmp.eq.s32.totalorder %s314, 0
      %s317 = sadd.s32 %s316, 1
      %s318 = scalar_select %p315, %s316, %s317
      %p321 = pneg %p315
      %p322 = scmp.eq.s32.totalorder %s28, 1
      %p323 = por %p321, %p322
      %p324 = scmp.ne.s32.totalorder %s316, %s319
      %p325 = scmp.eq.s32.totalorder %s28, 0
      %p326 = por %p324, %p325
      %p327 = scmp.ne.s32.totalorder %s316, %s319
      %p328 = scmp.eq.s32.totalorder %s33, 1
      %p329 = por %p327, %p328
      %p330 = scmp.ne.s32.totalorder %s319, %s320
      %p331 = scmp.eq.s32.totalorder %s33, 0
      %p332 = por %p330, %p331
      %p333 = scmp.ne.s32.totalorder %s319, %s320
      %p334 = scmp.eq.s32.totalorder %s34, 1
      %p335 = por %p333, %p334
      %p337 = scmp.ne.s32.totalorder %s320, %s336
      %p338 = scmp.eq.s32.totalorder %s34, 0
      %p339 = por %p337, %p338
      %p340 = scmp.le.s32.totalorder 1, %s28
      %p341 = scmp.lt.s32.totalorder %s28, 3
      %p342 = pnand %p340, %p341
      %p343 = pneg %p342
      // Predicated region
      $region9: #{tpu_custom_call.1} parent=5 // pred_check
        _
      $region10: #{tpu_custom_call.1} parent=5 // pred_check_branch
        %345 = sbr.rel (%p342) target = $region12
      $region11: #{tpu_custom_call.1} parent=5 // pred_region
        %s346 = ssub.s32 %s28, 1
        // Predicated region
        $region13: #{tpu_custom_call.1} parent=11 // pred_check
          %p347 = pneg %p75
        $region14: #{tpu_custom_call.1} parent=11 // pred_check_branch
          %349 = sbr.rel (%p347) target = $region16
        $region15: #{tpu_custom_call.1} parent=11 // pred_region
          _
        $region16: #{tpu_custom_call.1} parent=11 // pred_fallthru
          _
        // Predicated region
        $region17: #{tpu_custom_call.1} parent=11 // pred_check
          %p350 = pneg %p96
        $region18: #{tpu_custom_call.1} parent=11 // pred_check_branch
          %352 = sbr.rel (%p350) target = $region20
        $region19: #{tpu_custom_call.1} parent=11 // pred_region
          %354 = vsyncadd [#allocation6], 0
          %s355 = sshll.u32 %s2, 4
          %s356 = int_to_ptr.hbm [resolvable:$true] %s355
          %s357 = sshll.u32 [#allocation5], 4
          %s358 = int_to_ptr.vmem [resolvable:$true] %s357
          %363 = dma.hbm_to_vmem [thread:$0]  %s356, 64, %s358, [#allocation6], 16, 16, 1
        $region20: #{tpu_custom_call.1} parent=11 // pred_fallthru
          _
        // Predicated region
        $region21: #{tpu_custom_call.1} parent=11 // pred_check
          %p364 = pneg %p117
        $region22: #{tpu_custom_call.1} parent=11 // pred_check_branch
          %366 = sbr.rel (%p364) target = $region24
        $region23: #{tpu_custom_call.1} parent=11 // pred_region
          _
        $region24: #{tpu_custom_call.1} parent=11 // pred_fallthru
          _
        // Predicated region
        $region25: #{tpu_custom_call.1} parent=11 // pred_check
          %p367 = pneg %p138
        $region26: #{tpu_custom_call.1} parent=11 // pred_check_branch
          %369 = sbr.rel (%p367) target = $region28
        $region27: #{tpu_custom_call.1} parent=11 // pred_region
          %371 = vsyncadd [#allocation6], 0
          %s372 = sshll.u32 %s4, 4
          %s373 = int_to_ptr.hbm [resolvable:$true] %s372
          %s374 = sshll.u32 [#allocation7], 4
          %s375 = int_to_ptr.vmem [resolvable:$true] %s374
          %380 = dma.hbm_to_vmem [thread:$0]  %s373, 64, %s375, [#allocation6], 16, 16, 1
        $region28: #{tpu_custom_call.1} parent=11 // pred_fallthru
          _
        // Predicated region
        $region29: #{tpu_custom_call.1} parent=11 // pred_check
          %p381 = pneg %p159
        $region30: #{tpu_custom_call.1} parent=11 // pred_check_branch
          %383 = sbr.rel (%p381) target = $region32
        $region31: #{tpu_custom_call.1} parent=11 // pred_region
          %385 = vsyncadd [#allocation9], 0
          %s386 = sshll.u32 %s5, 4
          %s387 = int_to_ptr.hbm [resolvable:$true] %s386
          %s388 = sshll.u32 [#allocation8], 4
          %s389 = int_to_ptr.vmem [resolvable:$true] %s388
          %394 = dma.hbm_to_vmem [thread:$0]  %s387, 64, %s389, [#allocation9], 16, 16, 1
        $region32: #{tpu_custom_call.1} parent=11 // pred_fallthru
          _
        // Predicated region
        $region33: #{tpu_custom_call.1} parent=11 // pred_check
          %p395 = pneg %p180
        $region34: #{tpu_custom_call.1} parent=11 // pred_check_branch
          %397 = sbr.rel (%p395) target = $region36
        $region35: #{tpu_custom_call.1} parent=11 // pred_region
          _
        $region36: #{tpu_custom_call.1} parent=11 // pred_fallthru
          _
        // Predicated region
        $region37: #{tpu_custom_call.1} parent=11 // pred_check
          %p398 = pneg %p201
        $region38: #{tpu_custom_call.1} parent=11 // pred_check_branch
          %400 = sbr.rel (%p398) target = $region40
        $region39: #{tpu_custom_call.1} parent=11 // pred_region
          _
        $region40: #{tpu_custom_call.1} parent=11 // pred_fallthru
          _
        // Predicated region
        $region41: #{tpu_custom_call.1} parent=11 // pred_check
          %p401 = pneg %p222
        $region42: #{tpu_custom_call.1} parent=11 // pred_check_branch
          %403 = sbr.rel (%p401) target = $region44
        $region43: #{tpu_custom_call.1} parent=11 // pred_region
          %405 = vsyncadd [#allocation9], 0
          %s406 = sshll.u32 %s8, 4
          %s407 = int_to_ptr.hbm [resolvable:$true] %s406
          %s408 = sshll.u32 [#allocation10], 4
          %s409 = int_to_ptr.vmem [resolvable:$true] %s408
          %414 = dma.hbm_to_vmem [thread:$0]  %s407, 64, %s409, [#allocation9], 16, 16, 1
        $region44: #{tpu_custom_call.1} parent=11 // pred_fallthru
          _
        // Predicated region
        $region45: #{tpu_custom_call.1} parent=11 // pred_check
          %p415 = pneg %p243
        $region46: #{tpu_custom_call.1} parent=11 // pred_check_branch
          %417 = sbr.rel (%p415) target = $region48
        $region47: #{tpu_custom_call.1} parent=11 // pred_region
          _
        $region48: #{tpu_custom_call.1} parent=11 // pred_fallthru
          _
        // Predicated region
        $region49: #{tpu_custom_call.1} parent=11 // pred_check
          %p418 = pneg %p264
        $region50: #{tpu_custom_call.1} parent=11 // pred_check_branch
          %420 = sbr.rel (%p418) target = $region52
        $region51: #{tpu_custom_call.1} parent=11 // pred_region
          _
        $region52: #{tpu_custom_call.1} parent=11 // pred_fallthru
          _
        // Predicated region
        $region53: #{tpu_custom_call.1} parent=11 // pred_check
          %p421 = pneg %p285
        $region54: #{tpu_custom_call.1} parent=11 // pred_check_branch
          %423 = sbr.rel (%p421) target = $region56
        $region55: #{tpu_custom_call.1} parent=11 // pred_region
          %425 = vsyncadd [#allocation12], 0
          %s426 = sshll.u32 %s11, 4
          %s427 = int_to_ptr.hbm [resolvable:$true] %s426
          %s428 = sshll.u32 [#allocation11], 4
          %s429 = int_to_ptr.vmem [resolvable:$true] %s428
          %434 = dma.hbm_to_vmem [thread:$0]  %s427, 64, %s429, [#allocation12], 16, 16, 1
        $region56: #{tpu_custom_call.1} parent=11 // pred_fallthru
          _
        // Predicated region
        $region57: #{tpu_custom_call.1} parent=11 // pred_check
          %p435 = pneg %p306
        $region58: #{tpu_custom_call.1} parent=11 // pred_check_branch
          %437 = sbr.rel (%p435) target = $region60
        $region59: #{tpu_custom_call.1} parent=11 // pred_region
          %439 = vsyncadd [#allocation12], 0
          %s440 = sshll.u32 %s12, 4
          %s441 = int_to_ptr.hbm [resolvable:$true] %s440
          %s442 = sshll.u32 [#allocation13], 4
          %s443 = int_to_ptr.vmem [resolvable:$true] %s442
          %448 = dma.hbm_to_vmem [thread:$0]  %s441, 64, %s443, [#allocation12], 16, 16, 1
        $region60: #{tpu_custom_call.1} parent=11 // pred_fallthru
          _
      $region12: #{tpu_custom_call.1} parent=5 // pred_fallthru
        _
      %p449 = scmp.lt.s32.totalorder %s28, 2
      // Predicated region
      $region61: #{tpu_custom_call.1} parent=5 // pred_check
        %p450 = pneg %p449
      $region62: #{tpu_custom_call.1} parent=5 // pred_check_branch
        %452 = sbr.rel (%p450) target = $region64
      $region63: #{tpu_custom_call.1} parent=5 // pred_region
        // Predicated region
        $region65: #{tpu_custom_call.1} parent=63 // pred_check
          %p453 = pneg %p48
        $region66: #{tpu_custom_call.1} parent=63 // pred_check_branch
          %455 = sbr.rel (%p453) target = $region68
        $region67: #{tpu_custom_call.1} parent=63 // pred_region
          %s456 = sand.u32 %s38, 1
          %s457 = scalar_lea.sflag [#allocation3], %s456
          %s458 = sand.u32 %s38, 1
          %s459 = smul.addr %s458, 8
          %s460 = scalar_lea.vmem [#allocation2], %s459
          %462 = vsyncadd %s457, 0
          %s463 = smul.addr %s28, 8
          %s464 = scalar_lea.hbm %s0, %s463
          %s466 = sshll.u32 %s464, 4
          %s467 = int_to_ptr.hbm [resolvable:$true] %s466
          %s468 = sshll.u32 %s460, 4
          %s469 = int_to_ptr.vmem [resolvable:$true] %s468
          %471 = dma.hbm_to_vmem [thread:$0]  %s467, 128, %s469, %s457
        $region68: #{tpu_custom_call.1} parent=63 // pred_fallthru
          _
      $region64: #{tpu_custom_call.1} parent=5 // pred_fallthru
        _
      %p472 = scmp.le.s32.totalorder 1, %s28
      %p473 = scmp.lt.s32.totalorder %s28, 3
      %p474 = pnand %p472, %p473
      %p475 = pneg %p474
      // Predicated region
      $region69: #{tpu_custom_call.1} parent=5 // pred_check
        _
      $region70: #{tpu_custom_call.1} parent=5 // pred_check_branch
        %477 = sbr.rel (%p474) target = $region72
      $region71: #{tpu_custom_call.1} parent=5 // pred_region
        %s478 = ssub.s32 %s28, 1
        %s479 = sand.u32 %s41, 1
        %s480 = scalar_lea.sflag [#allocation3], %s479
        %s481 = sand.u32 %s41, 1
        %s482 = smul.addr %s481, 8
        %s483 = scalar_lea.vmem [#allocation2], %s482
        // Predicated region
        $region73: #{tpu_custom_call.1} parent=71 // pred_check
          %p484 = pneg %p54
        $region74: #{tpu_custom_call.1} parent=71 // pred_check_branch
          %486 = sbr.rel (%p484) target = $region76
        $region75: #{tpu_custom_call.1} parent=71 // pred_region
          %488 = dma.done %s480, 128
        $region76: #{tpu_custom_call.1} parent=71 // pred_fallthru
          _
        // Predicated region
        $region77: #{tpu_custom_call.1} parent=71 // pred_check
          %p489 = pneg %p96
        $region78: #{tpu_custom_call.1} parent=71 // pred_check_branch
          %491 = sbr.rel (%p489) target = $region80
        $region79: #{tpu_custom_call.1} parent=71 // pred_region
          %493 = dma.done [#allocation6], 64
        $region80: #{tpu_custom_call.1} parent=71 // pred_fallthru
          _
        // Predicated region
        $region81: #{tpu_custom_call.1} parent=71 // pred_check
          %p494 = pneg %p138
        $region82: #{tpu_custom_call.1} parent=71 // pred_check_branch
          %496 = sbr.rel (%p494) target = $region84
        $region83: #{tpu_custom_call.1} parent=71 // pred_region
          %498 = dma.done [#allocation6], 64
        $region84: #{tpu_custom_call.1} parent=71 // pred_fallthru
          _
        // Predicated region
        $region85: #{tpu_custom_call.1} parent=71 // pred_check
          %p499 = pneg %p159
        $region86: #{tpu_custom_call.1} parent=71 // pred_check_branch
          %501 = sbr.rel (%p499) target = $region88
        $region87: #{tpu_custom_call.1} parent=71 // pred_region
          %503 = dma.done [#allocation9], 64
        $region88: #{tpu_custom_call.1} parent=71 // pred_fallthru
          _
        // Predicated region
        $region89: #{tpu_custom_call.1} parent=71 // pred_check
          %p504 = pneg %p222
        $region90: #{tpu_custom_call.1} parent=71 // pred_check_branch
          %506 = sbr.rel (%p504) target = $region92
        $region91: #{tpu_custom_call.1} parent=71 // pred_region
          %508 = dma.done [#allocation9], 64
        $region92: #{tpu_custom_call.1} parent=71 // pred_fallthru
          _
        // Predicated region
        $region93: #{tpu_custom_call.1} parent=71 // pred_check
          %p509 = pneg %p285
        $region94: #{tpu_custom_call.1} parent=71 // pred_check_branch
          %511 = sbr.rel (%p509) target = $region96
        $region95: #{tpu_custom_call.1} parent=71 // pred_region
          %513 = dma.done [#allocation12], 64
        $region96: #{tpu_custom_call.1} parent=71 // pred_fallthru
          _
        // Predicated region
        $region97: #{tpu_custom_call.1} parent=71 // pred_check
          %p514 = pneg %p306
        $region98: #{tpu_custom_call.1} parent=71 // pred_check_branch
          %516 = sbr.rel (%p514) target = $region100
        $region99: #{tpu_custom_call.1} parent=71 // pred_region
          %518 = dma.done [#allocation12], 64
        $region100: #{tpu_custom_call.1} parent=71 // pred_fallthru
          _
        %s519 = sand.u32 %s41, 1
        %s520 = scalar_lea.sflag [#allocation3], %s519
        %s521 = sand.u32 %s41, 1
        %s522 = smul.addr %s521, 8
        %s523 = scalar_lea.vmem [#allocation2], %s522
        %p524 = pneg %p54
        %p525 = pneg %p51
        %p526 = pneg %p75
        %p527 = pneg %p72
        %p528 = pneg %p96
        %p529 = pneg %p93
        %p530 = pneg %p117
        %p531 = pneg %p114
        %p532 = pneg %p138
        %p533 = pneg %p135
        %p534 = pneg %p159
        %p535 = pneg %p156
        %p536 = pneg %p180
        %p537 = pneg %p177
        %p538 = pneg %p201
        %p539 = pneg %p198
        %p540 = pneg %p222
        %p541 = pneg %p219
        %p542 = pneg %p243
        %p543 = pneg %p240
        %p544 = pneg %p264
        %p545 = pneg %p261
        %p546 = pneg %p285
        %p547 = pneg %p282
        %p548 = pneg %p306
        %p549 = pneg %p303
        %p550 = pneg %p332
        %p551 = pneg %p329
        %s552 = sand.u32 %s319, 1
        %s553 = scalar_lea.sflag [#allocation4], %s552
        %s554 = sand.u32 %s319, 1
        %s555 = smul.addr %s554, 8
        %s556 = scalar_lea.vmem [#allocation14], %s555
        %v558 = vld [vmem:[%s483] sm:$0xff]
        %v559 = vld [vmem:[%s1] sm:$0xf]
        %v560 = vld [vmem:[%s1 + $0x4] sm:$0xf]
        %v561 = vld [vmem:[%s1 + $0x8] sm:$0xf]
        %v562 = vld [vmem:[%s1 + $0xc] sm:$0xf]
        %v563 = vpack.c.bf16 %v558, %v558
        %v564 = vld [vmem:[#allocation5] sm:$0x1]
        %v566 = vperm.slane %v564, 0
        %v572 = vunpack.c.l.b16 %v559
        %v573 = vunpack.c.l.b16 %v560
        %v574 = vunpack.c.l.b16 %v561
        %v575 = vunpack.c.l.b16 %v562
        %v576 = vpack.c.b16 %v573, %v572
        %v577 = vpack.c.b16 %v575, %v574
        %vm580 = vcmask 261120
        %v582 = vsel %vm580, %v563, 0
        %584 = vmatpush.bf16.msra.mxu0 0
        %585 = vmatpush.bf16.msra.mxu0 0
        %586 = vmatpush.bf16.msra.mxu0 0
        %587 = vmatpush.bf16.msra.mxu0 0
        %588 = vmatpush.bf16.msra.mxu0 0
        %589 = vmatpush.bf16.msra.mxu0 0
        %590 = vmatpush.bf16.msra.mxu0 %v577
        %591 = vmatpush.bf16.msra.mxu0 %v576
        %592 = vmatmul.bf16.gmra.mxu0 %v582
        %v593 = vpop.f32.mrf.mxu0
        %v594 = vadd.f32 %v566, %v593
        %v595 = vpop.f32.mrf.mxu0
        %596 = vdwg.mxu0
        %598 = vrot.lane.b32.xlu0 %v594, 96
        %v599 = vpop.permute.xlu0 %598
        %vm600 = vcmask 130048
        %v601 = vsel %vm600, %v594, 0
        %v603 = vsel %vm600, %v599, 0
        %605 = vmatpush.xpose.msra.mxu0 0.0
        %606 = vmatpush.xpose.msra.mxu0 0.0
        %607 = vmatpush.xpose.msra.mxu0 0.0
        %608 = vmatpush.xpose.msra.mxu0 0.0
        %609 = vmatpush.xpose.msra.mxu0 0.0
        %610 = vmatpush.xpose.msra.mxu0 0.0
        %611 = vmatpush.xpose.msra.mxu0 0.0
        %612 = vmatpush.xpose.msra.mxu0 0.0
        %613 = vmatpush.xpose.msra.mxu0 0.0
        %614 = vmatpush.xpose.msra.mxu0 0.0
        %615 = vmatpush.xpose.msra.mxu0 0.0
        %616 = vmatpush.xpose.msra.mxu0 0.0
        %617 = vmatpush.xpose.msra.mxu0 0.0
        %618 = vmatpush.xpose.msra.mxu0 0.0
        %619 = vmatpush.xpose.msra.mxu0 0.0
        %620 = vmatpush.xpose.msra.mxu0 %v603
        %621 = vmatmul.f32.gmra.mxu0 %v601
        %v622 = vpop.f32.mrf.mxu0
        %v623 = vadd.f32 0.0, %v622
        %624 = vdwg.mxu0
        %vm625 = vcmask 64512
        %v626 = vsel %vm625, %v623, -inf
        %627 = vmax.xlane.f32.xlu0 %v626
        %v628 = vpop.xlane.xlu0 %627
        %v629 = vsub.f32 %v623, %v628
        %v630 = vmul.f32 %v629, 1.442695
        %v631 = vpow.pop %v630
        %v632 = vsel %vm625, %v631, 0.0
        %633 = vadd.xlane.f32.xlu0 %v632
        %v634 = vpop.xlane.xlu0 %633
        %v635 = vrcp.pop %v634
        %v636 = vmul.f32 %v631, %v635
        %637 = vrot.lane.b32.xlu0 %v594, 64
        %v638 = vpop.permute.xlu0 %637
        %v641 = vsel %vm625, %v636, 0
        %643 = vmatpush.msra.mxu0 0.0
        %644 = vmatpush.msra.mxu0 0.0
        %645 = vmatpush.msra.mxu0 0.0
        %646 = vmatpush.msra.mxu0 0.0
        %647 = vmatpush.msra.mxu0 0.0
        %648 = vmatpush.msra.mxu0 0.0
        %649 = vmatpush.msra.mxu0 0.0
        %650 = vmatpush.msra.mxu0 0.0
        %651 = vmatpush.msra.mxu0 0.0
        %652 = vmatpush.msra.mxu0 0.0
        %653 = vmatpush.msra.mxu0 0.0
        %654 = vmatpush.msra.mxu0 0.0
        %655 = vmatpush.msra.mxu0 0.0
        %656 = vmatpush.msra.mxu0 0.0
        %657 = vmatpush.msra.mxu0 0.0
        %658 = vmatpush.msra.mxu0 %v638
        %659 = vmatmul.f32.gmra.mxu0 %v641
        %v660 = vpop.f32.mrf.mxu0
        %v661 = vadd.f32 0.0, %v660
        %662 = vdwg.mxu0
        %663 = vrot.lane.b32.xlu0 %v594, 112
        %v664 = vpop.permute.xlu0 %663
        %665 = vrot.lane.b32.xlu0 %v594, 80
        %v666 = vpop.permute.xlu0 %665
        %v667 = vsel %vm600, %v664, 0
        %v669 = vsel %vm600, %v666, 0
        %671 = vmatpush.xpose.msra.mxu0 0.0
        %672 = vmatpush.xpose.msra.mxu0 0.0
        %673 = vmatpush.xpose.msra.mxu0 0.0
        %674 = vmatpush.xpose.msra.mxu0 0.0
        %675 = vmatpush.xpose.msra.mxu0 0.0
        %676 = vmatpush.xpose.msra.mxu0 0.0
        %677 = vmatpush.xpose.msra.mxu0 0.0
        %678 = vmatpush.xpose.msra.mxu0 0.0
        %679 = vmatpush.xpose.msra.mxu0 0.0
        %680 = vmatpush.xpose.msra.mxu0 0.0
        %681 = vmatpush.xpose.msra.mxu0 0.0
        %682 = vmatpush.xpose.msra.mxu0 0.0
        %683 = vmatpush.xpose.msra.mxu0 0.0
        %684 = vmatpush.xpose.msra.mxu0 0.0
        %685 = vmatpush.xpose.msra.mxu0 0.0
        %686 = vmatpush.xpose.msra.mxu0 %v669
        %687 = vmatmul.f32.gmra.mxu0 %v667
        %v688 = vpop.f32.mrf.mxu0
        %v689 = vadd.f32 0.0, %v688
        %690 = vdwg.mxu0
        %v691 = vsel %vm625, %v689, -inf
        %692 = vmax.xlane.f32.xlu0 %v691
        %v693 = vpop.xlane.xlu0 %692
        %v694 = vsub.f32 %v689, %v693
        %v695 = vmul.f32 %v694, 1.442695
        %v696 = vpow.pop %v695
        %v697 = vsel %vm625, %v696, 0.0
        %698 = vadd.xlane.f32.xlu0 %v697
        %v699 = vpop.xlane.xlu0 %698
        %v700 = vrcp.pop %v699
        %v701 = vmul.f32 %v696, %v700
        %702 = vrot.lane.b32.xlu0 %v594, 48
        %v703 = vpop.permute.xlu0 %702
        %v706 = vsel %vm625, %v701, 0
        %708 = vmatpush.msra.mxu0 0.0
        %709 = vmatpush.msra.mxu0 0.0
        %710 = vmatpush.msra.mxu0 0.0
        %711 = vmatpush.msra.mxu0 0.0
        %712 = vmatpush.msra.mxu0 0.0
        %713 = vmatpush.msra.mxu0 0.0
        %714 = vmatpush.msra.mxu0 0.0
        %715 = vmatpush.msra.mxu0 0.0
        %716 = vmatpush.msra.mxu0 0.0
        %717 = vmatpush.msra.mxu0 0.0
        %718 = vmatpush.msra.mxu0 0.0
        %719 = vmatpush.msra.mxu0 0.0
        %720 = vmatpush.msra.mxu0 0.0
        %721 = vmatpush.msra.mxu0 0.0
        %722 = vmatpush.msra.mxu0 0.0
        %723 = vmatpush.msra.mxu0 %v703
        %724 = vmatmul.f32.gmra.mxu0 %v706
        %v725 = vpop.f32.mrf.mxu0
        %v726 = vadd.f32 0.0, %v725
        %727 = vdwg.mxu0
        %729 = vrot.lane.b32.xlu0 %v726, 16
        %v730 = vpop.permute.xlu0 %729
        %v732 = vsel %vm600, %v661, %v730
        %v733 = vld [vmem:[%s3] sm:$0xf]
        %v734 = vld [vmem:[%s3 + $0x4] sm:$0xf]
        %v735 = vld [vmem:[%s3 + $0x8] sm:$0xf]
        %v736 = vld [vmem:[%s3 + $0xc] sm:$0xf]
        %v737 = vpack.c.bf16 %v732, %v732
        %v738 = vld [vmem:[#allocation7] sm:$0x1]
        %v740 = vperm.slane %v738, 0
        %v746 = vunpack.c.l.b16 %v733
        %v747 = vunpack.c.l.b16 %v734
        %v748 = vunpack.c.l.b16 %v735
        %v749 = vunpack.c.l.b16 %v736
        %v750 = vpack.c.b16 %v747, %v746
        %v751 = vpack.c.b16 %v749, %v748
        %v755 = vsel %vm580, %v737, 0
        %757 = vmatpush.bf16.msra.mxu0 0
        %758 = vmatpush.bf16.msra.mxu0 0
        %759 = vmatpush.bf16.msra.mxu0 0
        %760 = vmatpush.bf16.msra.mxu0 0
        %761 = vmatpush.bf16.msra.mxu0 0
        %762 = vmatpush.bf16.msra.mxu0 0
        %763 = vmatpush.bf16.msra.mxu0 %v751
        %764 = vmatpush.bf16.msra.mxu0 %v750
        %765 = vmatmul.bf16.gmra.mxu0 %v755
        %v766 = vpop.f32.mrf.mxu0
        %v767 = vadd.f32 %v740, %v766
        %v768 = vpop.f32.mrf.mxu0
        %769 = vdwg.mxu0
        %v770 = vadd.f32 %v558, %v767
        %v771 = vsel %vm580, %v770, 0.0
        %772 = vadd.xlane.f32.xlu0 %v771
        %v773 = vpop.xlane.xlu0 %772
        %v774 = vrcp.pop 32.0
        %v775 = vmul.f32 32.0, %v774
        %v776 = vsub.f32 1.0, %v775
        %v777 = vmul.f32 %v774, %v776
        %v778 = vadd.f32 %v774, %v777
        %vm779 = vweird.f32 %v774
        %v780 = vsel %vm779, %v774, %v778
        %v781 = vmul.f32 %v773, %v780
        %v782 = vsub.f32 %v770, %v781
        %v783 = vmul.f32 %v782, %v782
        %v784 = vsel %vm580, %v783, 0.0
        %785 = vadd.xlane.f32.xlu0 %v784
        %v786 = vpop.xlane.xlu0 %785
        %v787 = vmul.f32 %v786, %v780
        %v788 = vadd.f32 %v787, 1e-05
        %v789 = vrsqrt.pop %v788
        %v790 = vmul.f32 %v789, %v788
        %v791 = vmul.f32 %v790, %v789
        %v792 = vmul.f32 0.5, %v791
        %v793 = vsub.f32 1.5, %v792
        %v794 = vmul.f32 %v789, %v793
        %vm795 = vweird.f32 %v788
        %vm796 = vweird.f32 %v789
        %vm797 = vmor %vm795, %vm796
        %v798 = vsel %vm797, %v789, %v794
        %v799 = vmul.f32 %v782, %v798
        %v800 = vld [vmem:[#allocation8] sm:$0x1]
        %v802 = vperm.slane %v800, 0
        %v804 = vmul.f32 %v799, %v802
        %v805 = vld [vmem:[%s6] sm:$0x1]
        %v807 = vperm.slane %v805, 0
        %v809 = vadd.f32 %v804, %v807
        %v810 = vld [vmem:[%s7] sm:$0xf]
        %v811 = vld [vmem:[%s7 + $0x4] sm:$0xf]
        %v812 = vld [vmem:[%s7 + $0x8] sm:$0xf]
        %v813 = vld [vmem:[%s7 + $0xc] sm:$0xf]
        %v814 = vpack.c.bf16 %v809, %v809
        %v815 = vld [vmem:[#allocation10] sm:$0x1]
        %v817 = vperm.slane %v815, 0
        %v823 = vunpack.c.l.b16 %v810
        %v824 = vunpack.c.l.b16 %v811
        %v825 = vunpack.c.l.b16 %v812
        %v826 = vunpack.c.l.b16 %v813
        %v827 = vpack.c.b16 %v824, %v823
        %v828 = vpack.c.b16 %v826, %v825
        %v832 = vsel %vm580, %v814, 0
        %834 = vmatpush.bf16.msra.mxu0 0
        %835 = vmatpush.bf16.msra.mxu0 0
        %836 = vmatpush.bf16.msra.mxu0 0
        %837 = vmatpush.bf16.msra.mxu0 0
        %838 = vmatpush.bf16.msra.mxu0 0
        %839 = vmatpush.bf16.msra.mxu0 0
        %840 = vmatpush.bf16.msra.mxu0 %v828
        %841 = vmatpush.bf16.msra.mxu0 %v827
        %842 = vmatmul.bf16.gmra.mxu0 %v832
        %v843 = vpop.f32.mrf.mxu0
        %v844 = vadd.f32 %v817, %v843
        %v845 = vpop.f32.mrf.mxu0
        %846 = vdwg.mxu0
        %v847 = vmax.f32 %v844, 0.0
        %v848 = vld [vmem:[%s9] sm:$0xf]
        %v849 = vld [vmem:[%s9 + $0x4] sm:$0xf]
        %v850 = vld [vmem:[%s9 + $0x8] sm:$0xf]
        %v851 = vld [vmem:[%s9 + $0xc] sm:$0xf]
        %v852 = vld [vmem:[%s9 + $0x10] sm:$0xf]
        %v853 = vld [vmem:[%s9 + $0x14] sm:$0xf]
        %v854 = vld [vmem:[%s9 + $0x18] sm:$0xf]
        %v855 = vld [vmem:[%s9 + $0x1c] sm:$0xf]
        %v856 = vpack.c.bf16 %v847, %v847
        %v857 = vld [vmem:[%s10] sm:$0x1]
        %v859 = vperm.slane %v857, 0
        %v869 = vunpack.c.l.b16 %v848
        %v870 = vunpack.c.l.b16 %v849
        %v871 = vunpack.c.l.b16 %v850
        %v872 = vunpack.c.l.b16 %v851
        %v873 = vunpack.c.l.b16 %v852
        %v874 = vunpack.c.l.b16 %v853
        %v875 = vunpack.c.l.b16 %v854
        %v876 = vunpack.c.l.b16 %v855
        %v877 = vpack.c.b16 %v870, %v869
        %v878 = vpack.c.b16 %v872, %v871
        %v879 = vpack.c.b16 %v874, %v873
        %v880 = vpack.c.b16 %v876, %v875
        %vm885 = vcmask 523264
        %v887 = vsel %vm885, %v856, 0
        %889 = vmatpush.bf16.msra.mxu0 0
        %890 = vmatpush.bf16.msra.mxu0 0
        %891 = vmatpush.bf16.msra.mxu0 0
        %892 = vmatpush.bf16.msra.mxu0 0
        %893 = vmatpush.bf16.msra.mxu0 %v880
        %894 = vmatpush.bf16.msra.mxu0 %v879
        %895 = vmatpush.bf16.msra.mxu0 %v878
        %896 = vmatpush.bf16.msra.mxu0 %v877
        %897 = vmatmul.bf16.gmra.mxu0 %v887
        %v898 = vpop.f32.mrf.mxu0
        %v899 = vadd.f32 %v859, %v898
        %v900 = vpop.f32.mrf.mxu0
        %901 = vdwg.mxu0
        %v902 = vadd.f32 %v809, %v899
        %v903 = vsel %vm580, %v902, 0.0
        %904 = vadd.xlane.f32.xlu0 %v903
        %v905 = vpop.xlane.xlu0 %904
        %v906 = vmul.f32 %v905, %v780
        %v907 = vsub.f32 %v902, %v906
        %v908 = vmul.f32 %v907, %v907
        %v909 = vsel %vm580, %v908, 0.0
        %910 = vadd.xlane.f32.xlu0 %v909
        %v911 = vpop.xlane.xlu0 %910
        %v912 = vmul.f32 %v911, %v780
        %v913 = vadd.f32 %v912, 1e-05
        %v914 = vrsqrt.pop %v913
        %v915 = vmul.f32 %v914, %v913
        %v916 = vmul.f32 %v915, %v914
        %v917 = vmul.f32 0.5, %v916
        %v918 = vsub.f32 1.5, %v917
        %v919 = vmul.f32 %v914, %v918
        %vm920 = vweird.f32 %v913
        %vm921 = vweird.f32 %v914
        %vm922 = vmor %vm920, %vm921
        %v923 = vsel %vm922, %v914, %v919
        %v924 = vmul.f32 %v907, %v923
        %v925 = vld [vmem:[#allocation11] sm:$0x1]
        %v927 = vperm.slane %v925, 0
        %v929 = vmul.f32 %v924, %v927
        %v930 = vld [vmem:[#allocation13] sm:$0x1]
        %v932 = vperm.slane %v930, 0
        %v934 = vadd.f32 %v929, %v932
        %s935 = scalar_lea.vmem %s1, 16
        %v936 = vld [vmem:[%s935] sm:$0xf]
        %v937 = vld [vmem:[%s935 + $0x4] sm:$0xf]
        %v938 = vld [vmem:[%s935 + $0x8] sm:$0xf]
        %v939 = vld [vmem:[%s935 + $0xc] sm:$0xf]
        %v940 = vpack.c.bf16 %v934, %v934
        %s941 = scalar_lea.vmem [#allocation5], 1
        %v942 = vld [vmem:[%s941] sm:$0x1]
        %v944 = vperm.slane %v942, 0
        %v950 = vunpack.c.l.b16 %v936
        %v951 = vunpack.c.l.b16 %v937
        %v952 = vunpack.c.l.b16 %v938
        %v953 = vunpack.c.l.b16 %v939
        %v954 = vpack.c.b16 %v951, %v950
        %v955 = vpack.c.b16 %v953, %v952
        %v959 = vsel %vm580, %v940, 0
        %961 = vmatpush.bf16.msra.mxu0 0
        %962 = vmatpush.bf16.msra.mxu0 0
        %963 = vmatpush.bf16.msra.mxu0 0
        %964 = vmatpush.bf16.msra.mxu0 0
        %965 = vmatpush.bf16.msra.mxu0 0
        %966 = vmatpush.bf16.msra.mxu0 0
        %967 = vmatpush.bf16.msra.mxu0 %v955
        %968 = vmatpush.bf16.msra.mxu0 %v954
        %969 = vmatmul.bf16.gmra.mxu0 %v959
        %v970 = vpop.f32.mrf.mxu0
        %v971 = vadd.f32 %v944, %v970
        %v972 = vpop.f32.mrf.mxu0
        %973 = vdwg.mxu0
        %975 = vrot.lane.b32.xlu0 %v971, 96
        %v976 = vpop.permute.xlu0 %975
        %v977 = vsel %vm600, %v971, 0
        %v979 = vsel %vm600, %v976, 0
        %981 = vmatpush.xpose.msra.mxu0 0.0
        %982 = vmatpush.xpose.msra.mxu0 0.0
        %983 = vmatpush.xpose.msra.mxu0 0.0
        %984 = vmatpush.xpose.msra.mxu0 0.0
        %985 = vmatpush.xpose.msra.mxu0 0.0
        %986 = vmatpush.xpose.msra.mxu0 0.0
        %987 = vmatpush.xpose.msra.mxu0 0.0
        %988 = vmatpush.xpose.msra.mxu0 0.0
        %989 = vmatpush.xpose.msra.mxu0 0.0
        %990 = vmatpush.xpose.msra.mxu0 0.0
        %991 = vmatpush.xpose.msra.mxu0 0.0
        %992 = vmatpush.xpose.msra.mxu0 0.0
        %993 = vmatpush.xpose.msra.mxu0 0.0
        %994 = vmatpush.xpose.msra.mxu0 0.0
        %995 = vmatpush.xpose.msra.mxu0 0.0
        %996 = vmatpush.xpose.msra.mxu0 %v979
        %997 = vmatmul.f32.gmra.mxu0 %v977
        %v998 = vpop.f32.mrf.mxu0
        %v999 = vadd.f32 0.0, %v998
        %1000 = vdwg.mxu0
        %v1001 = vsel %vm625, %v999, -inf
        %1002 = vmax.xlane.f32.xlu0 %v1001
        %v1003 = vpop.xlane.xlu0 %1002
        %v1004 = vsub.f32 %v999, %v1003
        %v1005 = vmul.f32 %v1004, 1.442695
        %v1006 = vpow.pop %v1005
        %v1007 = vsel %vm625, %v1006, 0.0
        %1008 = vadd.xlane.f32.xlu0 %v1007
        %v1009 = vpop.xlane.xlu0 %1008
        %v1010 = vrcp.pop %v1009
        %v1011 = vmul.f32 %v1006, %v1010
        %1012 = vrot.lane.b32.xlu0 %v971, 64
        %v1013 = vpop.permute.xlu0 %1012
        %v1016 = vsel %vm625, %v1011, 0
        %1018 = vmatpush.msra.mxu0 0.0
        %1019 = vmatpush.msra.mxu0 0.0
        %1020 = vmatpush.msra.mxu0 0.0
        %1021 = vmatpush.msra.mxu0 0.0
        %1022 = vmatpush.msra.mxu0 0.0
        %1023 = vmatpush.msra.mxu0 0.0
        %1024 = vmatpush.msra.mxu0 0.0
        %1025 = vmatpush.msra.mxu0 0.0
        %1026 = vmatpush.msra.mxu0 0.0
        %1027 = vmatpush.msra.mxu0 0.0
        %1028 = vmatpush.msra.mxu0 0.0
        %1029 = vmatpush.msra.mxu0 0.0
        %1030 = vmatpush.msra.mxu0 0.0
        %1031 = vmatpush.msra.mxu0 0.0
        %1032 = vmatpush.msra.mxu0 0.0
        %1033 = vmatpush.msra.mxu0 %v1013
        %1034 = vmatmul.f32.gmra.mxu0 %v1016
        %v1035 = vpop.f32.mrf.mxu0
        %v1036 = vadd.f32 0.0, %v1035
        %1037 = vdwg.mxu0
        %1038 = vrot.lane.b32.xlu0 %v971, 112
        %v1039 = vpop.permute.xlu0 %1038
        %1040 = vrot.lane.b32.xlu0 %v971, 80
        %v1041 = vpop.permute.xlu0 %1040
        %v1042 = vsel %vm600, %v1039, 0
        %v1044 = vsel %vm600, %v1041, 0
        %1046 = vmatpush.xpose.msra.mxu0 0.0
        %1047 = vmatpush.xpose.msra.mxu0 0.0
        %1048 = vmatpush.xpose.msra.mxu0 0.0
        %1049 = vmatpush.xpose.msra.mxu0 0.0
        %1050 = vmatpush.xpose.msra.mxu0 0.0
        %1051 = vmatpush.xpose.msra.mxu0 0.0
        %1052 = vmatpush.xpose.msra.mxu0 0.0
        %1053 = vmatpush.xpose.msra.mxu0 0.0
        %1054 = vmatpush.xpose.msra.mxu0 0.0
        %1055 = vmatpush.xpose.msra.mxu0 0.0
        %1056 = vmatpush.xpose.msra.mxu0 0.0
        %1057 = vmatpush.xpose.msra.mxu0 0.0
        %1058 = vmatpush.xpose.msra.mxu0 0.0
        %1059 = vmatpush.xpose.msra.mxu0 0.0
        %1060 = vmatpush.xpose.msra.mxu0 0.0
        %1061 = vmatpush.xpose.msra.mxu0 %v1044
        %1062 = vmatmul.f32.gmra.mxu0 %v1042
        %v1063 = vpop.f32.mrf.mxu0
        %v1064 = vadd.f32 0.0, %v1063
        %1065 = vdwg.mxu0
        %v1066 = vsel %vm625, %v1064, -inf
        %1067 = vmax.xlane.f32.xlu0 %v1066
        %v1068 = vpop.xlane.xlu0 %1067
        %v1069 = vsub.f32 %v1064, %v1068
        %v1070 = vmul.f32 %v1069, 1.442695
        %v1071 = vpow.pop %v1070
        %v1072 = vsel %vm625, %v1071, 0.0
        %1073 = vadd.xlane.f32.xlu0 %v1072
        %v1074 = vpop.xlane.xlu0 %1073
        %v1075 = vrcp.pop %v1074
        %v1076 = vmul.f32 %v1071, %v1075
        %1077 = vrot.lane.b32.xlu0 %v971, 48
        %v1078 = vpop.permute.xlu0 %1077
        %v1081 = vsel %vm625, %v1076, 0
        %1083 = vmatpush.msra.mxu0 0.0
        %1084 = vmatpush.msra.mxu0 0.0
        %1085 = vmatpush.msra.mxu0 0.0
        %1086 = vmatpush.msra.mxu0 0.0
        %1087 = vmatpush.msra.mxu0 0.0
        %1088 = vmatpush.msra.mxu0 0.0
        %1089 = vmatpush.msra.mxu0 0.0
        %1090 = vmatpush.msra.mxu0 0.0
        %1091 = vmatpush.msra.mxu0 0.0
        %1092 = vmatpush.msra.mxu0 0.0
        %1093 = vmatpush.msra.mxu0 0.0
        %1094 = vmatpush.msra.mxu0 0.0
        %1095 = vmatpush.msra.mxu0 0.0
        %1096 = vmatpush.msra.mxu0 0.0
        %1097 = vmatpush.msra.mxu0 0.0
        %1098 = vmatpush.msra.mxu0 %v1078
        %1099 = vmatmul.f32.gmra.mxu0 %v1081
        %v1100 = vpop.f32.mrf.mxu0
        %v1101 = vadd.f32 0.0, %v1100
        %1102 = vdwg.mxu0
        %1104 = vrot.lane.b32.xlu0 %v1101, 16
        %v1105 = vpop.permute.xlu0 %1104
        %v1107 = vsel %vm600, %v1036, %v1105
        %s1108 = scalar_lea.vmem %s3, 16
        %v1109 = vld [vmem:[%s1108] sm:$0xf]
        %v1110 = vld [vmem:[%s1108 + $0x4] sm:$0xf]
        %v1111 = vld [vmem:[%s1108 + $0x8] sm:$0xf]
        %v1112 = vld [vmem:[%s1108 + $0xc] sm:$0xf]
        %v1113 = vpack.c.bf16 %v1107, %v1107
        %s1114 = scalar_lea.vmem [#allocation7], 1
        %v1115 = vld [vmem:[%s1114] sm:$0x1]
        %v1117 = vperm.slane %v1115, 0
        %v1123 = vunpack.c.l.b16 %v1109
        %v1124 = vunpack.c.l.b16 %v1110
        %v1125 = vunpack.c.l.b16 %v1111
        %v1126 = vunpack.c.l.b16 %v1112
        %v1127 = vpack.c.b16 %v1124, %v1123
        %v1128 = vpack.c.b16 %v1126, %v1125
        %v1132 = vsel %vm580, %v1113, 0
        %1134 = vmatpush.bf16.msra.mxu0 0
        %1135 = vmatpush.bf16.msra.mxu0 0
        %1136 = vmatpush.bf16.msra.mxu0 0
        %1137 = vmatpush.bf16.msra.mxu0 0
        %1138 = vmatpush.bf16.msra.mxu0 0
        %1139 = vmatpush.bf16.msra.mxu0 0
        %1140 = vmatpush.bf16.msra.mxu0 %v1128
        %1141 = vmatpush.bf16.msra.mxu0 %v1127
        %1142 = vmatmul.bf16.gmra.mxu0 %v1132
        %v1143 = vpop.f32.mrf.mxu0
        %v1144 = vadd.f32 %v1117, %v1143
        %v1145 = vpop.f32.mrf.mxu0
        %1146 = vdwg.mxu0
        %v1147 = vadd.f32 %v934, %v1144
        %v1148 = vsel %vm580, %v1147, 0.0
        %1149 = vadd.xlane.f32.xlu0 %v1148
        %v1150 = vpop.xlane.xlu0 %1149
        %v1151 = vmul.f32 %v1150, %v780
        %v1152 = vsub.f32 %v1147, %v1151
        %v1153 = vmul.f32 %v1152, %v1152
        %v1154 = vsel %vm580, %v1153, 0.0
        %1155 = vadd.xlane.f32.xlu0 %v1154
        %v1156 = vpop.xlane.xlu0 %1155
        %v1157 = vmul.f32 %v1156, %v780
        %v1158 = vadd.f32 %v1157, 1e-05
        %v1159 = vrsqrt.pop %v1158
        %v1160 = vmul.f32 %v1159, %v1158
        %v1161 = vmul.f32 %v1160, %v1159
        %v1162 = vmul.f32 0.5, %v1161
        %v1163 = vsub.f32 1.5, %v1162
        %v1164 = vmul.f32 %v1159, %v1163
        %vm1165 = vweird.f32 %v1158
        %vm1166 = vweird.f32 %v1159
        %vm1167 = vmor %vm1165, %vm1166
        %v1168 = vsel %vm1167, %v1159, %v1164
        %v1169 = vmul.f32 %v1152, %v1168
        %s1170 = scalar_lea.vmem [#allocation8], 1
        %v1171 = vld [vmem:[%s1170] sm:$0x1]
        %v1173 = vperm.slane %v1171, 0
        %v1175 = vmul.f32 %v1169, %v1173
        %s1176 = scalar_lea.vmem %s6, 1
        %v1177 = vld [vmem:[%s1176] sm:$0x1]
        %v1179 = vperm.slane %v1177, 0
        %v1181 = vadd.f32 %v1175, %v1179
        %s1182 = scalar_lea.vmem %s7, 16
        %v1183 = vld [vmem:[%s1182] sm:$0xf]
        %v1184 = vld [vmem:[%s1182 + $0x4] sm:$0xf]
        %v1185 = vld [vmem:[%s1182 + $0x8] sm:$0xf]
        %v1186 = vld [vmem:[%s1182 + $0xc] sm:$0xf]
        %v1187 = vpack.c.bf16 %v1181, %v1181
        %s1188 = scalar_lea.vmem [#allocation10], 1
        %v1189 = vld [vmem:[%s1188] sm:$0x1]
        %v1191 = vperm.slane %v1189, 0
        %v1197 = vunpack.c.l.b16 %v1183
        %v1198 = vunpack.c.l.b16 %v1184
        %v1199 = vunpack.c.l.b16 %v1185
        %v1200 = vunpack.c.l.b16 %v1186
        %v1201 = vpack.c.b16 %v1198, %v1197
        %v1202 = vpack.c.b16 %v1200, %v1199
        %v1206 = vsel %vm580, %v1187, 0
        %1208 = vmatpush.bf16.msra.mxu0 0
        %1209 = vmatpush.bf16.msra.mxu0 0
        %1210 = vmatpush.bf16.msra.mxu0 0
        %1211 = vmatpush.bf16.msra.mxu0 0
        %1212 = vmatpush.bf16.msra.mxu0 0
        %1213 = vmatpush.bf16.msra.mxu0 0
        %1214 = vmatpush.bf16.msra.mxu0 %v1202
        %1215 = vmatpush.bf16.msra.mxu0 %v1201
        %1216 = vmatmul.bf16.gmra.mxu0 %v1206
        %v1217 = vpop.f32.mrf.mxu0
        %v1218 = vadd.f32 %v1191, %v1217
        %v1219 = vpop.f32.mrf.mxu0
        %1220 = vdwg.mxu0
        %v1221 = vmax.f32 %v1218, 0.0
        %s1222 = scalar_lea.vmem %s9, 32
        %v1223 = vld [vmem:[%s1222] sm:$0xf]
        %v1224 = vld [vmem:[%s1222 + $0x4] sm:$0xf]
        %v1225 = vld [vmem:[%s1222 + $0x8] sm:$0xf]
        %v1226 = vld [vmem:[%s1222 + $0xc] sm:$0xf]
        %v1227 = vld [vmem:[%s1222 + $0x10] sm:$0xf]
        %v1228 = vld [vmem:[%s1222 + $0x14] sm:$0xf]
        %v1229 = vld [vmem:[%s1222 + $0x18] sm:$0xf]
        %v1230 = vld [vmem:[%s1222 + $0x1c] sm:$0xf]
        %v1231 = vpack.c.bf16 %v1221, %v1221
        %s1232 = scalar_lea.vmem %s10, 1
        %v1233 = vld [vmem:[%s1232] sm:$0x1]
        %v1235 = vperm.slane %v1233, 0
        %v1245 = vunpack.c.l.b16 %v1223
        %v1246 = vunpack.c.l.b16 %v1224
        %v1247 = vunpack.c.l.b16 %v1225
        %v1248 = vunpack.c.l.b16 %v1226
        %v1249 = vunpack.c.l.b16 %v1227
        %v1250 = vunpack.c.l.b16 %v1228
        %v1251 = vunpack.c.l.b16 %v1229
        %v1252 = vunpack.c.l.b16 %v1230
        %v1253 = vpack.c.b16 %v1246, %v1245
        %v1254 = vpack.c.b16 %v1248, %v1247
        %v1255 = vpack.c.b16 %v1250, %v1249
        %v1256 = vpack.c.b16 %v1252, %v1251
        %v1262 = vsel %vm885, %v1231, 0
        %1264 = vmatpush.bf16.msra.mxu0 0
        %1265 = vmatpush.bf16.msra.mxu0 0
        %1266 = vmatpush.bf16.msra.mxu0 0
        %1267 = vmatpush.bf16.msra.mxu0 0
        %1268 = vmatpush.bf16.msra.mxu0 %v1256
        %1269 = vmatpush.bf16.msra.mxu0 %v1255
        %1270 = vmatpush.bf16.msra.mxu0 %v1254
        %1271 = vmatpush.bf16.msra.mxu0 %v1253
        %1272 = vmatmul.bf16.gmra.mxu0 %v1262
        %v1273 = vpop.f32.mrf.mxu0
        %v1274 = vadd.f32 %v1235, %v1273
        %v1275 = vpop.f32.mrf.mxu0
        %1276 = vdwg.mxu0
        %v1277 = vadd.f32 %v1181, %v1274
        %v1278 = vsel %vm580, %v1277, 0.0
        %1279 = vadd.xlane.f32.xlu0 %v1278
        %v1280 = vpop.xlane.xlu0 %1279
        %v1281 = vmul.f32 %v1280, %v780
        %v1282 = vsub.f32 %v1277, %v1281
        %v1283 = vmul.f32 %v1282, %v1282
        %v1284 = vsel %vm580, %v1283, 0.0
        %1285 = vadd.xlane.f32.xlu0 %v1284
        %v1286 = vpop.xlane.xlu0 %1285
        %v1287 = vmul.f32 %v1286, %v780
        %v1288 = vadd.f32 %v1287, 1e-05
        %v1289 = vrsqrt.pop %v1288
        %v1290 = vmul.f32 %v1289, %v1288
        %v1291 = vmul.f32 %v1290, %v1289
        %v1292 = vmul.f32 0.5, %v1291
        %v1293 = vsub.f32 1.5, %v1292
        %v1294 = vmul.f32 %v1289, %v1293
        %vm1295 = vweird.f32 %v1288
        %vm1296 = vweird.f32 %v1289
        %vm1297 = vmor %vm1295, %vm1296
        %v1298 = vsel %vm1297, %v1289, %v1294
        %v1299 = vmul.f32 %v1282, %v1298
        %s1300 = scalar_lea.vmem [#allocation11], 1
        %v1301 = vld [vmem:[%s1300] sm:$0x1]
        %v1303 = vperm.slane %v1301, 0
        %v1305 = vmul.f32 %v1299, %v1303
        %s1306 = scalar_lea.vmem [#allocation13], 1
        %v1307 = vld [vmem:[%s1306] sm:$0x1]
        %v1309 = vperm.slane %v1307, 0
        %v1311 = vadd.f32 %v1305, %v1309
        %s1312 = scalar_lea.vmem %s1, 32
        %v1313 = vld [vmem:[%s1312] sm:$0xf]
        %v1314 = vld [vmem:[%s1312 + $0x4] sm:$0xf]
        %v1315 = vld [vmem:[%s1312 + $0x8] sm:$0xf]
        %v1316 = vld [vmem:[%s1312 + $0xc] sm:$0xf]
        %v1317 = vpack.c.bf16 %v1311, %v1311
        %s1318 = scalar_lea.vmem [#allocation5], 2
        %v1319 = vld [vmem:[%s1318] sm:$0x1]
        %v1321 = vperm.slane %v1319, 0
        %v1327 = vunpack.c.l.b16 %v1313
        %v1328 = vunpack.c.l.b16 %v1314
        %v1329 = vunpack.c.l.b16 %v1315
        %v1330 = vunpack.c.l.b16 %v1316
        %v1331 = vpack.c.b16 %v1328, %v1327
        %v1332 = vpack.c.b16 %v1330, %v1329
        %v1336 = vsel %vm580, %v1317, 0
        %1338 = vmatpush.bf16.msra.mxu0 0
        %1339 = vmatpush.bf16.msra.mxu0 0
        %1340 = vmatpush.bf16.msra.mxu0 0
        %1341 = vmatpush.bf16.msra.mxu0 0
        %1342 = vmatpush.bf16.msra.mxu0 0
        %1343 = vmatpush.bf16.msra.mxu0 0
        %1344 = vmatpush.bf16.msra.mxu0 %v1332
        %1345 = vmatpush.bf16.msra.mxu0 %v1331
        %1346 = vmatmul.bf16.gmra.mxu0 %v1336
        %v1347 = vpop.f32.mrf.mxu0
        %v1348 = vadd.f32 %v1321, %v1347
        %v1349 = vpop.f32.mrf.mxu0
        %1350 = vdwg.mxu0
        %1352 = vrot.lane.b32.xlu0 %v1348, 96
        %v1353 = vpop.permute.xlu0 %1352
        %v1354 = vsel %vm600, %v1348, 0
        %v1356 = vsel %vm600, %v1353, 0
        %1358 = vmatpush.xpose.msra.mxu0 0.0
        %1359 = vmatpush.xpose.msra.mxu0 0.0
        %1360 = vmatpush.xpose.msra.mxu0 0.0
        %1361 = vmatpush.xpose.msra.mxu0 0.0
        %1362 = vmatpush.xpose.msra.mxu0 0.0
        %1363 = vmatpush.xpose.msra.mxu0 0.0
        %1364 = vmatpush.xpose.msra.mxu0 0.0
        %1365 = vmatpush.xpose.msra.mxu0 0.0
        %1366 = vmatpush.xpose.msra.mxu0 0.0
        %1367 = vmatpush.xpose.msra.mxu0 0.0
        %1368 = vmatpush.xpose.msra.mxu0 0.0
        %1369 = vmatpush.xpose.msra.mxu0 0.0
        %1370 = vmatpush.xpose.msra.mxu0 0.0
        %1371 = vmatpush.xpose.msra.mxu0 0.0
        %1372 = vmatpush.xpose.msra.mxu0 0.0
        %1373 = vmatpush.xpose.msra.mxu0 %v1356
        %1374 = vmatmul.f32.gmra.mxu0 %v1354
        %v1375 = vpop.f32.mrf.mxu0
        %v1376 = vadd.f32 0.0, %v1375
        %1377 = vdwg.mxu0
        %v1378 = vsel %vm625, %v1376, -inf
        %1379 = vmax.xlane.f32.xlu0 %v1378
        %v1380 = vpop.xlane.xlu0 %1379
        %v1381 = vsub.f32 %v1376, %v1380
        %v1382 = vmul.f32 %v1381, 1.442695
        %v1383 = vpow.pop %v1382
        %v1384 = vsel %vm625, %v1383, 0.0
        %1385 = vadd.xlane.f32.xlu0 %v1384
        %v1386 = vpop.xlane.xlu0 %1385
        %v1387 = vrcp.pop %v1386
        %v1388 = vmul.f32 %v1383, %v1387
        %1389 = vrot.lane.b32.xlu0 %v1348, 64
        %v1390 = vpop.permute.xlu0 %1389
        %v1393 = vsel %vm625, %v1388, 0
        %1395 = vmatpush.msra.mxu0 0.0
        %1396 = vmatpush.msra.mxu0 0.0
        %1397 = vmatpush.msra.mxu0 0.0
        %1398 = vmatpush.msra.mxu0 0.0
        %1399 = vmatpush.msra.mxu0 0.0
        %1400 = vmatpush.msra.mxu0 0.0
        %1401 = vmatpush.msra.mxu0 0.0
        %1402 = vmatpush.msra.mxu0 0.0
        %1403 = vmatpush.msra.mxu0 0.0
        %1404 = vmatpush.msra.mxu0 0.0
        %1405 = vmatpush.msra.mxu0 0.0
        %1406 = vmatpush.msra.mxu0 0.0
        %1407 = vmatpush.msra.mxu0 0.0
        %1408 = vmatpush.msra.mxu0 0.0
        %1409 = vmatpush.msra.mxu0 0.0
        %1410 = vmatpush.msra.mxu0 %v1390
        %1411 = vmatmul.f32.gmra.mxu0 %v1393
        %v1412 = vpop.f32.mrf.mxu0
        %v1413 = vadd.f32 0.0, %v1412
        %1414 = vdwg.mxu0
        %1415 = vrot.lane.b32.xlu0 %v1348, 112
        %v1416 = vpop.permute.xlu0 %1415
        %1417 = vrot.lane.b32.xlu0 %v1348, 80
        %v1418 = vpop.permute.xlu0 %1417
        %v1419 = vsel %vm600, %v1416, 0
        %v1421 = vsel %vm600, %v1418, 0
        %1423 = vmatpush.xpose.msra.mxu0 0.0
        %1424 = vmatpush.xpose.msra.mxu0 0.0
        %1425 = vmatpush.xpose.msra.mxu0 0.0
        %1426 = vmatpush.xpose.msra.mxu0 0.0
        %1427 = vmatpush.xpose.msra.mxu0 0.0
        %1428 = vmatpush.xpose.msra.mxu0 0.0
        %1429 = vmatpush.xpose.msra.mxu0 0.0
        %1430 = vmatpush.xpose.msra.mxu0 0.0
        %1431 = vmatpush.xpose.msra.mxu0 0.0
        %1432 = vmatpush.xpose.msra.mxu0 0.0
        %1433 = vmatpush.xpose.msra.mxu0 0.0
        %1434 = vmatpush.xpose.msra.mxu0 0.0
        %1435 = vmatpush.xpose.msra.mxu0 0.0
        %1436 = vmatpush.xpose.msra.mxu0 0.0
        %1437 = vmatpush.xpose.msra.mxu0 0.0
        %1438 = vmatpush.xpose.msra.mxu0 %v1421
        %1439 = vmatmul.f32.gmra.mxu0 %v1419
        %v1440 = vpop.f32.mrf.mxu0
        %v1441 = vadd.f32 0.0, %v1440
        %1442 = vdwg.mxu0
        %v1443 = vsel %vm625, %v1441, -inf
        %1444 = vmax.xlane.f32.xlu0 %v1443
        %v1445 = vpop.xlane.xlu0 %1444
        %v1446 = vsub.f32 %v1441, %v1445
        %v1447 = vmul.f32 %v1446, 1.442695
        %v1448 = vpow.pop %v1447
        %v1449 = vsel %vm625, %v1448, 0.0
        %1450 = vadd.xlane.f32.xlu0 %v1449
        %v1451 = vpop.xlane.xlu0 %1450
        %v1452 = vrcp.pop %v1451
        %v1453 = vmul.f32 %v1448, %v1452
        %1454 = vrot.lane.b32.xlu0 %v1348, 48
        %v1455 = vpop.permute.xlu0 %1454
        %v1458 = vsel %vm625, %v1453, 0
        %1460 = vmatpush.msra.mxu0 0.0
        %1461 = vmatpush.msra.mxu0 0.0
        %1462 = vmatpush.msra.mxu0 0.0
        %1463 = vmatpush.msra.mxu0 0.0
        %1464 = vmatpush.msra.mxu0 0.0
        %1465 = vmatpush.msra.mxu0 0.0
        %1466 = vmatpush.msra.mxu0 0.0
        %1467 = vmatpush.msra.mxu0 0.0
        %1468 = vmatpush.msra.mxu0 0.0
        %1469 = vmatpush.msra.mxu0 0.0
        %1470 = vmatpush.msra.mxu0 0.0
        %1471 = vmatpush.msra.mxu0 0.0
        %1472 = vmatpush.msra.mxu0 0.0
        %1473 = vmatpush.msra.mxu0 0.0
        %1474 = vmatpush.msra.mxu0 0.0
        %1475 = vmatpush.msra.mxu0 %v1455
        %1476 = vmatmul.f32.gmra.mxu0 %v1458
        %v1477 = vpop.f32.mrf.mxu0
        %v1478 = vadd.f32 0.0, %v1477
        %1479 = vdwg.mxu0
        %1481 = vrot.lane.b32.xlu0 %v1478, 16
        %v1482 = vpop.permute.xlu0 %1481
        %v1484 = vsel %vm600, %v1413, %v1482
        %s1485 = scalar_lea.vmem %s3, 32
        %v1486 = vld [vmem:[%s1485] sm:$0xf]
        %v1487 = vld [vmem:[%s1485 + $0x4] sm:$0xf]
        %v1488 = vld [vmem:[%s1485 + $0x8] sm:$0xf]
        %v1489 = vld [vmem:[%s1485 + $0xc] sm:$0xf]
        %v1490 = vpack.c.bf16 %v1484, %v1484
        %s1491 = scalar_lea.vmem [#allocation7], 2
        %v1492 = vld [vmem:[%s1491] sm:$0x1]
        %v1494 = vperm.slane %v1492, 0
        %v1500 = vunpack.c.l.b16 %v1486
        %v1501 = vunpack.c.l.b16 %v1487
        %v1502 = vunpack.c.l.b16 %v1488
        %v1503 = vunpack.c.l.b16 %v1489
        %v1504 = vpack.c.b16 %v1501, %v1500
        %v1505 = vpack.c.b16 %v1503, %v1502
        %v1509 = vsel %vm580, %v1490, 0
        %1511 = vmatpush.bf16.msra.mxu0 0
        %1512 = vmatpush.bf16.msra.mxu0 0
        %1513 = vmatpush.bf16.msra.mxu0 0
        %1514 = vmatpush.bf16.msra.mxu0 0
        %1515 = vmatpush.bf16.msra.mxu0 0
        %1516 = vmatpush.bf16.msra.mxu0 0
        %1517 = vmatpush.bf16.msra.mxu0 %v1505
        %1518 = vmatpush.bf16.msra.mxu0 %v1504
        %1519 = vmatmul.bf16.gmra.mxu0 %v1509
        %v1520 = vpop.f32.mrf.mxu0
        %v1521 = vadd.f32 %v1494, %v1520
        %v1522 = vpop.f32.mrf.mxu0
        %1523 = vdwg.mxu0
        %v1524 = vadd.f32 %v1311, %v1521
        %v1525 = vsel %vm580, %v1524, 0.0
        %1526 = vadd.xlane.f32.xlu0 %v1525
        %v1527 = vpop.xlane.xlu0 %1526
        %v1528 = vmul.f32 %v1527, %v780
        %v1529 = vsub.f32 %v1524, %v1528
        %v1530 = vmul.f32 %v1529, %v1529
        %v1531 = vsel %vm580, %v1530, 0.0
        %1532 = vadd.xlane.f32.xlu0 %v1531
        %v1533 = vpop.xlane.xlu0 %1532
        %v1534 = vmul.f32 %v1533, %v780
        %v1535 = vadd.f32 %v1534, 1e-05
        %v1536 = vrsqrt.pop %v1535
        %v1537 = vmul.f32 %v1536, %v1535
        %v1538 = vmul.f32 %v1537, %v1536
        %v1539 = vmul.f32 0.5, %v1538
        %v1540 = vsub.f32 1.5, %v1539
        %v1541 = vmul.f32 %v1536, %v1540
        %vm1542 = vweird.f32 %v1535
        %vm1543 = vweird.f32 %v1536
        %vm1544 = vmor %vm1542, %vm1543
        %v1545 = vsel %vm1544, %v1536, %v1541
        %v1546 = vmul.f32 %v1529, %v1545
        %s1547 = scalar_lea.vmem [#allocation8], 2
        %v1548 = vld [vmem:[%s1547] sm:$0x1]
        %v1550 = vperm.slane %v1548, 0
        %v1552 = vmul.f32 %v1546, %v1550
        %s1553 = scalar_lea.vmem %s6, 2
        %v1554 = vld [vmem:[%s1553] sm:$0x1]
        %v1556 = vperm.slane %v1554, 0
        %v1558 = vadd.f32 %v1552, %v1556
        %s1559 = scalar_lea.vmem %s7, 32
        %v1560 = vld [vmem:[%s1559] sm:$0xf]
        %v1561 = vld [vmem:[%s1559 + $0x4] sm:$0xf]
        %v1562 = vld [vmem:[%s1559 + $0x8] sm:$0xf]
        %v1563 = vld [vmem:[%s1559 + $0xc] sm:$0xf]
        %v1564 = vpack.c.bf16 %v1558, %v1558
        %s1565 = scalar_lea.vmem [#allocation10], 2
        %v1566 = vld [vmem:[%s1565] sm:$0x1]
        %v1568 = vperm.slane %v1566, 0
        %v1574 = vunpack.c.l.b16 %v1560
        %v1575 = vunpack.c.l.b16 %v1561
        %v1576 = vunpack.c.l.b16 %v1562
        %v1577 = vunpack.c.l.b16 %v1563
        %v1578 = vpack.c.b16 %v1575, %v1574
        %v1579 = vpack.c.b16 %v1577, %v1576
        %v1583 = vsel %vm580, %v1564, 0
        %1585 = vmatpush.bf16.msra.mxu0 0
        %1586 = vmatpush.bf16.msra.mxu0 0
        %1587 = vmatpush.bf16.msra.mxu0 0
        %1588 = vmatpush.bf16.msra.mxu0 0
        %1589 = vmatpush.bf16.msra.mxu0 0
        %1590 = vmatpush.bf16.msra.mxu0 0
        %1591 = vmatpush.bf16.msra.mxu0 %v1579
        %1592 = vmatpush.bf16.msra.mxu0 %v1578
        %1593 = vmatmul.bf16.gmra.mxu0 %v1583
        %v1594 = vpop.f32.mrf.mxu0
        %v1595 = vadd.f32 %v1568, %v1594
        %v1596 = vpop.f32.mrf.mxu0
        %1597 = vdwg.mxu0
        %v1598 = vmax.f32 %v1595, 0.0
        %s1599 = scalar_lea.vmem %s9, 64
        %v1600 = vld [vmem:[%s1599] sm:$0xf]
        %v1601 = vld [vmem:[%s1599 + $0x4] sm:$0xf]
        %v1602 = vld [vmem:[%s1599 + $0x8] sm:$0xf]
        %v1603 = vld [vmem:[%s1599 + $0xc] sm:$0xf]
        %v1604 = vld [vmem:[%s1599 + $0x10] sm:$0xf]
        %v1605 = vld [vmem:[%s1599 + $0x14] sm:$0xf]
        %v1606 = vld [vmem:[%s1599 + $0x18] sm:$0xf]
        %v1607 = vld [vmem:[%s1599 + $0x1c] sm:$0xf]
        %v1608 = vpack.c.bf16 %v1598, %v1598
        %s1609 = scalar_lea.vmem %s10, 2
        %v1610 = vld [vmem:[%s1609] sm:$0x1]
        %v1612 = vperm.slane %v1610, 0
        %v1622 = vunpack.c.l.b16 %v1600
        %v1623 = vunpack.c.l.b16 %v1601
        %v1624 = vunpack.c.l.b16 %v1602
        %v1625 = vunpack.c.l.b16 %v1603
        %v1626 = vunpack.c.l.b16 %v1604
        %v1627 = vunpack.c.l.b16 %v1605
        %v1628 = vunpack.c.l.b16 %v1606
        %v1629 = vunpack.c.l.b16 %v1607
        %v1630 = vpack.c.b16 %v1623, %v1622
        %v1631 = vpack.c.b16 %v1625, %v1624
        %v1632 = vpack.c.b16 %v1627, %v1626
        %v1633 = vpack.c.b16 %v1629, %v1628
        %v1639 = vsel %vm885, %v1608, 0
        %1641 = vmatpush.bf16.msra.mxu0 0
        %1642 = vmatpush.bf16.msra.mxu0 0
        %1643 = vmatpush.bf16.msra.mxu0 0
        %1644 = vmatpush.bf16.msra.mxu0 0
        %1645 = vmatpush.bf16.msra.mxu0 %v1633
        %1646 = vmatpush.bf16.msra.mxu0 %v1632
        %1647 = vmatpush.bf16.msra.mxu0 %v1631
        %1648 = vmatpush.bf16.msra.mxu0 %v1630
        %1649 = vmatmul.bf16.gmra.mxu0 %v1639
        %v1650 = vpop.f32.mrf.mxu0
        %v1651 = vadd.f32 %v1612, %v1650
        %v1652 = vpop.f32.mrf.mxu0
        %1653 = vdwg.mxu0
        %v1654 = vadd.f32 %v1558, %v1651
        %v1655 = vsel %vm580, %v1654, 0.0
        %1656 = vadd.xlane.f32.xlu0 %v1655
        %v1657 = vpop.xlane.xlu0 %1656
        %v1658 = vmul.f32 %v1657, %v780
        %v1659 = vsub.f32 %v1654, %v1658
        %v1660 = vmul.f32 %v1659, %v1659
        %v1661 = vsel %vm580, %v1660, 0.0
        %1662 = vadd.xlane.f32.xlu0 %v1661
        %v1663 = vpop.xlane.xlu0 %1662
        %v1664 = vmul.f32 %v1663, %v780
        %v1665 = vadd.f32 %v1664, 1e-05
        %v1666 = vrsqrt.pop %v1665
        %v1667 = vmul.f32 %v1666, %v1665
        %v1668 = vmul.f32 %v1667, %v1666
        %v1669 = vmul.f32 0.5, %v1668
        %v1670 = vsub.f32 1.5, %v1669
        %v1671 = vmul.f32 %v1666, %v1670
        %vm1672 = vweird.f32 %v1665
        %vm1673 = vweird.f32 %v1666
        %vm1674 = vmor %vm1672, %vm1673
        %v1675 = vsel %vm1674, %v1666, %v1671
        %v1676 = vmul.f32 %v1659, %v1675
        %s1677 = scalar_lea.vmem [#allocation11], 2
        %v1678 = vld [vmem:[%s1677] sm:$0x1]
        %v1680 = vperm.slane %v1678, 0
        %v1682 = vmul.f32 %v1676, %v1680
        %s1683 = scalar_lea.vmem [#allocation13], 2
        %v1684 = vld [vmem:[%s1683] sm:$0x1]
        %v1686 = vperm.slane %v1684, 0
        %v1688 = vadd.f32 %v1682, %v1686
        %s1689 = scalar_lea.vmem %s1, 48
        %v1690 = vld [vmem:[%s1689] sm:$0xf]
        %v1691 = vld [vmem:[%s1689 + $0x4] sm:$0xf]
        %v1692 = vld [vmem:[%s1689 + $0x8] sm:$0xf]
        %v1693 = vld [vmem:[%s1689 + $0xc] sm:$0xf]
        %v1694 = vpack.c.bf16 %v1688, %v1688
        %s1695 = scalar_lea.vmem [#allocation5], 3
        %v1696 = vld [vmem:[%s1695] sm:$0x1]
        %v1698 = vperm.slane %v1696, 0
        %v1704 = vunpack.c.l.b16 %v1690
        %v1705 = vunpack.c.l.b16 %v1691
        %v1706 = vunpack.c.l.b16 %v1692
        %v1707 = vunpack.c.l.b16 %v1693
        %v1708 = vpack.c.b16 %v1705, %v1704
        %v1709 = vpack.c.b16 %v1707, %v1706
        %v1713 = vsel %vm580, %v1694, 0
        %1715 = vmatpush.bf16.msra.mxu0 0
        %1716 = vmatpush.bf16.msra.mxu0 0
        %1717 = vmatpush.bf16.msra.mxu0 0
        %1718 = vmatpush.bf16.msra.mxu0 0
        %1719 = vmatpush.bf16.msra.mxu0 0
        %1720 = vmatpush.bf16.msra.mxu0 0
        %1721 = vmatpush.bf16.msra.mxu0 %v1709
        %1722 = vmatpush.bf16.msra.mxu0 %v1708
        %1723 = vmatmul.bf16.gmra.mxu0 %v1713
        %v1724 = vpop.f32.mrf.mxu0
        %v1725 = vadd.f32 %v1698, %v1724
        %v1726 = vpop.f32.mrf.mxu0
        %1727 = vdwg.mxu0
        %1729 = vrot.lane.b32.xlu0 %v1725, 96
        %v1730 = vpop.permute.xlu0 %1729
        %v1731 = vsel %vm600, %v1725, 0
        %v1733 = vsel %vm600, %v1730, 0
        %1735 = vmatpush.xpose.msra.mxu0 0.0
        %1736 = vmatpush.xpose.msra.mxu0 0.0
        %1737 = vmatpush.xpose.msra.mxu0 0.0
        %1738 = vmatpush.xpose.msra.mxu0 0.0
        %1739 = vmatpush.xpose.msra.mxu0 0.0
        %1740 = vmatpush.xpose.msra.mxu0 0.0
        %1741 = vmatpush.xpose.msra.mxu0 0.0
        %1742 = vmatpush.xpose.msra.mxu0 0.0
        %1743 = vmatpush.xpose.msra.mxu0 0.0
        %1744 = vmatpush.xpose.msra.mxu0 0.0
        %1745 = vmatpush.xpose.msra.mxu0 0.0
        %1746 = vmatpush.xpose.msra.mxu0 0.0
        %1747 = vmatpush.xpose.msra.mxu0 0.0
        %1748 = vmatpush.xpose.msra.mxu0 0.0
        %1749 = vmatpush.xpose.msra.mxu0 0.0
        %1750 = vmatpush.xpose.msra.mxu0 %v1733
        %1751 = vmatmul.f32.gmra.mxu0 %v1731
        %v1752 = vpop.f32.mrf.mxu0
        %v1753 = vadd.f32 0.0, %v1752
        %1754 = vdwg.mxu0
        %v1755 = vsel %vm625, %v1753, -inf
        %1756 = vmax.xlane.f32.xlu0 %v1755
        %v1757 = vpop.xlane.xlu0 %1756
        %v1758 = vsub.f32 %v1753, %v1757
        %v1759 = vmul.f32 %v1758, 1.442695
        %v1760 = vpow.pop %v1759
        %v1761 = vsel %vm625, %v1760, 0.0
        %1762 = vadd.xlane.f32.xlu0 %v1761
        %v1763 = vpop.xlane.xlu0 %1762
        %v1764 = vrcp.pop %v1763
        %v1765 = vmul.f32 %v1760, %v1764
        %1766 = vrot.lane.b32.xlu0 %v1725, 64
        %v1767 = vpop.permute.xlu0 %1766
        %v1770 = vsel %vm625, %v1765, 0
        %1772 = vmatpush.msra.mxu0 0.0
        %1773 = vmatpush.msra.mxu0 0.0
        %1774 = vmatpush.msra.mxu0 0.0
        %1775 = vmatpush.msra.mxu0 0.0
        %1776 = vmatpush.msra.mxu0 0.0
        %1777 = vmatpush.msra.mxu0 0.0
        %1778 = vmatpush.msra.mxu0 0.0
        %1779 = vmatpush.msra.mxu0 0.0
        %1780 = vmatpush.msra.mxu0 0.0
        %1781 = vmatpush.msra.mxu0 0.0
        %1782 = vmatpush.msra.mxu0 0.0
        %1783 = vmatpush.msra.mxu0 0.0
        %1784 = vmatpush.msra.mxu0 0.0
        %1785 = vmatpush.msra.mxu0 0.0
        %1786 = vmatpush.msra.mxu0 0.0
        %1787 = vmatpush.msra.mxu0 %v1767
        %1788 = vmatmul.f32.gmra.mxu0 %v1770
        %v1789 = vpop.f32.mrf.mxu0
        %v1790 = vadd.f32 0.0, %v1789
        %1791 = vdwg.mxu0
        %1792 = vrot.lane.b32.xlu0 %v1725, 112
        %v1793 = vpop.permute.xlu0 %1792
        %1794 = vrot.lane.b32.xlu0 %v1725, 80
        %v1795 = vpop.permute.xlu0 %1794
        %v1796 = vsel %vm600, %v1793, 0
        %v1798 = vsel %vm600, %v1795, 0
        %1800 = vmatpush.xpose.msra.mxu0 0.0
        %1801 = vmatpush.xpose.msra.mxu0 0.0
        %1802 = vmatpush.xpose.msra.mxu0 0.0
        %1803 = vmatpush.xpose.msra.mxu0 0.0
        %1804 = vmatpush.xpose.msra.mxu0 0.0
        %1805 = vmatpush.xpose.msra.mxu0 0.0
        %1806 = vmatpush.xpose.msra.mxu0 0.0
        %1807 = vmatpush.xpose.msra.mxu0 0.0
        %1808 = vmatpush.xpose.msra.mxu0 0.0
        %1809 = vmatpush.xpose.msra.mxu0 0.0
        %1810 = vmatpush.xpose.msra.mxu0 0.0
        %1811 = vmatpush.xpose.msra.mxu0 0.0
        %1812 = vmatpush.xpose.msra.mxu0 0.0
        %1813 = vmatpush.xpose.msra.mxu0 0.0
        %1814 = vmatpush.xpose.msra.mxu0 0.0
        %1815 = vmatpush.xpose.msra.mxu0 %v1798
        %1816 = vmatmul.f32.gmra.mxu0 %v1796
        %v1817 = vpop.f32.mrf.mxu0
        %v1818 = vadd.f32 0.0, %v1817
        %1819 = vdwg.mxu0
        %v1820 = vsel %vm625, %v1818, -inf
        %1821 = vmax.xlane.f32.xlu0 %v1820
        %v1822 = vpop.xlane.xlu0 %1821
        %v1823 = vsub.f32 %v1818, %v1822
        %v1824 = vmul.f32 %v1823, 1.442695
        %v1825 = vpow.pop %v1824
        %v1826 = vsel %vm625, %v1825, 0.0
        %1827 = vadd.xlane.f32.xlu0 %v1826
        %v1828 = vpop.xlane.xlu0 %1827
        %v1829 = vrcp.pop %v1828
        %v1830 = vmul.f32 %v1825, %v1829
        %1831 = vrot.lane.b32.xlu0 %v1725, 48
        %v1832 = vpop.permute.xlu0 %1831
        %v1835 = vsel %vm625, %v1830, 0
        %1837 = vmatpush.msra.mxu0 0.0
        %1838 = vmatpush.msra.mxu0 0.0
        %1839 = vmatpush.msra.mxu0 0.0
        %1840 = vmatpush.msra.mxu0 0.0
        %1841 = vmatpush.msra.mxu0 0.0
        %1842 = vmatpush.msra.mxu0 0.0
        %1843 = vmatpush.msra.mxu0 0.0
        %1844 = vmatpush.msra.mxu0 0.0
        %1845 = vmatpush.msra.mxu0 0.0
        %1846 = vmatpush.msra.mxu0 0.0
        %1847 = vmatpush.msra.mxu0 0.0
        %1848 = vmatpush.msra.mxu0 0.0
        %1849 = vmatpush.msra.mxu0 0.0
        %1850 = vmatpush.msra.mxu0 0.0
        %1851 = vmatpush.msra.mxu0 0.0
        %1852 = vmatpush.msra.mxu0 %v1832
        %1853 = vmatmul.f32.gmra.mxu0 %v1835
        %v1854 = vpop.f32.mrf.mxu0
        %v1855 = vadd.f32 0.0, %v1854
        %1856 = vdwg.mxu0
        %1858 = vrot.lane.b32.xlu0 %v1855, 16
        %v1859 = vpop.permute.xlu0 %1858
        %v1861 = vsel %vm600, %v1790, %v1859
        %s1862 = scalar_lea.vmem %s3, 48
        %v1863 = vld [vmem:[%s1862] sm:$0xf]
        %v1864 = vld [vmem:[%s1862 + $0x4] sm:$0xf]
        %v1865 = vld [vmem:[%s1862 + $0x8] sm:$0xf]
        %v1866 = vld [vmem:[%s1862 + $0xc] sm:$0xf]
        %v1867 = vpack.c.bf16 %v1861, %v1861
        %s1868 = scalar_lea.vmem [#allocation7], 3
        %v1869 = vld [vmem:[%s1868] sm:$0x1]
        %v1871 = vperm.slane %v1869, 0
        %v1877 = vunpack.c.l.b16 %v1863
        %v1878 = vunpack.c.l.b16 %v1864
        %v1879 = vunpack.c.l.b16 %v1865
        %v1880 = vunpack.c.l.b16 %v1866
        %v1881 = vpack.c.b16 %v1878, %v1877
        %v1882 = vpack.c.b16 %v1880, %v1879
        %v1886 = vsel %vm580, %v1867, 0
        %1888 = vmatpush.bf16.msra.mxu0 0
        %1889 = vmatpush.bf16.msra.mxu0 0
        %1890 = vmatpush.bf16.msra.mxu0 0
        %1891 = vmatpush.bf16.msra.mxu0 0
        %1892 = vmatpush.bf16.msra.mxu0 0
        %1893 = vmatpush.bf16.msra.mxu0 0
        %1894 = vmatpush.bf16.msra.mxu0 %v1882
        %1895 = vmatpush.bf16.msra.mxu0 %v1881
        %1896 = vmatmul.bf16.gmra.mxu0 %v1886
        %v1897 = vpop.f32.mrf.mxu0
        %v1898 = vadd.f32 %v1871, %v1897
        %v1899 = vpop.f32.mrf.mxu0
        %1900 = vdwg.mxu0
        %v1901 = vadd.f32 %v1688, %v1898
        %v1902 = vsel %vm580, %v1901, 0.0
        %1903 = vadd.xlane.f32.xlu0 %v1902
        %v1904 = vpop.xlane.xlu0 %1903
        %v1905 = vmul.f32 %v1904, %v780
        %v1906 = vsub.f32 %v1901, %v1905
        %v1907 = vmul.f32 %v1906, %v1906
        %v1908 = vsel %vm580, %v1907, 0.0
        %1909 = vadd.xlane.f32.xlu0 %v1908
        %v1910 = vpop.xlane.xlu0 %1909
        %v1911 = vmul.f32 %v1910, %v780
        %v1912 = vadd.f32 %v1911, 1e-05
        %v1913 = vrsqrt.pop %v1912
        %v1914 = vmul.f32 %v1913, %v1912
        %v1915 = vmul.f32 %v1914, %v1913
        %v1916 = vmul.f32 0.5, %v1915
        %v1917 = vsub.f32 1.5, %v1916
        %v1918 = vmul.f32 %v1913, %v1917
        %vm1919 = vweird.f32 %v1912
        %vm1920 = vweird.f32 %v1913
        %vm1921 = vmor %vm1919, %vm1920
        %v1922 = vsel %vm1921, %v1913, %v1918
        %v1923 = vmul.f32 %v1906, %v1922
        %s1924 = scalar_lea.vmem [#allocation8], 3
        %v1925 = vld [vmem:[%s1924] sm:$0x1]
        %v1927 = vperm.slane %v1925, 0
        %v1929 = vmul.f32 %v1923, %v1927
        %s1930 = scalar_lea.vmem %s6, 3
        %v1931 = vld [vmem:[%s1930] sm:$0x1]
        %v1933 = vperm.slane %v1931, 0
        %v1935 = vadd.f32 %v1929, %v1933
        %s1936 = scalar_lea.vmem %s7, 48
        %v1937 = vld [vmem:[%s1936] sm:$0xf]
        %v1938 = vld [vmem:[%s1936 + $0x4] sm:$0xf]
        %v1939 = vld [vmem:[%s1936 + $0x8] sm:$0xf]
        %v1940 = vld [vmem:[%s1936 + $0xc] sm:$0xf]
        %v1941 = vpack.c.bf16 %v1935, %v1935
        %s1942 = scalar_lea.vmem [#allocation10], 3
        %v1943 = vld [vmem:[%s1942] sm:$0x1]
        %v1945 = vperm.slane %v1943, 0
        %v1951 = vunpack.c.l.b16 %v1937
        %v1952 = vunpack.c.l.b16 %v1938
        %v1953 = vunpack.c.l.b16 %v1939
        %v1954 = vunpack.c.l.b16 %v1940
        %v1955 = vpack.c.b16 %v1952, %v1951
        %v1956 = vpack.c.b16 %v1954, %v1953
        %v1960 = vsel %vm580, %v1941, 0
        %1962 = vmatpush.bf16.msra.mxu0 0
        %1963 = vmatpush.bf16.msra.mxu0 0
        %1964 = vmatpush.bf16.msra.mxu0 0
        %1965 = vmatpush.bf16.msra.mxu0 0
        %1966 = vmatpush.bf16.msra.mxu0 0
        %1967 = vmatpush.bf16.msra.mxu0 0
        %1968 = vmatpush.bf16.msra.mxu0 %v1956
        %1969 = vmatpush.bf16.msra.mxu0 %v1955
        %1970 = vmatmul.bf16.gmra.mxu0 %v1960
        %v1971 = vpop.f32.mrf.mxu0
        %v1972 = vadd.f32 %v1945, %v1971
        %v1973 = vpop.f32.mrf.mxu0
        %1974 = vdwg.mxu0
        %v1975 = vmax.f32 %v1972, 0.0
        %s1976 = scalar_lea.vmem %s9, 96
        %v1977 = vld [vmem:[%s1976] sm:$0xf]
        %v1978 = vld [vmem:[%s1976 + $0x4] sm:$0xf]
        %v1979 = vld [vmem:[%s1976 + $0x8] sm:$0xf]
        %v1980 = vld [vmem:[%s1976 + $0xc] sm:$0xf]
        %v1981 = vld [vmem:[%s1976 + $0x10] sm:$0xf]
        %v1982 = vld [vmem:[%s1976 + $0x14] sm:$0xf]
        %v1983 = vld [vmem:[%s1976 + $0x18] sm:$0xf]
        %v1984 = vld [vmem:[%s1976 + $0x1c] sm:$0xf]
        %v1985 = vpack.c.bf16 %v1975, %v1975
        %s1986 = scalar_lea.vmem %s10, 3
        %v1987 = vld [vmem:[%s1986] sm:$0x1]
        %v1989 = vperm.slane %v1987, 0
        %v1999 = vunpack.c.l.b16 %v1977
        %v2000 = vunpack.c.l.b16 %v1978
        %v2001 = vunpack.c.l.b16 %v1979
        %v2002 = vunpack.c.l.b16 %v1980
        %v2003 = vunpack.c.l.b16 %v1981
        %v2004 = vunpack.c.l.b16 %v1982
        %v2005 = vunpack.c.l.b16 %v1983
        %v2006 = vunpack.c.l.b16 %v1984
        %v2007 = vpack.c.b16 %v2000, %v1999
        %v2008 = vpack.c.b16 %v2002, %v2001
        %v2009 = vpack.c.b16 %v2004, %v2003
        %v2010 = vpack.c.b16 %v2006, %v2005
        %v2016 = vsel %vm885, %v1985, 0
        %2018 = vmatpush.bf16.msra.mxu0 0
        %2019 = vmatpush.bf16.msra.mxu0 0
        %2020 = vmatpush.bf16.msra.mxu0 0
        %2021 = vmatpush.bf16.msra.mxu0 0
        %2022 = vmatpush.bf16.msra.mxu0 %v2010
        %2023 = vmatpush.bf16.msra.mxu0 %v2009
        %2024 = vmatpush.bf16.msra.mxu0 %v2008
        %2025 = vmatpush.bf16.msra.mxu0 %v2007
        %2026 = vmatmul.bf16.gmra.mxu0 %v2016
        %v2027 = vpop.f32.mrf.mxu0
        %v2028 = vadd.f32 %v1989, %v2027
        %v2029 = vpop.f32.mrf.mxu0
        %2030 = vdwg.mxu0
        %v2031 = vadd.f32 %v1935, %v2028
        %v2032 = vsel %vm580, %v2031, 0.0
        %2033 = vadd.xlane.f32.xlu0 %v2032
        %v2034 = vpop.xlane.xlu0 %2033
        %v2035 = vmul.f32 %v2034, %v780
        %v2036 = vsub.f32 %v2031, %v2035
        %v2037 = vmul.f32 %v2036, %v2036
        %v2038 = vsel %vm580, %v2037, 0.0
        %2039 = vadd.xlane.f32.xlu0 %v2038
        %v2040 = vpop.xlane.xlu0 %2039
        %v2041 = vmul.f32 %v2040, %v780
        %v2042 = vadd.f32 %v2041, 1e-05
        %v2043 = vrsqrt.pop %v2042
        %v2044 = vmul.f32 %v2043, %v2042
        %v2045 = vmul.f32 %v2044, %v2043
        %v2046 = vmul.f32 0.5, %v2045
        %v2047 = vsub.f32 1.5, %v2046
        %v2048 = vmul.f32 %v2043, %v2047
        %vm2049 = vweird.f32 %v2042
        %vm2050 = vweird.f32 %v2043
        %vm2051 = vmor %vm2049, %vm2050
        %v2052 = vsel %vm2051, %v2043, %v2048
        %v2053 = vmul.f32 %v2036, %v2052
        %s2054 = scalar_lea.vmem [#allocation11], 3
        %v2055 = vld [vmem:[%s2054] sm:$0x1]
        %v2057 = vperm.slane %v2055, 0
        %v2059 = vmul.f32 %v2053, %v2057
        %s2060 = scalar_lea.vmem [#allocation13], 3
        %v2061 = vld [vmem:[%s2060] sm:$0x1]
        %v2063 = vperm.slane %v2061, 0
        %v2065 = vadd.f32 %v2059, %v2063
        %2066 = vst.msk [vmem:[%s556] sm:$0xff] %vm580, %v2065
        %s2067 = sand.u32 %s319, 1
        %s2068 = scalar_lea.sflag [#allocation4], %s2067
        %s2069 = sand.u32 %s319, 1
        %s2070 = smul.addr %s2069, 8
        %s2071 = scalar_lea.vmem [#allocation14], %s2070
        // Predicated region
        $region101: #{tpu_custom_call.1} parent=71 // pred_check
          %p2072 = pneg %p329
        $region102: #{tpu_custom_call.1} parent=71 // pred_check_branch
          %2074 = sbr.rel (%p2072) target = $region104
        $region103: #{tpu_custom_call.1} parent=71 // pred_region
          %2076 = vsyncadd %s2068, 0
          %s2077 = smul.addr %s33, 8
          %s2078 = scalar_lea.hbm %s13, %s2077
          %s2080 = sshll.u32 %s2071, 4
          %s2081 = int_to_ptr.vmem [resolvable:$true] %s2080
          %s2082 = sshll.u32 %s2078, 4
          %s2083 = int_to_ptr.hbm [resolvable:$true] %s2082
          %2085 = dma.vmem_to_hbm [thread:$0]  %s2081, 128, %s2083, %s2068
        $region104: #{tpu_custom_call.1} parent=71 // pred_fallthru
          _
      $region72: #{tpu_custom_call.1} parent=5 // pred_fallthru
        _
      %p2086 = scmp.le.s32.totalorder 2, %s28
      // Predicated region
      $region105: #{tpu_custom_call.1} parent=5 // pred_check
        %p2087 = pneg %p2086
      $region106: #{tpu_custom_call.1} parent=5 // pred_check_branch
        %2089 = sbr.rel (%p2087) target = $region108
      $region107: #{tpu_custom_call.1} parent=5 // pred_region
        %s2090 = ssub.s32 %s28, 2
        // Predicated region
        $region109: #{tpu_custom_call.1} parent=107 // pred_check
          %p2091 = pneg %p335
        $region110: #{tpu_custom_call.1} parent=107 // pred_check_branch
          %2093 = sbr.rel (%p2091) target = $region112
        $region111: #{tpu_custom_call.1} parent=107 // pred_region
          %s2094 = sand.u32 %s320, 1
          %s2095 = scalar_lea.sflag [#allocation4], %s2094
          %s2096 = sand.u32 %s320, 1
          %s2097 = smul.addr %s2096, 8
          %s2098 = scalar_lea.vmem [#allocation14], %s2097
          %2100 = dma.done %s2095, 128
        $region112: #{tpu_custom_call.1} parent=107 // pred_fallthru
          _
      $region108: #{tpu_custom_call.1} parent=5 // pred_fallthru
        _
    $region6: #{tpu_custom_call.1} parent=1 // loop_footer
      %s32 = sadd.s32 1, %s28
    $region7: #{tpu_custom_call.1} parent=1 // loop_footer_branch
      %27 = sbr.rel target = $region3
    $region8: #{tpu_custom_call.1} parent=1 // loop_exit
      _
    %2101 = vsyncpa [#allocation3], 1
    %s2102 = scalar_lea.sflag [#allocation3], 1
    %2103 = vsyncpa %s2102, 1
    %2104 = vsyncpa [#allocation6], 1
    %2105 = vsyncpa [#allocation9], 1
    %2106 = vsyncpa [#allocation12], 1
    %2107 = vsyncpa [#allocation4], 1
    %s2108 = scalar_lea.sflag [#allocation4], 1
    %2109 = vsyncpa %s2108, 1

</llo_original>
